<compile_context>
chip_gen: v7x
topology: tpu7x:2x2x1
jax: 0.10.0
libtpu: 0.0.40
codegen_flags: <defaults>
</compile_context>

<pallas_src>
import jax
import jax.numpy as jnp
from jax import lax
from jax.experimental import pallas as pl
from jax.experimental.pallas import tpu as pltpu


def _round_up(x, m):
    return (x + m - 1) // m * m


def _vmem_capacity_bytes():
    try:
        info = pltpu.get_tpu_info()
        cap = getattr(info, "vmem_capacity_bytes", None)
        if isinstance(cap, int) and cap > 0:
            return cap
    except Exception:
        pass
    return 64 * 1024 * 1024      # conservative: v7x has 64 MiB / TensorCore


def _num_tensorcores():
    """Best-effort TC count per chip (1 on v5e/v6e, 2 on v7x); defaults to 1."""
    try:
        info = pltpu.get_tpu_info()
        for name in ("num_cores", "core_count", "num_tensorcores", "tensorcore_count"):
            v = getattr(info, name, None)
            if isinstance(v, int) and v >= 1:
                return min(v, 2)
    except Exception:
        pass
    try:
        v = getattr(jax.devices()[0], "num_cores", None)
        if isinstance(v, int) and v >= 1:
            return min(v, 2)
    except Exception:
        pass
    return 1


def rnn_kernel(ids_ref,    # SMEM (Bp, S) int32 token ids (scalar prefetch)
               h0_ref,     # (2, TB, Hp)  initial hidden state
               emb_ref,    # (Vp, Hp)     embedding table (padded)
               wih0_ref,   # (Hp, Hp)     layer-0 W_ih^T
               b0_ref,     # (1, Hp)      layer-0 (b_ih + b_hh)
               rhs_ref,    # (2Hp, 2Hp)   fused wavefront RHS [[Whh0^T, Wih1^T],[0, Whh1^T]]
               b1_ref,     # (1, Hp)      layer-1 (b_ih + b_hh)
               fcw_ref,    # (Hp, Op)     fc weight^T
               fcb_ref,    # (1, Op)      fc bias
               out_ref,    # (S, TB, Op)  fc(layer-1 outputs), time-major
               hn_ref,     # (2, TB, Hp)  final hidden state
               table_ref,  # scratch (Vp, Hp): emb @ Wih0^T + b0
               buf_ref):   # scratch (S, TB, Hp): proj0 rows, overwritten with h1_t
    # NOTE: kernel is specialized for num_layers == 2 (matches the PyTorch module).
    S, TB, Hp = buf_ref.shape

    # ---- fold the embedding into the layer-0 input projection (one tiny matmul) --
    table_ref[...] = (jnp.dot(emb_ref[...], wih0_ref[...],
                              preferred_element_type=jnp.float32) + b0_ref[...])

    # ---- in-kernel gather:  buf[t, r] = emb[token] @ Wih0^T + b0 ------------------
    b_off = pl.program_id(0) * TB
    for t in range(S):
        for r in range(TB):
            tok = ids_ref[b_off + r, t]
            buf_ref[t, r] = table_ref[tok]

    # ---- wavefront recurrence: both layers in ONE matmul per step -----------------
    rhs = rhs_ref[...]
    b1 = b1_ref[...]

    # initial step: h0_0 = tanh(proj0[0] + h_init0 @ Whh0^T)
    h0_first = jnp.tanh(buf_ref[0]
                        + jnp.dot(h0_ref[0], rhs_ref[:Hp, :Hp],
                                  preferred_element_type=jnp.float32))
    st0 = jnp.concatenate([h0_first, h0_ref[1]], axis=-1)     # [h0_0 | h1_{-1}]

    def wave(w, st):
        comb = jnp.dot(st, rhs, preferred_element_type=jnp.float32)
        h1_new = jnp.tanh(comb[:, Hp:] + b1)       # layer-1 output at time w
        proj_next = buf_ref[w + 1]                 # read proj0[w+1] before overwrite
        buf_ref[w] = h1_new
        h0_next = jnp.tanh(comb[:, :Hp] + proj_next)   # layer-0 state at time w+1
        return jnp.concatenate([h0_next, h1_new], axis=-1)

    st = lax.fori_loop(0, S - 1, wave, st0, unroll=True)

    # peeled last wave: only layer-1 still needs a step
    comb = jnp.dot(st, rhs, preferred_element_type=jnp.float32)
    h1_last = jnp.tanh(comb[:, Hp:] + b1)
    buf_ref[S - 1] = h1_last

    hn_ref[0] = st[:, :Hp]       # h0_{S-1}
    hn_ref[1] = h1_last          # h1_{S-1}

    # ---- fc: one lane-dense matmul over the whole sequence ------------------------
    hs = buf_ref[...].reshape(S * TB, Hp)
    out = (jnp.dot(hs, fcw_ref[...], preferred_element_type=jnp.float32)
           + fcb_ref[...])
    out_ref[...] = out.reshape(S, TB, out_ref.shape[-1]).astype(out_ref.dtype)


def rnn_forward(x, hidden, params, *, tb=None):
    """x: (B, S) int32 token ids; hidden: (2, B, H). Returns (out (B,S,O), hn (2,B,H))."""
    B, S = x.shape
    L, _, H = hidden.shape
    V = params["emb"].shape[0]
    O = params["fc_w"].shape[0]
    assert L == 2, "kernel is specialized for num_layers == 2"

    # ---- lane/sublane friendly padded sizes ---------------------------------------
    Hp = _round_up(H, 128)
    Op = _round_up(O, 128)
    Vp = _round_up(V, 8)

    # ---- batch blocking: one block per TensorCore (1 on v5e/v6e, 2 on v7x) --------
    if tb is None:
        nblk = max(1, min(_num_tensorcores(), _round_up(B, 8) // 8))
        tb = _round_up(-(-B // nblk), 8)
    tb = _round_up(tb, 8)
    Bp = _round_up(B, tb)
    nblk = Bp // tb

    # ---- padded parameters (tiny, param-only transforms) --------------------------
    def padw(w, r, c):
        return jnp.pad(w, ((0, r - w.shape[0]), (0, c - w.shape[1])))

    emb_p  = padw(params["emb"], Vp, Hp)
    wih0_t = padw(params["w_ih_l0"].T, Hp, Hp)
    b0 = jnp.pad((params["b_ih_l0"] + params["b_hh_l0"]).reshape(1, H),
                 ((0, 0), (0, Hp - H)))
    b1 = jnp.pad((params["b_ih_l1"] + params["b_hh_l1"]).reshape(1, H),
                 ((0, 0), (0, Hp - H)))
    # fused wavefront RHS: [h0 | h1] @ [[Whh0^T, Wih1^T], [0, Whh1^T]]
    rhs = jnp.zeros((2 * Hp, 2 * Hp), jnp.float32)
    rhs = rhs.at[:H, :H].set(params["w_hh_l0"].T)
    rhs = rhs.at[:H, Hp:Hp + H].set(params["w_ih_l1"].T)
    rhs = rhs.at[Hp:Hp + H, Hp:Hp + H].set(params["w_hh_l1"].T)
    fcw_t = padw(params["fc_w"].T, Hp, Op)
    fcb = jnp.pad(params["fc_b"].reshape(1, O), ((0, 0), (0, Op - O)))

    ids = jnp.pad(x.astype(jnp.int32), ((0, Bp - B), (0, 0)))             # (Bp, S)
    h0 = jnp.pad(hidden.astype(jnp.float32),
                 ((0, 0), (0, Bp - B), (0, Hp - H)))                      # (L, Bp, Hp)

    # ---- VMEM budget, clamped to physical capacity of the target chip -------------
    f32 = 4
    weight_bytes = (Vp * Hp + Hp * Hp + 4 * Hp * Hp + Hp * Op + 2 * Hp + Op) * f32
    block_bytes = (L * tb * Hp + S * tb * Op + L * tb * Hp) * f32
    scratch_bytes = (Vp * Hp + S * tb * Hp) * f32
    work = 2 * weight_bytes + 2 * block_bytes + scratch_bytes
    vmem_limit = int(min(_vmem_capacity_bytes(), max(16 << 20, 4 * work)))

    # ---- advisory cost estimate so XLA overlaps the tiny wrapper ops --------------
    flops = nblk * (2 * Vp * Hp * Hp                       # embedding->proj table
                    + 2 * tb * Hp * Hp                     # initial layer-0 step
                    + 2 * S * tb * (2 * Hp) * (2 * Hp)     # fused wavefront steps
                    + 2 * S * tb * Hp * Op)                # fc
    transcendentals = nblk * 2 * S * tb * Hp
    bytes_accessed = 4 * (ids.size + h0.size + emb_p.size + wih0_t.size + b0.size
                          + rhs.size + b1.size + fcw_t.size + fcb.size
                          + S * Bp * Op + L * Bp * Hp)

    const = lambda b, ids_pref: (0, 0)
    out_p, hn_p = pl.pallas_call(
        rnn_kernel,
        out_shape=(jax.ShapeDtypeStruct((S, Bp, Op), jnp.float32),
                   jax.ShapeDtypeStruct((L, Bp, Hp), jnp.float32)),
        grid_spec=pltpu.PrefetchScalarGridSpec(
            num_scalar_prefetch=1,                 # token ids -> SMEM
            grid=(nblk,),
            in_specs=[
                pl.BlockSpec((L, tb, Hp), lambda b, ids_pref: (0, b, 0)),   # hidden
                pl.BlockSpec((Vp, Hp), const),          # embedding table
                pl.BlockSpec((Hp, Hp), const),          # W_ih0^T
                pl.BlockSpec((1, Hp), const),           # b0
                pl.BlockSpec((2 * Hp, 2 * Hp), const),  # fused recurrent RHS
                pl.BlockSpec((1, Hp), const),           # b1
                pl.BlockSpec((Hp, Op), const),          # fc W^T
                pl.BlockSpec((1, Op), const),           # fc b
            ],
            out_specs=(pl.BlockSpec((S, tb, Op), lambda b, ids_pref: (0, b, 0)),
                       pl.BlockSpec((L, tb, Hp), lambda b, ids_pref: (0, b, 0))),
            scratch_shapes=[pltpu.VMEM((Vp, Hp), jnp.float32),
                            pltpu.VMEM((S, tb, Hp), jnp.float32)]),
        compiler_params=pltpu.CompilerParams(
            dimension_semantics=("parallel",),
            vmem_limit_bytes=vmem_limit),
        cost_estimate=pl.CostEstimate(flops=int(flops),
                                      transcendentals=int(transcendentals),
                                      bytes_accessed=int(bytes_accessed)),
    )(ids, h0, emb_p, wih0_t, b0, rhs, b1, fcw_t, fcb)

    out = out_p[:, :B, :O].transpose(1, 0, 2)    # (B, S, O) batch_first
    hn = hn_p[:, :B, :H]                         # (2, B, H)
    return out, hn


def rnn_reference(x, hidden, params):
    """Pure-JAX reference mirroring PyTorch semantics (for correctness check)."""
    emb = params["emb"][x]                      # (B, S, H)
    h0, h1 = hidden[0], hidden[1]
    outs = []
    for t in range(x.shape[1]):
        xt = emb[:, t]
        h0 = jnp.tanh(xt @ params["w_ih_l0"].T + params["b_ih_l0"]
                      + h0 @ params["w_hh_l0"].T + params["b_hh_l0"])
        h1 = jnp.tanh(h0 @ params["w_ih_l1"].T + params["b_ih_l1"]
                      + h1 @ params["w_hh_l1"].T + params["b_hh_l1"])
        outs.append(h1)
    hs = jnp.stack(outs, axis=1)                # (B, S, H)
    out = hs @ params["fc_w"].T + params["fc_b"]
    hn = jnp.stack([h0, h1], axis=0)
    return out, hn


def init_params(key, input_size, hidden_size, output_size):
    """Deterministic init mimicking PyTorch defaults."""
    ks = jax.random.split(key, 12)
    bound = 1.0 / jnp.sqrt(hidden_size)
    u = lambda k, shape: jax.random.uniform(k, shape, jnp.float32, -bound, bound)
    return {
        "emb":     jax.random.normal(ks[0], (input_size, hidden_size), jnp.float32),
        "w_ih_l0": u(ks[1], (hidden_size, hidden_size)),
        "w_hh_l0": u(ks[2], (hidden_size, hidden_size)),
        "b_ih_l0": u(ks[3], (hidden_size,)),
        "b_hh_l0": u(ks[4], (hidden_size,)),
        "w_ih_l1": u(ks[5], (hidden_size, hidden_size)),
        "w_hh_l1": u(ks[6], (hidden_size, hidden_size)),
        "b_ih_l1": u(ks[7], (hidden_size,)),
        "b_hh_l1": u(ks[8], (hidden_size,)),
        "fc_w":    u(ks[9], (output_size, hidden_size)),
        "fc_b":    u(ks[10], (output_size,)),
    }


if __name__ == "__main__":
    # shapes consistent with the module: batch_size=10, hidden_size=20, num_layers=2
    batch = 10
    seq = 8
    vocab = 32          # input_size (embedding rows)
    hidden_size = 20
    num_layers = 2
    output_size = 16

    key = jax.random.PRNGKey(0)
    kp, kx = jax.random.split(key)
    params = init_params(kp, vocab, hidden_size, output_size)

    x = jax.random.randint(kx, (batch, seq), 0, vocab, dtype=jnp.int32)
    hidden0 = jnp.zeros((num_layers, batch, hidden_size), jnp.float32)  # init_hidden

    fwd = jax.jit(rnn_forward)
    out, hn = fwd(x, hidden0, params)
    jax.block_until_ready((out, hn))

    assert out.shape == (batch, seq, output_size)
    assert hn.shape == (num_layers, batch, hidden_size)

    # correctness vs pure-JAX reference (all f32; loose tol for MXU reduction order)
    out_ref, hn_ref = rnn_reference(x, hidden0, params)
    assert jnp.allclose(out, out_ref, atol=2e-3, rtol=2e-3)
    assert jnp.allclose(hn, hn_ref, atol=2e-3, rtol=2e-3)

    print("KERNEL_OK")
</pallas_src>

<mosaic_0001>
module attributes {stable_mosaic.version = 11 : i64} {
  func.func @rnn_kernel(%arg0: i32, %arg1: memref<16x8xi32, #tpu.memory_space<smem>>, %arg2: memref<2x16x128xf32, #tpu.memory_space<vmem>>, %arg3: memref<32x128xf32, #tpu.memory_space<vmem>>, %arg4: memref<128x128xf32, #tpu.memory_space<vmem>>, %arg5: memref<1x128xf32, #tpu.memory_space<vmem>>, %arg6: memref<256x256xf32, #tpu.memory_space<vmem>>, %arg7: memref<1x128xf32, #tpu.memory_space<vmem>>, %arg8: memref<128x128xf32, #tpu.memory_space<vmem>>, %arg9: memref<1x128xf32, #tpu.memory_space<vmem>>, %arg10: memref<8x16x128xf32, #tpu.memory_space<vmem>>, %arg11: memref<2x16x128xf32, #tpu.memory_space<vmem>>, %arg12: memref<32x128xf32, #tpu.memory_space<vmem>>, %arg13: memref<8x16x128xf32, #tpu.memory_space<vmem>>) attributes {dimension_semantics = [#tpu.dimension_semantics<parallel>], iteration_bounds = array<i64: 1>, scalar_prefetch = 1 : i64, scratch_operands = 2 : i64, tpu.core_type = #tpu.core_type<tc>, window_params = [{transform_indices = @transform_0, window_bounds = array<i64: 2, 16, 128>}, {pipeline_mode = #tpu.pipeline_mode<synchronous>, transform_indices = @transform_1, window_bounds = array<i64: 32, 128>}, {pipeline_mode = #tpu.pipeline_mode<synchronous>, transform_indices = @transform_2, window_bounds = array<i64: 128, 128>}, {pipeline_mode = #tpu.pipeline_mode<synchronous>, transform_indices = @transform_3, window_bounds = array<i64: 1, 128>}, {pipeline_mode = #tpu.pipeline_mode<synchronous>, transform_indices = @transform_4, window_bounds = array<i64: 256, 256>}, {pipeline_mode = #tpu.pipeline_mode<synchronous>, transform_indices = @transform_5, window_bounds = array<i64: 1, 128>}, {pipeline_mode = #tpu.pipeline_mode<synchronous>, transform_indices = @transform_6, window_bounds = array<i64: 128, 128>}, {pipeline_mode = #tpu.pipeline_mode<synchronous>, transform_indices = @transform_7, window_bounds = array<i64: 1, 128>}, {transform_indices = @transform_8, window_bounds = array<i64: 8, 16, 128>}, {transform_indices = @transform_9, window_bounds = array<i64: 2, 16, 128>}]} {
    %c0 = arith.constant 0 : index
    %c0_0 = arith.constant 0 : index
    %0 = vector.load %arg3[%c0, %c0_0] : memref<32x128xf32, #tpu.memory_space<vmem>>, vector<32x128xf32>
    %c0_1 = arith.constant 0 : index
    %c0_2 = arith.constant 0 : index
    %1 = vector.load %arg4[%c0_1, %c0_2] : memref<128x128xf32, #tpu.memory_space<vmem>>, vector<128x128xf32>
    %cst = arith.constant dense<0.000000e+00> : vector<32x128xf32>
    %2 = tpu.matmul %0, %1, %cst {dimension_numbers = #tpu.dot_dimension_numbers<[1], [0], [0], [1], [0, 0, 1, 1], [], []>} : vector<32x128xf32>, vector<128x128xf32>, vector<32x128xf32> -> vector<32x128xf32>
    %c0_3 = arith.constant 0 : index
    %c0_4 = arith.constant 0 : index
    %3 = vector.load %arg5[%c0_3, %c0_4] : memref<1x128xf32, #tpu.memory_space<vmem>>, vector<1x128xf32>
    %4 = vector.broadcast %3 : vector<1x128xf32> to vector<32x128xf32>
    %5 = arith.addf %2, %4 : vector<32x128xf32>
    %c0_5 = arith.constant 0 : index
    %c0_6 = arith.constant 0 : index
    %6 = vector.load %arg12[%c0_5, %c0_6] : memref<32x128xf32, #tpu.memory_space<vmem>>, vector<32x128xf32>
    tpu.vector_store %arg12[%c0_5, %c0_6], %5 {strides = array<i32>} : memref<32x128xf32, #tpu.memory_space<vmem>>, vector<32x128xf32>,
    %c16_i32 = arith.constant 16 : i32
    %7 = arith.muli %arg0, %c16_i32 : i32
    %c0_i32 = arith.constant 0 : i32
    %8 = arith.addi %7, %c0_i32 : i32
    %9 = arith.index_cast %8 : i32 to index
    %c0_7 = arith.constant 0 : index
    %10 = memref.load %arg1[%9, %c0_7] : memref<16x8xi32, #tpu.memory_space<smem>>
    %11 = arith.index_cast %10 : i32 to index
    %c0_8 = arith.constant 0 : index
    %12 = vector.load %arg12[%11, %c0_8] : memref<32x128xf32, #tpu.memory_space<vmem>>, vector<1x128xf32>
    %13 = vector.shape_cast %12 : vector<1x128xf32> to vector<128xf32>
    %c0_9 = arith.constant 0 : index
    %c0_10 = arith.constant 0 : index
    %c0_11 = arith.constant 0 : index
    %14 = vector.load %arg13[%c0_9, %c0_10, %c0_11] : memref<8x16x128xf32, #tpu.memory_space<vmem>>, vector<1x1x128xf32>
    %15 = vector.shape_cast %14 : vector<1x1x128xf32> to vector<128xf32>
    %16 = vector.shape_cast %13 : vector<128xf32> to vector<1x1x128xf32>
    tpu.vector_store %arg13[%c0_9, %c0_10, %c0_11], %16 {strides = array<i32>} : memref<8x16x128xf32, #tpu.memory_space<vmem>>, vector<1x1x128xf32>,
    %c1_i32 = arith.constant 1 : i32
    %17 = arith.addi %7, %c1_i32 : i32
    %18 = arith.index_cast %17 : i32 to index
    %c0_12 = arith.constant 0 : index
    %19 = memref.load %arg1[%18, %c0_12] : memref<16x8xi32, #tpu.memory_space<smem>>
    %20 = arith.index_cast %19 : i32 to index
    %c0_13 = arith.constant 0 : index
    %21 = vector.load %arg12[%20, %c0_13] : memref<32x128xf32, #tpu.memory_space<vmem>>, vector<1x128xf32>
    %22 = vector.shape_cast %21 : vector<1x128xf32> to vector<128xf32>
    %c0_14 = arith.constant 0 : index
    %c1 = arith.constant 1 : index
    %c0_15 = arith.constant 0 : index
    %23 = vector.load %arg13[%c0_14, %c1, %c0_15] : memref<8x16x128xf32, #tpu.memory_space<vmem>>, vector<1x1x128xf32>
    %24 = vector.shape_cast %23 : vector<1x1x128xf32> to vector<128xf32>
    %25 = vector.shape_cast %22 : vector<128xf32> to vector<1x1x128xf32>
    tpu.vector_store %arg13[%c0_14, %c1, %c0_15], %25 {strides = array<i32>} : memref<8x16x128xf32, #tpu.memory_space<vmem>>, vector<1x1x128xf32>,
    %c2_i32 = arith.constant 2 : i32
    %26 = arith.addi %7, %c2_i32 : i32
    %27 = arith.index_cast %26 : i32 to index
    %c0_16 = arith.constant 0 : index
    %28 = memref.load %arg1[%27, %c0_16] : memref<16x8xi32, #tpu.memory_space<smem>>
    %29 = arith.index_cast %28 : i32 to index
    %c0_17 = arith.constant 0 : index
    %30 = vector.load %arg12[%29, %c0_17] : memref<32x128xf32, #tpu.memory_space<vmem>>, vector<1x128xf32>
    %31 = vector.shape_cast %30 : vector<1x128xf32> to vector<128xf32>
    %c0_18 = arith.constant 0 : index
    %c2 = arith.constant 2 : index
    %c0_19 = arith.constant 0 : index
    %32 = vector.load %arg13[%c0_18, %c2, %c0_19] : memref<8x16x128xf32, #tpu.memory_space<vmem>>, vector<1x1x128xf32>
    %33 = vector.shape_cast %32 : vector<1x1x128xf32> to vector<128xf32>
    %34 = vector.shape_cast %31 : vector<128xf32> to vector<1x1x128xf32>
    tpu.vector_store %arg13[%c0_18, %c2, %c0_19], %34 {strides = array<i32>} : memref<8x16x128xf32, #tpu.memory_space<vmem>>, vector<1x1x128xf32>,
    %c3_i32 = arith.constant 3 : i32
    %35 = arith.addi %7, %c3_i32 : i32
    %36 = arith.index_cast %35 : i32 to index
    %c0_20 = arith.constant 0 : index
    %37 = memref.load %arg1[%36, %c0_20] : memref<16x8xi32, #tpu.memory_space<smem>>
    %38 = arith.index_cast %37 : i32 to index
    %c0_21 = arith.constant 0 : index
    %39 = vector.load %arg12[%38, %c0_21] : memref<32x128xf32, #tpu.memory_space<vmem>>, vector<1x128xf32>
    %40 = vector.shape_cast %39 : vector<1x128xf32> to vector<128xf32>
    %c0_22 = arith.constant 0 : index
    %c3 = arith.constant 3 : index
    %c0_23 = arith.constant 0 : index
    %41 = vector.load %arg13[%c0_22, %c3, %c0_23] : memref<8x16x128xf32, #tpu.memory_space<vmem>>, vector<1x1x128xf32>
    %42 = vector.shape_cast %41 : vector<1x1x128xf32> to vector<128xf32>
    %43 = vector.shape_cast %40 : vector<128xf32> to vector<1x1x128xf32>
    tpu.vector_store %arg13[%c0_22, %c3, %c0_23], %43 {strides = array<i32>} : memref<8x16x128xf32, #tpu.memory_space<vmem>>, vector<1x1x128xf32>,
    %c4_i32 = arith.constant 4 : i32
    %44 = arith.addi %7, %c4_i32 : i32
    %45 = arith.index_cast %44 : i32 to index
    %c0_24 = arith.constant 0 : index
    %46 = memref.load %arg1[%45, %c0_24] : memref<16x8xi32, #tpu.memory_space<smem>>
    %47 = arith.index_cast %46 : i32 to index
    %c0_25 = arith.constant 0 : index
    %48 = vector.load %arg12[%47, %c0_25] : memref<32x128xf32, #tpu.memory_space<vmem>>, vector<1x128xf32>
    %49 = vector.shape_cast %48 : vector<1x128xf32> to vector<128xf32>
    %c0_26 = arith.constant 0 : index
    %c4 = arith.constant 4 : index
    %c0_27 = arith.constant 0 : index
    %50 = vector.load %arg13[%c0_26, %c4, %c0_27] : memref<8x16x128xf32, #tpu.memory_space<vmem>>, vector<1x1x128xf32>
    %51 = vector.shape_cast %50 : vector<1x1x128xf32> to vector<128xf32>
    %52 = vector.shape_cast %49 : vector<128xf32> to vector<1x1x128xf32>
    tpu.vector_store %arg13[%c0_26, %c4, %c0_27], %52 {strides = array<i32>} : memref<8x16x128xf32, #tpu.memory_space<vmem>>, vector<1x1x128xf32>,
    %c5_i32 = arith.constant 5 : i32
    %53 = arith.addi %7, %c5_i32 : i32
    %54 = arith.index_cast %53 : i32 to index
    %c0_28 = arith.constant 0 : index
    %55 = memref.load %arg1[%54, %c0_28] : memref<16x8xi32, #tpu.memory_space<smem>>
    %56 = arith.index_cast %55 : i32 to index
    %c0_29 = arith.constant 0 : index
    %57 = vector.load %arg12[%56, %c0_29] : memref<32x128xf32, #tpu.memory_space<vmem>>, vector<1x128xf32>
    %58 = vector.shape_cast %57 : vector<1x128xf32> to vector<128xf32>
    %c0_30 = arith.constant 0 : index
    %c5 = arith.constant 5 : index
    %c0_31 = arith.constant 0 : index
    %59 = vector.load %arg13[%c0_30, %c5, %c0_31] : memref<8x16x128xf32, #tpu.memory_space<vmem>>, vector<1x1x128xf32>
    %60 = vector.shape_cast %59 : vector<1x1x128xf32> to vector<128xf32>
    %61 = vector.shape_cast %58 : vector<128xf32> to vector<1x1x128xf32>
    tpu.vector_store %arg13[%c0_30, %c5, %c0_31], %61 {strides = array<i32>} : memref<8x16x128xf32, #tpu.memory_space<vmem>>, vector<1x1x128xf32>,
    %c6_i32 = arith.constant 6 : i32
    %62 = arith.addi %7, %c6_i32 : i32
    %63 = arith.index_cast %62 : i32 to index
    %c0_32 = arith.constant 0 : index
    %64 = memref.load %arg1[%63, %c0_32] : memref<16x8xi32, #tpu.memory_space<smem>>
    %65 = arith.index_cast %64 : i32 to index
    %c0_33 = arith.constant 0 : index
    %66 = vector.load %arg12[%65, %c0_33] : memref<32x128xf32, #tpu.memory_space<vmem>>, vector<1x128xf32>
    %67 = vector.shape_cast %66 : vector<1x128xf32> to vector<128xf32>
    %c0_34 = arith.constant 0 : index
    %c6 = arith.constant 6 : index
    %c0_35 = arith.constant 0 : index
    %68 = vector.load %arg13[%c0_34, %c6, %c0_35] : memref<8x16x128xf32, #tpu.memory_space<vmem>>, vector<1x1x128xf32>
    %69 = vector.shape_cast %68 : vector<1x1x128xf32> to vector<128xf32>
    %70 = vector.shape_cast %67 : vector<128xf32> to vector<1x1x128xf32>
    tpu.vector_store %arg13[%c0_34, %c6, %c0_35], %70 {strides = array<i32>} : memref<8x16x128xf32, #tpu.memory_space<vmem>>, vector<1x1x128xf32>,
    %c7_i32 = arith.constant 7 : i32
    %71 = arith.addi %7, %c7_i32 : i32
    %72 = arith.index_cast %71 : i32 to index
    %c0_36 = arith.constant 0 : index
    %73 = memref.load %arg1[%72, %c0_36] : memref<16x8xi32, #tpu.memory_space<smem>>
    %74 = arith.index_cast %73 : i32 to index
    %c0_37 = arith.constant 0 : index
    %75 = vector.load %arg12[%74, %c0_37] : memref<32x128xf32, #tpu.memory_space<vmem>>, vector<1x128xf32>
    %76 = vector.shape_cast %75 : vector<1x128xf32> to vector<128xf32>
    %c0_38 = arith.constant 0 : index
    %c7 = arith.constant 7 : index
    %c0_39 = arith.constant 0 : index
    %77 = vector.load %arg13[%c0_38, %c7, %c0_39] : memref<8x16x128xf32, #tpu.memory_space<vmem>>, vector<1x1x128xf32>
    %78 = vector.shape_cast %77 : vector<1x1x128xf32> to vector<128xf32>
    %79 = vector.shape_cast %76 : vector<128xf32> to vector<1x1x128xf32>
    tpu.vector_store %arg13[%c0_38, %c7, %c0_39], %79 {strides = array<i32>} : memref<8x16x128xf32, #tpu.memory_space<vmem>>, vector<1x1x128xf32>,
    %c8_i32 = arith.constant 8 : i32
    %80 = arith.addi %7, %c8_i32 : i32
    %81 = arith.index_cast %80 : i32 to index
    %c0_40 = arith.constant 0 : index
    %82 = memref.load %arg1[%81, %c0_40] : memref<16x8xi32, #tpu.memory_space<smem>>
    %83 = arith.index_cast %82 : i32 to index
    %c0_41 = arith.constant 0 : index
    %84 = vector.load %arg12[%83, %c0_41] : memref<32x128xf32, #tpu.memory_space<vmem>>, vector<1x128xf32>
    %85 = vector.shape_cast %84 : vector<1x128xf32> to vector<128xf32>
    %c0_42 = arith.constant 0 : index
    %c8 = arith.constant 8 : index
    %c0_43 = arith.constant 0 : index
    %86 = vector.load %arg13[%c0_42, %c8, %c0_43] : memref<8x16x128xf32, #tpu.memory_space<vmem>>, vector<1x1x128xf32>
    %87 = vector.shape_cast %86 : vector<1x1x128xf32> to vector<128xf32>
    %88 = vector.shape_cast %85 : vector<128xf32> to vector<1x1x128xf32>
    tpu.vector_store %arg13[%c0_42, %c8, %c0_43], %88 {strides = array<i32>} : memref<8x16x128xf32, #tpu.memory_space<vmem>>, vector<1x1x128xf32>,
    %c9_i32 = arith.constant 9 : i32
    %89 = arith.addi %7, %c9_i32 : i32
    %90 = arith.index_cast %89 : i32 to index
    %c0_44 = arith.constant 0 : index
    %91 = memref.load %arg1[%90, %c0_44] : memref<16x8xi32, #tpu.memory_space<smem>>
    %92 = arith.index_cast %91 : i32 to index
    %c0_45 = arith.constant 0 : index
    %93 = vector.load %arg12[%92, %c0_45] : memref<32x128xf32, #tpu.memory_space<vmem>>, vector<1x128xf32>
    %94 = vector.shape_cast %93 : vector<1x128xf32> to vector<128xf32>
    %c0_46 = arith.constant 0 : index
    %c9 = arith.constant 9 : index
    %c0_47 = arith.constant 0 : index
    %95 = vector.load %arg13[%c0_46, %c9, %c0_47] : memref<8x16x128xf32, #tpu.memory_space<vmem>>, vector<1x1x128xf32>
    %96 = vector.shape_cast %95 : vector<1x1x128xf32> to vector<128xf32>
    %97 = vector.shape_cast %94 : vector<128xf32> to vector<1x1x128xf32>
    tpu.vector_store %arg13[%c0_46, %c9, %c0_47], %97 {strides = array<i32>} : memref<8x16x128xf32, #tpu.memory_space<vmem>>, vector<1x1x128xf32>,
    %c10_i32 = arith.constant 10 : i32
    %98 = arith.addi %7, %c10_i32 : i32
    %99 = arith.index_cast %98 : i32 to index
    %c0_48 = arith.constant 0 : index
    %100 = memref.load %arg1[%99, %c0_48] : memref<16x8xi32, #tpu.memory_space<smem>>
    %101 = arith.index_cast %100 : i32 to index
    %c0_49 = arith.constant 0 : index
    %102 = vector.load %arg12[%101, %c0_49] : memref<32x128xf32, #tpu.memory_space<vmem>>, vector<1x128xf32>
    %103 = vector.shape_cast %102 : vector<1x128xf32> to vector<128xf32>
    %c0_50 = arith.constant 0 : index
    %c10 = arith.constant 10 : index
    %c0_51 = arith.constant 0 : index
    %104 = vector.load %arg13[%c0_50, %c10, %c0_51] : memref<8x16x128xf32, #tpu.memory_space<vmem>>, vector<1x1x128xf32>
    %105 = vector.shape_cast %104 : vector<1x1x128xf32> to vector<128xf32>
    %106 = vector.shape_cast %103 : vector<128xf32> to vector<1x1x128xf32>
    tpu.vector_store %arg13[%c0_50, %c10, %c0_51], %106 {strides = array<i32>} : memref<8x16x128xf32, #tpu.memory_space<vmem>>, vector<1x1x128xf32>,
    %c11_i32 = arith.constant 11 : i32
    %107 = arith.addi %7, %c11_i32 : i32
    %108 = arith.index_cast %107 : i32 to index
    %c0_52 = arith.constant 0 : index
    %109 = memref.load %arg1[%108, %c0_52] : memref<16x8xi32, #tpu.memory_space<smem>>
    %110 = arith.index_cast %109 : i32 to index
    %c0_53 = arith.constant 0 : index
    %111 = vector.load %arg12[%110, %c0_53] : memref<32x128xf32, #tpu.memory_space<vmem>>, vector<1x128xf32>
    %112 = vector.shape_cast %111 : vector<1x128xf32> to vector<128xf32>
    %c0_54 = arith.constant 0 : index
    %c11 = arith.constant 11 : index
    %c0_55 = arith.constant 0 : index
    %113 = vector.load %arg13[%c0_54, %c11, %c0_55] : memref<8x16x128xf32, #tpu.memory_space<vmem>>, vector<1x1x128xf32>
    %114 = vector.shape_cast %113 : vector<1x1x128xf32> to vector<128xf32>
    %115 = vector.shape_cast %112 : vector<128xf32> to vector<1x1x128xf32>
    tpu.vector_store %arg13[%c0_54, %c11, %c0_55], %115 {strides = array<i32>} : memref<8x16x128xf32, #tpu.memory_space<vmem>>, vector<1x1x128xf32>,
    %c12_i32 = arith.constant 12 : i32
    %116 = arith.addi %7, %c12_i32 : i32
    %117 = arith.index_cast %116 : i32 to index
    %c0_56 = arith.constant 0 : index
    %118 = memref.load %arg1[%117, %c0_56] : memref<16x8xi32, #tpu.memory_space<smem>>
    %119 = arith.index_cast %118 : i32 to index
    %c0_57 = arith.constant 0 : index
    %120 = vector.load %arg12[%119, %c0_57] : memref<32x128xf32, #tpu.memory_space<vmem>>, vector<1x128xf32>
    %121 = vector.shape_cast %120 : vector<1x128xf32> to vector<128xf32>
    %c0_58 = arith.constant 0 : index
    %c12 = arith.constant 12 : index
    %c0_59 = arith.constant 0 : index
    %122 = vector.load %arg13[%c0_58, %c12, %c0_59] : memref<8x16x128xf32, #tpu.memory_space<vmem>>, vector<1x1x128xf32>
    %123 = vector.shape_cast %122 : vector<1x1x128xf32> to vector<128xf32>
    %124 = vector.shape_cast %121 : vector<128xf32> to vector<1x1x128xf32>
    tpu.vector_store %arg13[%c0_58, %c12, %c0_59], %124 {strides = array<i32>} : memref<8x16x128xf32, #tpu.memory_space<vmem>>, vector<1x1x128xf32>,
    %c13_i32 = arith.constant 13 : i32
    %125 = arith.addi %7, %c13_i32 : i32
    %126 = arith.index_cast %125 : i32 to index
    %c0_60 = arith.constant 0 : index
    %127 = memref.load %arg1[%126, %c0_60] : memref<16x8xi32, #tpu.memory_space<smem>>
    %128 = arith.index_cast %127 : i32 to index
    %c0_61 = arith.constant 0 : index
    %129 = vector.load %arg12[%128, %c0_61] : memref<32x128xf32, #tpu.memory_space<vmem>>, vector<1x128xf32>
    %130 = vector.shape_cast %129 : vector<1x128xf32> to vector<128xf32>
    %c0_62 = arith.constant 0 : index
    %c13 = arith.constant 13 : index
    %c0_63 = arith.constant 0 : index
    %131 = vector.load %arg13[%c0_62, %c13, %c0_63] : memref<8x16x128xf32, #tpu.memory_space<vmem>>, vector<1x1x128xf32>
    %132 = vector.shape_cast %131 : vector<1x1x128xf32> to vector<128xf32>
    %133 = vector.shape_cast %130 : vector<128xf32> to vector<1x1x128xf32>
    tpu.vector_store %arg13[%c0_62, %c13, %c0_63], %133 {strides = array<i32>} : memref<8x16x128xf32, #tpu.memory_space<vmem>>, vector<1x1x128xf32>,
    %c14_i32 = arith.constant 14 : i32
    %134 = arith.addi %7, %c14_i32 : i32
    %135 = arith.index_cast %134 : i32 to index
    %c0_64 = arith.constant 0 : index
    %136 = memref.load %arg1[%135, %c0_64] : memref<16x8xi32, #tpu.memory_space<smem>>
    %137 = arith.index_cast %136 : i32 to index
    %c0_65 = arith.constant 0 : index
    %138 = vector.load %arg12[%137, %c0_65] : memref<32x128xf32, #tpu.memory_space<vmem>>, vector<1x128xf32>
    %139 = vector.shape_cast %138 : vector<1x128xf32> to vector<128xf32>
    %c0_66 = arith.constant 0 : index
    %c14 = arith.constant 14 : index
    %c0_67 = arith.constant 0 : index
    %140 = vector.load %arg13[%c0_66, %c14, %c0_67] : memref<8x16x128xf32, #tpu.memory_space<vmem>>, vector<1x1x128xf32>
    %141 = vector.shape_cast %140 : vector<1x1x128xf32> to vector<128xf32>
    %142 = vector.shape_cast %139 : vector<128xf32> to vector<1x1x128xf32>
    tpu.vector_store %arg13[%c0_66, %c14, %c0_67], %142 {strides = array<i32>} : memref<8x16x128xf32, #tpu.memory_space<vmem>>, vector<1x1x128xf32>,
    %c15_i32 = arith.constant 15 : i32
    %143 = arith.addi %7, %c15_i32 : i32
    %144 = arith.index_cast %143 : i32 to index
    %c0_68 = arith.constant 0 : index
    %145 = memref.load %arg1[%144, %c0_68] : memref<16x8xi32, #tpu.memory_space<smem>>
    %146 = arith.index_cast %145 : i32 to index
    %c0_69 = arith.constant 0 : index
    %147 = vector.load %arg12[%146, %c0_69] : memref<32x128xf32, #tpu.memory_space<vmem>>, vector<1x128xf32>
    %148 = vector.shape_cast %147 : vector<1x128xf32> to vector<128xf32>
    %c0_70 = arith.constant 0 : index
    %c15 = arith.constant 15 : index
    %c0_71 = arith.constant 0 : index
    %149 = vector.load %arg13[%c0_70, %c15, %c0_71] : memref<8x16x128xf32, #tpu.memory_space<vmem>>, vector<1x1x128xf32>
    %150 = vector.shape_cast %149 : vector<1x1x128xf32> to vector<128xf32>
    %151 = vector.shape_cast %148 : vector<128xf32> to vector<1x1x128xf32>
    tpu.vector_store %arg13[%c0_70, %c15, %c0_71], %151 {strides = array<i32>} : memref<8x16x128xf32, #tpu.memory_space<vmem>>, vector<1x1x128xf32>,
    %c0_i32_72 = arith.constant 0 : i32
    %152 = arith.addi %7, %c0_i32_72 : i32
    %153 = arith.index_cast %152 : i32 to index
    %c1_73 = arith.constant 1 : index
    %154 = memref.load %arg1[%153, %c1_73] : memref<16x8xi32, #tpu.memory_space<smem>>
    %155 = arith.index_cast %154 : i32 to index
    %c0_74 = arith.constant 0 : index
    %156 = vector.load %arg12[%155, %c0_74] : memref<32x128xf32, #tpu.memory_space<vmem>>, vector<1x128xf32>
    %157 = vector.shape_cast %156 : vector<1x128xf32> to vector<128xf32>
    %c1_75 = arith.constant 1 : index
    %c0_76 = arith.constant 0 : index
    %c0_77 = arith.constant 0 : index
    %158 = vector.load %arg13[%c1_75, %c0_76, %c0_77] : memref<8x16x128xf32, #tpu.memory_space<vmem>>, vector<1x1x128xf32>
    %159 = vector.shape_cast %158 : vector<1x1x128xf32> to vector<128xf32>
    %160 = vector.shape_cast %157 : vector<128xf32> to vector<1x1x128xf32>
    tpu.vector_store %arg13[%c1_75, %c0_76, %c0_77], %160 {strides = array<i32>} : memref<8x16x128xf32, #tpu.memory_space<vmem>>, vector<1x1x128xf32>,
    %c1_i32_78 = arith.constant 1 : i32
    %161 = arith.addi %7, %c1_i32_78 : i32
    %162 = arith.index_cast %161 : i32 to index
    %c1_79 = arith.constant 1 : index
    %163 = memref.load %arg1[%162, %c1_79] : memref<16x8xi32, #tpu.memory_space<smem>>
    %164 = arith.index_cast %163 : i32 to index
    %c0_80 = arith.constant 0 : index
    %165 = vector.load %arg12[%164, %c0_80] : memref<32x128xf32, #tpu.memory_space<vmem>>, vector<1x128xf32>
    %166 = vector.shape_cast %165 : vector<1x128xf32> to vector<128xf32>
    %c1_81 = arith.constant 1 : index
    %c1_82 = arith.constant 1 : index
    %c0_83 = arith.constant 0 : index
    %167 = vector.load %arg13[%c1_81, %c1_82, %c0_83] : memref<8x16x128xf32, #tpu.memory_space<vmem>>, vector<1x1x128xf32>
    %168 = vector.shape_cast %167 : vector<1x1x128xf32> to vector<128xf32>
    %169 = vector.shape_cast %166 : vector<128xf32> to vector<1x1x128xf32>
    tpu.vector_store %arg13[%c1_81, %c1_82, %c0_83], %169 {strides = array<i32>} : memref<8x16x128xf32, #tpu.memory_space<vmem>>, vector<1x1x128xf32>,
    %c2_i32_84 = arith.constant 2 : i32
    %170 = arith.addi %7, %c2_i32_84 : i32
    %171 = arith.index_cast %170 : i32 to index
    %c1_85 = arith.constant 1 : index
    %172 = memref.load %arg1[%171, %c1_85] : memref<16x8xi32, #tpu.memory_space<smem>>
    %173 = arith.index_cast %172 : i32 to index
    %c0_86 = arith.constant 0 : index
    %174 = vector.load %arg12[%173, %c0_86] : memref<32x128xf32, #tpu.memory_space<vmem>>, vector<1x128xf32>
    %175 = vector.shape_cast %174 : vector<1x128xf32> to vector<128xf32>
    %c1_87 = arith.constant 1 : index
    %c2_88 = arith.constant 2 : index
    %c0_89 = arith.constant 0 : index
    %176 = vector.load %arg13[%c1_87, %c2_88, %c0_89] : memref<8x16x128xf32, #tpu.memory_space<vmem>>, vector<1x1x128xf32>
    %177 = vector.shape_cast %176 : vector<1x1x128xf32> to vector<128xf32>
    %178 = vector.shape_cast %175 : vector<128xf32> to vector<1x1x128xf32>
    tpu.vector_store %arg13[%c1_87, %c2_88, %c0_89], %178 {strides = array<i32>} : memref<8x16x128xf32, #tpu.memory_space<vmem>>, vector<1x1x128xf32>,
    %c3_i32_90 = arith.constant 3 : i32
    %179 = arith.addi %7, %c3_i32_90 : i32
    %180 = arith.index_cast %179 : i32 to index
    %c1_91 = arith.constant 1 : index
    %181 = memref.load %arg1[%180, %c1_91] : memref<16x8xi32, #tpu.memory_space<smem>>
    %182 = arith.index_cast %181 : i32 to index
    %c0_92 = arith.constant 0 : index
    %183 = vector.load %arg12[%182, %c0_92] : memref<32x128xf32, #tpu.memory_space<vmem>>, vector<1x128xf32>
    %184 = vector.shape_cast %183 : vector<1x128xf32> to vector<128xf32>
    %c1_93 = arith.constant 1 : index
    %c3_94 = arith.constant 3 : index
    %c0_95 = arith.constant 0 : index
    %185 = vector.load %arg13[%c1_93, %c3_94, %c0_95] : memref<8x16x128xf32, #tpu.memory_space<vmem>>, vector<1x1x128xf32>
    %186 = vector.shape_cast %185 : vector<1x1x128xf32> to vector<128xf32>
    %187 = vector.shape_cast %184 : vector<128xf32> to vector<1x1x128xf32>
    tpu.vector_store %arg13[%c1_93, %c3_94, %c0_95], %187 {strides = array<i32>} : memref<8x16x128xf32, #tpu.memory_space<vmem>>, vector<1x1x128xf32>,
    %c4_i32_96 = arith.constant 4 : i32
    %188 = arith.addi %7, %c4_i32_96 : i32
    %189 = arith.index_cast %188 : i32 to index
    %c1_97 = arith.constant 1 : index
    %190 = memref.load %arg1[%189, %c1_97] : memref<16x8xi32, #tpu.memory_space<smem>>
    %191 = arith.index_cast %190 : i32 to index
    %c0_98 = arith.constant 0 : index
    %192 = vector.load %arg12[%191, %c0_98] : memref<32x128xf32, #tpu.memory_space<vmem>>, vector<1x128xf32>
    %193 = vector.shape_cast %192 : vector<1x128xf32> to vector<128xf32>
    %c1_99 = arith.constant 1 : index
    %c4_100 = arith.constant 4 : index
    %c0_101 = arith.constant 0 : index
    %194 = vector.load %arg13[%c1_99, %c4_100, %c0_101] : memref<8x16x128xf32, #tpu.memory_space<vmem>>, vector<1x1x128xf32>
    %195 = vector.shape_cast %194 : vector<1x1x128xf32> to vector<128xf32>
    %196 = vector.shape_cast %193 : vector<128xf32> to vector<1x1x128xf32>
    tpu.vector_store %arg13[%c1_99, %c4_100, %c0_101], %196 {strides = array<i32>} : memref<8x16x128xf32, #tpu.memory_space<vmem>>, vector<1x1x128xf32>,
    %c5_i32_102 = arith.constant 5 : i32
    %197 = arith.addi %7, %c5_i32_102 : i32
    %198 = arith.index_cast %197 : i32 to index
    %c1_103 = arith.constant 1 : index
    %199 = memref.load %arg1[%198, %c1_103] : memref<16x8xi32, #tpu.memory_space<smem>>
    %200 = arith.index_cast %199 : i32 to index
    %c0_104 = arith.constant 0 : index
    %201 = vector.load %arg12[%200, %c0_104] : memref<32x128xf32, #tpu.memory_space<vmem>>, vector<1x128xf32>
    %202 = vector.shape_cast %201 : vector<1x128xf32> to vector<128xf32>
    %c1_105 = arith.constant 1 : index
    %c5_106 = arith.constant 5 : index
    %c0_107 = arith.constant 0 : index
    %203 = vector.load %arg13[%c1_105, %c5_106, %c0_107] : memref<8x16x128xf32, #tpu.memory_space<vmem>>, vector<1x1x128xf32>
    %204 = vector.shape_cast %203 : vector<1x1x128xf32> to vector<128xf32>
    %205 = vector.shape_cast %202 : vector<128xf32> to vector<1x1x128xf32>
    tpu.vector_store %arg13[%c1_105, %c5_106, %c0_107], %205 {strides = array<i32>} : memref<8x16x128xf32, #tpu.memory_space<vmem>>, vector<1x1x128xf32>,
    %c6_i32_108 = arith.constant 6 : i32
    %206 = arith.addi %7, %c6_i32_108 : i32
    %207 = arith.index_cast %206 : i32 to index
    %c1_109 = arith.constant 1 : index
    %208 = memref.load %arg1[%207, %c1_109] : memref<16x8xi32, #tpu.memory_space<smem>>
    %209 = arith.index_cast %208 : i32 to index
    %c0_110 = arith.constant 0 : index
    %210 = vector.load %arg12[%209, %c0_110] : memref<32x128xf32, #tpu.memory_space<vmem>>, vector<1x128xf32>
    %211 = vector.shape_cast %210 : vector<1x128xf32> to vector<128xf32>
    %c1_111 = arith.constant 1 : index
    %c6_112 = arith.constant 6 : index
    %c0_113 = arith.constant 0 : index
    %212 = vector.load %arg13[%c1_111, %c6_112, %c0_113] : memref<8x16x128xf32, #tpu.memory_space<vmem>>, vector<1x1x128xf32>
    %213 = vector.shape_cast %212 : vector<1x1x128xf32> to vector<128xf32>
    %214 = vector.shape_cast %211 : vector<128xf32> to vector<1x1x128xf32>
    tpu.vector_store %arg13[%c1_111, %c6_112, %c0_113], %214 {strides = array<i32>} : memref<8x16x128xf32, #tpu.memory_space<vmem>>, vector<1x1x128xf32>,
    %c7_i32_114 = arith.constant 7 : i32
    %215 = arith.addi %7, %c7_i32_114 : i32
    %216 = arith.index_cast %215 : i32 to index
    %c1_115 = arith.constant 1 : index
    %217 = memref.load %arg1[%216, %c1_115] : memref<16x8xi32, #tpu.memory_space<smem>>
    %218 = arith.index_cast %217 : i32 to index
    %c0_116 = arith.constant 0 : index
    %219 = vector.load %arg12[%218, %c0_116] : memref<32x128xf32, #tpu.memory_space<vmem>>, vector<1x128xf32>
    %220 = vector.shape_cast %219 : vector<1x128xf32> to vector<128xf32>
    %c1_117 = arith.constant 1 : index
    %c7_118 = arith.constant 7 : index
    %c0_119 = arith.constant 0 : index
    %221 = vector.load %arg13[%c1_117, %c7_118, %c0_119] : memref<8x16x128xf32, #tpu.memory_space<vmem>>, vector<1x1x128xf32>
    %222 = vector.shape_cast %221 : vector<1x1x128xf32> to vector<128xf32>
    %223 = vector.shape_cast %220 : vector<128xf32> to vector<1x1x128xf32>
    tpu.vector_store %arg13[%c1_117, %c7_118, %c0_119], %223 {strides = array<i32>} : memref<8x16x128xf32, #tpu.memory_space<vmem>>, vector<1x1x128xf32>,
    %c8_i32_120 = arith.constant 8 : i32
    %224 = arith.addi %7, %c8_i32_120 : i32
    %225 = arith.index_cast %224 : i32 to index
    %c1_121 = arith.constant 1 : index
    %226 = memref.load %arg1[%225, %c1_121] : memref<16x8xi32, #tpu.memory_space<smem>>
    %227 = arith.index_cast %226 : i32 to index
    %c0_122 = arith.constant 0 : index
    %228 = vector.load %arg12[%227, %c0_122] : memref<32x128xf32, #tpu.memory_space<vmem>>, vector<1x128xf32>
    %229 = vector.shape_cast %228 : vector<1x128xf32> to vector<128xf32>
    %c1_123 = arith.constant 1 : index
    %c8_124 = arith.constant 8 : index
    %c0_125 = arith.constant 0 : index
    %230 = vector.load %arg13[%c1_123, %c8_124, %c0_125] : memref<8x16x128xf32, #tpu.memory_space<vmem>>, vector<1x1x128xf32>
    %231 = vector.shape_cast %230 : vector<1x1x128xf32> to vector<128xf32>
    %232 = vector.shape_cast %229 : vector<128xf32> to vector<1x1x128xf32>
    tpu.vector_store %arg13[%c1_123, %c8_124, %c0_125], %232 {strides = array<i32>} : memref<8x16x128xf32, #tpu.memory_space<vmem>>, vector<1x1x128xf32>,
    %c9_i32_126 = arith.constant 9 : i32
    %233 = arith.addi %7, %c9_i32_126 : i32
    %234 = arith.index_cast %233 : i32 to index
    %c1_127 = arith.constant 1 : index
    %235 = memref.load %arg1[%234, %c1_127] : memref<16x8xi32, #tpu.memory_space<smem>>
    %236 = arith.index_cast %235 : i32 to index
    %c0_128 = arith.constant 0 : index
    %237 = vector.load %arg12[%236, %c0_128] : memref<32x128xf32, #tpu.memory_space<vmem>>, vector<1x128xf32>
    %238 = vector.shape_cast %237 : vector<1x128xf32> to vector<128xf32>
    %c1_129 = arith.constant 1 : index
    %c9_130 = arith.constant 9 : index
    %c0_131 = arith.constant 0 : index
    %239 = vector.load %arg13[%c1_129, %c9_130, %c0_131] : memref<8x16x128xf32, #tpu.memory_space<vmem>>, vector<1x1x128xf32>
    %240 = vector.shape_cast %239 : vector<1x1x128xf32> to vector<128xf32>
    %241 = vector.shape_cast %238 : vector<128xf32> to vector<1x1x128xf32>
    tpu.vector_store %arg13[%c1_129, %c9_130, %c0_131], %241 {strides = array<i32>} : memref<8x16x128xf32, #tpu.memory_space<vmem>>, vector<1x1x128xf32>,
    %c10_i32_132 = arith.constant 10 : i32
    %242 = arith.addi %7, %c10_i32_132 : i32
    %243 = arith.index_cast %242 : i32 to index
    %c1_133 = arith.constant 1 : index
    %244 = memref.load %arg1[%243, %c1_133] : memref<16x8xi32, #tpu.memory_space<smem>>
    %245 = arith.index_cast %244 : i32 to index
    %c0_134 = arith.constant 0 : index
    %246 = vector.load %arg12[%245, %c0_134] : memref<32x128xf32, #tpu.memory_space<vmem>>, vector<1x128xf32>
    %247 = vector.shape_cast %246 : vector<1x128xf32> to vector<128xf32>
    %c1_135 = arith.constant 1 : index
    %c10_136 = arith.constant 10 : index
    %c0_137 = arith.constant 0 : index
    %248 = vector.load %arg13[%c1_135, %c10_136, %c0_137] : memref<8x16x128xf32, #tpu.memory_space<vmem>>, vector<1x1x128xf32>
    %249 = vector.shape_cast %248 : vector<1x1x128xf32> to vector<128xf32>
    %250 = vector.shape_cast %247 : vector<128xf32> to vector<1x1x128xf32>
    tpu.vector_store %arg13[%c1_135, %c10_136, %c0_137], %250 {strides = array<i32>} : memref<8x16x128xf32, #tpu.memory_space<vmem>>, vector<1x1x128xf32>,
    %c11_i32_138 = arith.constant 11 : i32
    %251 = arith.addi %7, %c11_i32_138 : i32
    %252 = arith.index_cast %251 : i32 to index
    %c1_139 = arith.constant 1 : index
    %253 = memref.load %arg1[%252, %c1_139] : memref<16x8xi32, #tpu.memory_space<smem>>
    %254 = arith.index_cast %253 : i32 to index
    %c0_140 = arith.constant 0 : index
    %255 = vector.load %arg12[%254, %c0_140] : memref<32x128xf32, #tpu.memory_space<vmem>>, vector<1x128xf32>
    %256 = vector.shape_cast %255 : vector<1x128xf32> to vector<128xf32>
    %c1_141 = arith.constant 1 : index
    %c11_142 = arith.constant 11 : index
    %c0_143 = arith.constant 0 : index
    %257 = vector.load %arg13[%c1_141, %c11_142, %c0_143] : memref<8x16x128xf32, #tpu.memory_space<vmem>>, vector<1x1x128xf32>
    %258 = vector.shape_cast %257 : vector<1x1x128xf32> to vector<128xf32>
    %259 = vector.shape_cast %256 : vector<128xf32> to vector<1x1x128xf32>
    tpu.vector_store %arg13[%c1_141, %c11_142, %c0_143], %259 {strides = array<i32>} : memref<8x16x128xf32, #tpu.memory_space<vmem>>, vector<1x1x128xf32>,
    %c12_i32_144 = arith.constant 12 : i32
    %260 = arith.addi %7, %c12_i32_144 : i32
    %261 = arith.index_cast %260 : i32 to index
    %c1_145 = arith.constant 1 : index
    %262 = memref.load %arg1[%261, %c1_145] : memref<16x8xi32, #tpu.memory_space<smem>>
    %263 = arith.index_cast %262 : i32 to index
    %c0_146 = arith.constant 0 : index
    %264 = vector.load %arg12[%263, %c0_146] : memref<32x128xf32, #tpu.memory_space<vmem>>, vector<1x128xf32>
    %265 = vector.shape_cast %264 : vector<1x128xf32> to vector<128xf32>
    %c1_147 = arith.constant 1 : index
    %c12_148 = arith.constant 12 : index
    %c0_149 = arith.constant 0 : index
    %266 = vector.load %arg13[%c1_147, %c12_148, %c0_149] : memref<8x16x128xf32, #tpu.memory_space<vmem>>, vector<1x1x128xf32>
    %267 = vector.shape_cast %266 : vector<1x1x128xf32> to vector<128xf32>
    %268 = vector.shape_cast %265 : vector<128xf32> to vector<1x1x128xf32>
    tpu.vector_store %arg13[%c1_147, %c12_148, %c0_149], %268 {strides = array<i32>} : memref<8x16x128xf32, #tpu.memory_space<vmem>>, vector<1x1x128xf32>,
    %c13_i32_150 = arith.constant 13 : i32
    %269 = arith.addi %7, %c13_i32_150 : i32
    %270 = arith.index_cast %269 : i32 to index
    %c1_151 = arith.constant 1 : index
    %271 = memref.load %arg1[%270, %c1_151] : memref<16x8xi32, #tpu.memory_space<smem>>
    %272 = arith.index_cast %271 : i32 to index
    %c0_152 = arith.constant 0 : index
    %273 = vector.load %arg12[%272, %c0_152] : memref<32x128xf32, #tpu.memory_space<vmem>>, vector<1x128xf32>
    %274 = vector.shape_cast %273 : vector<1x128xf32> to vector<128xf32>
    %c1_153 = arith.constant 1 : index
    %c13_154 = arith.constant 13 : index
    %c0_155 = arith.constant 0 : index
    %275 = vector.load %arg13[%c1_153, %c13_154, %c0_155] : memref<8x16x128xf32, #tpu.memory_space<vmem>>, vector<1x1x128xf32>
    %276 = vector.shape_cast %275 : vector<1x1x128xf32> to vector<128xf32>
    %277 = vector.shape_cast %274 : vector<128xf32> to vector<1x1x128xf32>
    tpu.vector_store %arg13[%c1_153, %c13_154, %c0_155], %277 {strides = array<i32>} : memref<8x16x128xf32, #tpu.memory_space<vmem>>, vector<1x1x128xf32>,
    %c14_i32_156 = arith.constant 14 : i32
    %278 = arith.addi %7, %c14_i32_156 : i32
    %279 = arith.index_cast %278 : i32 to index
    %c1_157 = arith.constant 1 : index
    %280 = memref.load %arg1[%279, %c1_157] : memref<16x8xi32, #tpu.memory_space<smem>>
    %281 = arith.index_cast %280 : i32 to index
    %c0_158 = arith.constant 0 : index
    %282 = vector.load %arg12[%281, %c0_158] : memref<32x128xf32, #tpu.memory_space<vmem>>, vector<1x128xf32>
    %283 = vector.shape_cast %282 : vector<1x128xf32> to vector<128xf32>
    %c1_159 = arith.constant 1 : index
    %c14_160 = arith.constant 14 : index
    %c0_161 = arith.constant 0 : index
    %284 = vector.load %arg13[%c1_159, %c14_160, %c0_161] : memref<8x16x128xf32, #tpu.memory_space<vmem>>, vector<1x1x128xf32>
    %285 = vector.shape_cast %284 : vector<1x1x128xf32> to vector<128xf32>
    %286 = vector.shape_cast %283 : vector<128xf32> to vector<1x1x128xf32>
    tpu.vector_store %arg13[%c1_159, %c14_160, %c0_161], %286 {strides = array<i32>} : memref<8x16x128xf32, #tpu.memory_space<vmem>>, vector<1x1x128xf32>,
    %c15_i32_162 = arith.constant 15 : i32
    %287 = arith.addi %7, %c15_i32_162 : i32
    %288 = arith.index_cast %287 : i32 to index
    %c1_163 = arith.constant 1 : index
    %289 = memref.load %arg1[%288, %c1_163] : memref<16x8xi32, #tpu.memory_space<smem>>
    %290 = arith.index_cast %289 : i32 to index
    %c0_164 = arith.constant 0 : index
    %291 = vector.load %arg12[%290, %c0_164] : memref<32x128xf32, #tpu.memory_space<vmem>>, vector<1x128xf32>
    %292 = vector.shape_cast %291 : vector<1x128xf32> to vector<128xf32>
    %c1_165 = arith.constant 1 : index
    %c15_166 = arith.constant 15 : index
    %c0_167 = arith.constant 0 : index
    %293 = vector.load %arg13[%c1_165, %c15_166, %c0_167] : memref<8x16x128xf32, #tpu.memory_space<vmem>>, vector<1x1x128xf32>
    %294 = vector.shape_cast %293 : vector<1x1x128xf32> to vector<128xf32>
    %295 = vector.shape_cast %292 : vector<128xf32> to vector<1x1x128xf32>
    tpu.vector_store %arg13[%c1_165, %c15_166, %c0_167], %295 {strides = array<i32>} : memref<8x16x128xf32, #tpu.memory_space<vmem>>, vector<1x1x128xf32>,
    %c0_i32_168 = arith.constant 0 : i32
    %296 = arith.addi %7, %c0_i32_168 : i32
    %297 = arith.index_cast %296 : i32 to index
    %c2_169 = arith.constant 2 : index
    %298 = memref.load %arg1[%297, %c2_169] : memref<16x8xi32, #tpu.memory_space<smem>>
    %299 = arith.index_cast %298 : i32 to index
    %c0_170 = arith.constant 0 : index
    %300 = vector.load %arg12[%299, %c0_170] : memref<32x128xf32, #tpu.memory_space<vmem>>, vector<1x128xf32>
    %301 = vector.shape_cast %300 : vector<1x128xf32> to vector<128xf32>
    %c2_171 = arith.constant 2 : index
    %c0_172 = arith.constant 0 : index
    %c0_173 = arith.constant 0 : index
    %302 = vector.load %arg13[%c2_171, %c0_172, %c0_173] : memref<8x16x128xf32, #tpu.memory_space<vmem>>, vector<1x1x128xf32>
    %303 = vector.shape_cast %302 : vector<1x1x128xf32> to vector<128xf32>
    %304 = vector.shape_cast %301 : vector<128xf32> to vector<1x1x128xf32>
    tpu.vector_store %arg13[%c2_171, %c0_172, %c0_173], %304 {strides = array<i32>} : memref<8x16x128xf32, #tpu.memory_space<vmem>>, vector<1x1x128xf32>,
    %c1_i32_174 = arith.constant 1 : i32
    %305 = arith.addi %7, %c1_i32_174 : i32
    %306 = arith.index_cast %305 : i32 to index
    %c2_175 = arith.constant 2 : index
    %307 = memref.load %arg1[%306, %c2_175] : memref<16x8xi32, #tpu.memory_space<smem>>
    %308 = arith.index_cast %307 : i32 to index
    %c0_176 = arith.constant 0 : index
    %309 = vector.load %arg12[%308, %c0_176] : memref<32x128xf32, #tpu.memory_space<vmem>>, vector<1x128xf32>
    %310 = vector.shape_cast %309 : vector<1x128xf32> to vector<128xf32>
    %c2_177 = arith.constant 2 : index
    %c1_178 = arith.constant 1 : index
    %c0_179 = arith.constant 0 : index
    %311 = vector.load %arg13[%c2_177, %c1_178, %c0_179] : memref<8x16x128xf32, #tpu.memory_space<vmem>>, vector<1x1x128xf32>
    %312 = vector.shape_cast %311 : vector<1x1x128xf32> to vector<128xf32>
    %313 = vector.shape_cast %310 : vector<128xf32> to vector<1x1x128xf32>
    tpu.vector_store %arg13[%c2_177, %c1_178, %c0_179], %313 {strides = array<i32>} : memref<8x16x128xf32, #tpu.memory_space<vmem>>, vector<1x1x128xf32>,
    %c2_i32_180 = arith.constant 2 : i32
    %314 = arith.addi %7, %c2_i32_180 : i32
    %315 = arith.index_cast %314 : i32 to index
    %c2_181 = arith.constant 2 : index
    %316 = memref.load %arg1[%315, %c2_181] : memref<16x8xi32, #tpu.memory_space<smem>>
    %317 = arith.index_cast %316 : i32 to index
    %c0_182 = arith.constant 0 : index
    %318 = vector.load %arg12[%317, %c0_182] : memref<32x128xf32, #tpu.memory_space<vmem>>, vector<1x128xf32>
    %319 = vector.shape_cast %318 : vector<1x128xf32> to vector<128xf32>
    %c2_183 = arith.constant 2 : index
    %c2_184 = arith.constant 2 : index
    %c0_185 = arith.constant 0 : index
    %320 = vector.load %arg13[%c2_183, %c2_184, %c0_185] : memref<8x16x128xf32, #tpu.memory_space<vmem>>, vector<1x1x128xf32>
    %321 = vector.shape_cast %320 : vector<1x1x128xf32> to vector<128xf32>
    %322 = vector.shape_cast %319 : vector<128xf32> to vector<1x1x128xf32>
    tpu.vector_store %arg13[%c2_183, %c2_184, %c0_185], %322 {strides = array<i32>} : memref<8x16x128xf32, #tpu.memory_space<vmem>>, vector<1x1x128xf32>,
    %c3_i32_186 = arith.constant 3 : i32
    %323 = arith.addi %7, %c3_i32_186 : i32
    %324 = arith.index_cast %323 : i32 to index
    %c2_187 = arith.constant 2 : index
    %325 = memref.load %arg1[%324, %c2_187] : memref<16x8xi32, #tpu.memory_space<smem>>
    %326 = arith.index_cast %325 : i32 to index
    %c0_188 = arith.constant 0 : index
    %327 = vector.load %arg12[%326, %c0_188] : memref<32x128xf32, #tpu.memory_space<vmem>>, vector<1x128xf32>
    %328 = vector.shape_cast %327 : vector<1x128xf32> to vector<128xf32>
    %c2_189 = arith.constant 2 : index
    %c3_190 = arith.constant 3 : index
    %c0_191 = arith.constant 0 : index
    %329 = vector.load %arg13[%c2_189, %c3_190, %c0_191] : memref<8x16x128xf32, #tpu.memory_space<vmem>>, vector<1x1x128xf32>
    %330 = vector.shape_cast %329 : vector<1x1x128xf32> to vector<128xf32>
    %331 = vector.shape_cast %328 : vector<128xf32> to vector<1x1x128xf32>
    tpu.vector_store %arg13[%c2_189, %c3_190, %c0_191], %331 {strides = array<i32>} : memref<8x16x128xf32, #tpu.memory_space<vmem>>, vector<1x1x128xf32>,
    %c4_i32_192 = arith.constant 4 : i32
    %332 = arith.addi %7, %c4_i32_192 : i32
    %333 = arith.index_cast %332 : i32 to index
    %c2_193 = arith.constant 2 : index
    %334 = memref.load %arg1[%333, %c2_193] : memref<16x8xi32, #tpu.memory_space<smem>>
    %335 = arith.index_cast %334 : i32 to index
    %c0_194 = arith.constant 0 : index
    %336 = vector.load %arg12[%335, %c0_194] : memref<32x128xf32, #tpu.memory_space<vmem>>, vector<1x128xf32>
    %337 = vector.shape_cast %336 : vector<1x128xf32> to vector<128xf32>
    %c2_195 = arith.constant 2 : index
    %c4_196 = arith.constant 4 : index
    %c0_197 = arith.constant 0 : index
    %338 = vector.load %arg13[%c2_195, %c4_196, %c0_197] : memref<8x16x128xf32, #tpu.memory_space<vmem>>, vector<1x1x128xf32>
    %339 = vector.shape_cast %338 : vector<1x1x128xf32> to vector<128xf32>
    %340 = vector.shape_cast %337 : vector<128xf32> to vector<1x1x128xf32>
    tpu.vector_store %arg13[%c2_195, %c4_196, %c0_197], %340 {strides = array<i32>} : memref<8x16x128xf32, #tpu.memory_space<vmem>>, vector<1x1x128xf32>,
    %c5_i32_198 = arith.constant 5 : i32
    %341 = arith.addi %7, %c5_i32_198 : i32
    %342 = arith.index_cast %341 : i32 to index
    %c2_199 = arith.constant 2 : index
    %343 = memref.load %arg1[%342, %c2_199] : memref<16x8xi32, #tpu.memory_space<smem>>
    %344 = arith.index_cast %343 : i32 to index
    %c0_200 = arith.constant 0 : index
    %345 = vector.load %arg12[%344, %c0_200] : memref<32x128xf32, #tpu.memory_space<vmem>>, vector<1x128xf32>
    %346 = vector.shape_cast %345 : vector<1x128xf32> to vector<128xf32>
    %c2_201 = arith.constant 2 : index
    %c5_202 = arith.constant 5 : index
    %c0_203 = arith.constant 0 : index
    %347 = vector.load %arg13[%c2_201, %c5_202, %c0_203] : memref<8x16x128xf32, #tpu.memory_space<vmem>>, vector<1x1x128xf32>
    %348 = vector.shape_cast %347 : vector<1x1x128xf32> to vector<128xf32>
    %349 = vector.shape_cast %346 : vector<128xf32> to vector<1x1x128xf32>
    tpu.vector_store %arg13[%c2_201, %c5_202, %c0_203], %349 {strides = array<i32>} : memref<8x16x128xf32, #tpu.memory_space<vmem>>, vector<1x1x128xf32>,
    %c6_i32_204 = arith.constant 6 : i32
    %350 = arith.addi %7, %c6_i32_204 : i32
    %351 = arith.index_cast %350 : i32 to index
    %c2_205 = arith.constant 2 : index
    %352 = memref.load %arg1[%351, %c2_205] : memref<16x8xi32, #tpu.memory_space<smem>>
    %353 = arith.index_cast %352 : i32 to index
    %c0_206 = arith.constant 0 : index
    %354 = vector.load %arg12[%353, %c0_206] : memref<32x128xf32, #tpu.memory_space<vmem>>, vector<1x128xf32>
    %355 = vector.shape_cast %354 : vector<1x128xf32> to vector<128xf32>
    %c2_207 = arith.constant 2 : index
    %c6_208 = arith.constant 6 : index
    %c0_209 = arith.constant 0 : index
    %356 = vector.load %arg13[%c2_207, %c6_208, %c0_209] : memref<8x16x128xf32, #tpu.memory_space<vmem>>, vector<1x1x128xf32>
    %357 = vector.shape_cast %356 : vector<1x1x128xf32> to vector<128xf32>
    %358 = vector.shape_cast %355 : vector<128xf32> to vector<1x1x128xf32>
    tpu.vector_store %arg13[%c2_207, %c6_208, %c0_209], %358 {strides = array<i32>} : memref<8x16x128xf32, #tpu.memory_space<vmem>>, vector<1x1x128xf32>,
    %c7_i32_210 = arith.constant 7 : i32
    %359 = arith.addi %7, %c7_i32_210 : i32
    %360 = arith.index_cast %359 : i32 to index
    %c2_211 = arith.constant 2 : index
    %361 = memref.load %arg1[%360, %c2_211] : memref<16x8xi32, #tpu.memory_space<smem>>
    %362 = arith.index_cast %361 : i32 to index
    %c0_212 = arith.constant 0 : index
    %363 = vector.load %arg12[%362, %c0_212] : memref<32x128xf32, #tpu.memory_space<vmem>>, vector<1x128xf32>
    %364 = vector.shape_cast %363 : vector<1x128xf32> to vector<128xf32>
    %c2_213 = arith.constant 2 : index
    %c7_214 = arith.constant 7 : index
    %c0_215 = arith.constant 0 : index
    %365 = vector.load %arg13[%c2_213, %c7_214, %c0_215] : memref<8x16x128xf32, #tpu.memory_space<vmem>>, vector<1x1x128xf32>
    %366 = vector.shape_cast %365 : vector<1x1x128xf32> to vector<128xf32>
    %367 = vector.shape_cast %364 : vector<128xf32> to vector<1x1x128xf32>
    tpu.vector_store %arg13[%c2_213, %c7_214, %c0_215], %367 {strides = array<i32>} : memref<8x16x128xf32, #tpu.memory_space<vmem>>, vector<1x1x128xf32>,
    %c8_i32_216 = arith.constant 8 : i32
    %368 = arith.addi %7, %c8_i32_216 : i32
    %369 = arith.index_cast %368 : i32 to index
    %c2_217 = arith.constant 2 : index
    %370 = memref.load %arg1[%369, %c2_217] : memref<16x8xi32, #tpu.memory_space<smem>>
    %371 = arith.index_cast %370 : i32 to index
    %c0_218 = arith.constant 0 : index
    %372 = vector.load %arg12[%371, %c0_218] : memref<32x128xf32, #tpu.memory_space<vmem>>, vector<1x128xf32>
    %373 = vector.shape_cast %372 : vector<1x128xf32> to vector<128xf32>
    %c2_219 = arith.constant 2 : index
    %c8_220 = arith.constant 8 : index
    %c0_221 = arith.constant 0 : index
    %374 = vector.load %arg13[%c2_219, %c8_220, %c0_221] : memref<8x16x128xf32, #tpu.memory_space<vmem>>, vector<1x1x128xf32>
    %375 = vector.shape_cast %374 : vector<1x1x128xf32> to vector<128xf32>
    %376 = vector.shape_cast %373 : vector<128xf32> to vector<1x1x128xf32>
    tpu.vector_store %arg13[%c2_219, %c8_220, %c0_221], %376 {strides = array<i32>} : memref<8x16x128xf32, #tpu.memory_space<vmem>>, vector<1x1x128xf32>,
    %c9_i32_222 = arith.constant 9 : i32
    %377 = arith.addi %7, %c9_i32_222 : i32
    %378 = arith.index_cast %377 : i32 to index
    %c2_223 = arith.constant 2 : index
    %379 = memref.load %arg1[%378, %c2_223] : memref<16x8xi32, #tpu.memory_space<smem>>
    %380 = arith.index_cast %379 : i32 to index
    %c0_224 = arith.constant 0 : index
    %381 = vector.load %arg12[%380, %c0_224] : memref<32x128xf32, #tpu.memory_space<vmem>>, vector<1x128xf32>
    %382 = vector.shape_cast %381 : vector<1x128xf32> to vector<128xf32>
    %c2_225 = arith.constant 2 : index
    %c9_226 = arith.constant 9 : index
    %c0_227 = arith.constant 0 : index
    %383 = vector.load %arg13[%c2_225, %c9_226, %c0_227] : memref<8x16x128xf32, #tpu.memory_space<vmem>>, vector<1x1x128xf32>
    %384 = vector.shape_cast %383 : vector<1x1x128xf32> to vector<128xf32>
    %385 = vector.shape_cast %382 : vector<128xf32> to vector<1x1x128xf32>
    tpu.vector_store %arg13[%c2_225, %c9_226, %c0_227], %385 {strides = array<i32>} : memref<8x16x128xf32, #tpu.memory_space<vmem>>, vector<1x1x128xf32>,
    %c10_i32_228 = arith.constant 10 : i32
    %386 = arith.addi %7, %c10_i32_228 : i32
    %387 = arith.index_cast %386 : i32 to index
    %c2_229 = arith.constant 2 : index
    %388 = memref.load %arg1[%387, %c2_229] : memref<16x8xi32, #tpu.memory_space<smem>>
    %389 = arith.index_cast %388 : i32 to index
    %c0_230 = arith.constant 0 : index
    %390 = vector.load %arg12[%389, %c0_230] : memref<32x128xf32, #tpu.memory_space<vmem>>, vector<1x128xf32>
    %391 = vector.shape_cast %390 : vector<1x128xf32> to vector<128xf32>
    %c2_231 = arith.constant 2 : index
    %c10_232 = arith.constant 10 : index
    %c0_233 = arith.constant 0 : index
    %392 = vector.load %arg13[%c2_231, %c10_232, %c0_233] : memref<8x16x128xf32, #tpu.memory_space<vmem>>, vector<1x1x128xf32>
    %393 = vector.shape_cast %392 : vector<1x1x128xf32> to vector<128xf32>
    %394 = vector.shape_cast %391 : vector<128xf32> to vector<1x1x128xf32>
    tpu.vector_store %arg13[%c2_231, %c10_232, %c0_233], %394 {strides = array<i32>} : memref<8x16x128xf32, #tpu.memory_space<vmem>>, vector<1x1x128xf32>,
    %c11_i32_234 = arith.constant 11 : i32
    %395 = arith.addi %7, %c11_i32_234 : i32
    %396 = arith.index_cast %395 : i32 to index
    %c2_235 = arith.constant 2 : index
    %397 = memref.load %arg1[%396, %c2_235] : memref<16x8xi32, #tpu.memory_space<smem>>
    %398 = arith.index_cast %397 : i32 to index
    %c0_236 = arith.constant 0 : index
    %399 = vector.load %arg12[%398, %c0_236] : memref<32x128xf32, #tpu.memory_space<vmem>>, vector<1x128xf32>
    %400 = vector.shape_cast %399 : vector<1x128xf32> to vector<128xf32>
    %c2_237 = arith.constant 2 : index
    %c11_238 = arith.constant 11 : index
    %c0_239 = arith.constant 0 : index
    %401 = vector.load %arg13[%c2_237, %c11_238, %c0_239] : memref<8x16x128xf32, #tpu.memory_space<vmem>>, vector<1x1x128xf32>
    %402 = vector.shape_cast %401 : vector<1x1x128xf32> to vector<128xf32>
    %403 = vector.shape_cast %400 : vector<128xf32> to vector<1x1x128xf32>
    tpu.vector_store %arg13[%c2_237, %c11_238, %c0_239], %403 {strides = array<i32>} : memref<8x16x128xf32, #tpu.memory_space<vmem>>, vector<1x1x128xf32>,
    %c12_i32_240 = arith.constant 12 : i32
    %404 = arith.addi %7, %c12_i32_240 : i32
    %405 = arith.index_cast %404 : i32 to index
    %c2_241 = arith.constant 2 : index
    %406 = memref.load %arg1[%405, %c2_241] : memref<16x8xi32, #tpu.memory_space<smem>>
    %407 = arith.index_cast %406 : i32 to index
    %c0_242 = arith.constant 0 : index
    %408 = vector.load %arg12[%407, %c0_242] : memref<32x128xf32, #tpu.memory_space<vmem>>, vector<1x128xf32>
    %409 = vector.shape_cast %408 : vector<1x128xf32> to vector<128xf32>
    %c2_243 = arith.constant 2 : index
    %c12_244 = arith.constant 12 : index
    %c0_245 = arith.constant 0 : index
    %410 = vector.load %arg13[%c2_243, %c12_244, %c0_245] : memref<8x16x128xf32, #tpu.memory_space<vmem>>, vector<1x1x128xf32>
    %411 = vector.shape_cast %410 : vector<1x1x128xf32> to vector<128xf32>
    %412 = vector.shape_cast %409 : vector<128xf32> to vector<1x1x128xf32>
    tpu.vector_store %arg13[%c2_243, %c12_244, %c0_245], %412 {strides = array<i32>} : memref<8x16x128xf32, #tpu.memory_space<vmem>>, vector<1x1x128xf32>,
    %c13_i32_246 = arith.constant 13 : i32
    %413 = arith.addi %7, %c13_i32_246 : i32
    %414 = arith.index_cast %413 : i32 to index
    %c2_247 = arith.constant 2 : index
    %415 = memref.load %arg1[%414, %c2_247] : memref<16x8xi32, #tpu.memory_space<smem>>
    %416 = arith.index_cast %415 : i32 to index
    %c0_248 = arith.constant 0 : index
    %417 = vector.load %arg12[%416, %c0_248] : memref<32x128xf32, #tpu.memory_space<vmem>>, vector<1x128xf32>
    %418 = vector.shape_cast %417 : vector<1x128xf32> to vector<128xf32>
    %c2_249 = arith.constant 2 : index
    %c13_250 = arith.constant 13 : index
    %c0_251 = arith.constant 0 : index
    %419 = vector.load %arg13[%c2_249, %c13_250, %c0_251] : memref<8x16x128xf32, #tpu.memory_space<vmem>>, vector<1x1x128xf32>
    %420 = vector.shape_cast %419 : vector<1x1x128xf32> to vector<128xf32>
    %421 = vector.shape_cast %418 : vector<128xf32> to vector<1x1x128xf32>
    tpu.vector_store %arg13[%c2_249, %c13_250, %c0_251], %421 {strides = array<i32>} : memref<8x16x128xf32, #tpu.memory_space<vmem>>, vector<1x1x128xf32>,
    %c14_i32_252 = arith.constant 14 : i32
    %422 = arith.addi %7, %c14_i32_252 : i32
    %423 = arith.index_cast %422 : i32 to index
    %c2_253 = arith.constant 2 : index
    %424 = memref.load %arg1[%423, %c2_253] : memref<16x8xi32, #tpu.memory_space<smem>>
    %425 = arith.index_cast %424 : i32 to index
    %c0_254 = arith.constant 0 : index
    %426 = vector.load %arg12[%425, %c0_254] : memref<32x128xf32, #tpu.memory_space<vmem>>, vector<1x128xf32>
    %427 = vector.shape_cast %426 : vector<1x128xf32> to vector<128xf32>
    %c2_255 = arith.constant 2 : index
    %c14_256 = arith.constant 14 : index
    %c0_257 = arith.constant 0 : index
    %428 = vector.load %arg13[%c2_255, %c14_256, %c0_257] : memref<8x16x128xf32, #tpu.memory_space<vmem>>, vector<1x1x128xf32>
    %429 = vector.shape_cast %428 : vector<1x1x128xf32> to vector<128xf32>
    %430 = vector.shape_cast %427 : vector<128xf32> to vector<1x1x128xf32>
    tpu.vector_store %arg13[%c2_255, %c14_256, %c0_257], %430 {strides = array<i32>} : memref<8x16x128xf32, #tpu.memory_space<vmem>>, vector<1x1x128xf32>,
    %c15_i32_258 = arith.constant 15 : i32
    %431 = arith.addi %7, %c15_i32_258 : i32
    %432 = arith.index_cast %431 : i32 to index
    %c2_259 = arith.constant 2 : index
    %433 = memref.load %arg1[%432, %c2_259] : memref<16x8xi32, #tpu.memory_space<smem>>
    %434 = arith.index_cast %433 : i32 to index
    %c0_260 = arith.constant 0 : index
    %435 = vector.load %arg12[%434, %c0_260] : memref<32x128xf32, #tpu.memory_space<vmem>>, vector<1x128xf32>
    %436 = vector.shape_cast %435 : vector<1x128xf32> to vector<128xf32>
    %c2_261 = arith.constant 2 : index
    %c15_262 = arith.constant 15 : index
    %c0_263 = arith.constant 0 : index
    %437 = vector.load %arg13[%c2_261, %c15_262, %c0_263] : memref<8x16x128xf32, #tpu.memory_space<vmem>>, vector<1x1x128xf32>
    %438 = vector.shape_cast %437 : vector<1x1x128xf32> to vector<128xf32>
    %439 = vector.shape_cast %436 : vector<128xf32> to vector<1x1x128xf32>
    tpu.vector_store %arg13[%c2_261, %c15_262, %c0_263], %439 {strides = array<i32>} : memref<8x16x128xf32, #tpu.memory_space<vmem>>, vector<1x1x128xf32>,
    %c0_i32_264 = arith.constant 0 : i32
    %440 = arith.addi %7, %c0_i32_264 : i32
    %441 = arith.index_cast %440 : i32 to index
    %c3_265 = arith.constant 3 : index
    %442 = memref.load %arg1[%441, %c3_265] : memref<16x8xi32, #tpu.memory_space<smem>>
    %443 = arith.index_cast %442 : i32 to index
    %c0_266 = arith.constant 0 : index
    %444 = vector.load %arg12[%443, %c0_266] : memref<32x128xf32, #tpu.memory_space<vmem>>, vector<1x128xf32>
    %445 = vector.shape_cast %444 : vector<1x128xf32> to vector<128xf32>
    %c3_267 = arith.constant 3 : index
    %c0_268 = arith.constant 0 : index
    %c0_269 = arith.constant 0 : index
    %446 = vector.load %arg13[%c3_267, %c0_268, %c0_269] : memref<8x16x128xf32, #tpu.memory_space<vmem>>, vector<1x1x128xf32>
    %447 = vector.shape_cast %446 : vector<1x1x128xf32> to vector<128xf32>
    %448 = vector.shape_cast %445 : vector<128xf32> to vector<1x1x128xf32>
    tpu.vector_store %arg13[%c3_267, %c0_268, %c0_269], %448 {strides = array<i32>} : memref<8x16x128xf32, #tpu.memory_space<vmem>>, vector<1x1x128xf32>,
    %c1_i32_270 = arith.constant 1 : i32
    %449 = arith.addi %7, %c1_i32_270 : i32
    %450 = arith.index_cast %449 : i32 to index
    %c3_271 = arith.constant 3 : index
    %451 = memref.load %arg1[%450, %c3_271] : memref<16x8xi32, #tpu.memory_space<smem>>
    %452 = arith.index_cast %451 : i32 to index
    %c0_272 = arith.constant 0 : index
    %453 = vector.load %arg12[%452, %c0_272] : memref<32x128xf32, #tpu.memory_space<vmem>>, vector<1x128xf32>
    %454 = vector.shape_cast %453 : vector<1x128xf32> to vector<128xf32>
    %c3_273 = arith.constant 3 : index
    %c1_274 = arith.constant 1 : index
    %c0_275 = arith.constant 0 : index
    %455 = vector.load %arg13[%c3_273, %c1_274, %c0_275] : memref<8x16x128xf32, #tpu.memory_space<vmem>>, vector<1x1x128xf32>
    %456 = vector.shape_cast %455 : vector<1x1x128xf32> to vector<128xf32>
    %457 = vector.shape_cast %454 : vector<128xf32> to vector<1x1x128xf32>
    tpu.vector_store %arg13[%c3_273, %c1_274, %c0_275], %457 {strides = array<i32>} : memref<8x16x128xf32, #tpu.memory_space<vmem>>, vector<1x1x128xf32>,
    %c2_i32_276 = arith.constant 2 : i32
    %458 = arith.addi %7, %c2_i32_276 : i32
    %459 = arith.index_cast %458 : i32 to index
    %c3_277 = arith.constant 3 : index
    %460 = memref.load %arg1[%459, %c3_277] : memref<16x8xi32, #tpu.memory_space<smem>>
    %461 = arith.index_cast %460 : i32 to index
    %c0_278 = arith.constant 0 : index
    %462 = vector.load %arg12[%461, %c0_278] : memref<32x128xf32, #tpu.memory_space<vmem>>, vector<1x128xf32>
    %463 = vector.shape_cast %462 : vector<1x128xf32> to vector<128xf32>
    %c3_279 = arith.constant 3 : index
    %c2_280 = arith.constant 2 : index
    %c0_281 = arith.constant 0 : index
    %464 = vector.load %arg13[%c3_279, %c2_280, %c0_281] : memref<8x16x128xf32, #tpu.memory_space<vmem>>, vector<1x1x128xf32>
    %465 = vector.shape_cast %464 : vector<1x1x128xf32> to vector<128xf32>
    %466 = vector.shape_cast %463 : vector<128xf32> to vector<1x1x128xf32>
    tpu.vector_store %arg13[%c3_279, %c2_280, %c0_281], %466 {strides = array<i32>} : memref<8x16x128xf32, #tpu.memory_space<vmem>>, vector<1x1x128xf32>,
    %c3_i32_282 = arith.constant 3 : i32
    %467 = arith.addi %7, %c3_i32_282 : i32
    %468 = arith.index_cast %467 : i32 to index
    %c3_283 = arith.constant 3 : index
    %469 = memref.load %arg1[%468, %c3_283] : memref<16x8xi32, #tpu.memory_space<smem>>
    %470 = arith.index_cast %469 : i32 to index
    %c0_284 = arith.constant 0 : index
    %471 = vector.load %arg12[%470, %c0_284] : memref<32x128xf32, #tpu.memory_space<vmem>>, vector<1x128xf32>
    %472 = vector.shape_cast %471 : vector<1x128xf32> to vector<128xf32>
    %c3_285 = arith.constant 3 : index
    %c3_286 = arith.constant 3 : index
    %c0_287 = arith.constant 0 : index
    %473 = vector.load %arg13[%c3_285, %c3_286, %c0_287] : memref<8x16x128xf32, #tpu.memory_space<vmem>>, vector<1x1x128xf32>
    %474 = vector.shape_cast %473 : vector<1x1x128xf32> to vector<128xf32>
    %475 = vector.shape_cast %472 : vector<128xf32> to vector<1x1x128xf32>
    tpu.vector_store %arg13[%c3_285, %c3_286, %c0_287], %475 {strides = array<i32>} : memref<8x16x128xf32, #tpu.memory_space<vmem>>, vector<1x1x128xf32>,
    %c4_i32_288 = arith.constant 4 : i32
    %476 = arith.addi %7, %c4_i32_288 : i32
    %477 = arith.index_cast %476 : i32 to index
    %c3_289 = arith.constant 3 : index
    %478 = memref.load %arg1[%477, %c3_289] : memref<16x8xi32, #tpu.memory_space<smem>>
    %479 = arith.index_cast %478 : i32 to index
    %c0_290 = arith.constant 0 : index
    %480 = vector.load %arg12[%479, %c0_290] : memref<32x128xf32, #tpu.memory_space<vmem>>, vector<1x128xf32>
    %481 = vector.shape_cast %480 : vector<1x128xf32> to vector<128xf32>
    %c3_291 = arith.constant 3 : index
    %c4_292 = arith.constant 4 : index
    %c0_293 = arith.constant 0 : index
    %482 = vector.load %arg13[%c3_291, %c4_292, %c0_293] : memref<8x16x128xf32, #tpu.memory_space<vmem>>, vector<1x1x128xf32>
    %483 = vector.shape_cast %482 : vector<1x1x128xf32> to vector<128xf32>
    %484 = vector.shape_cast %481 : vector<128xf32> to vector<1x1x128xf32>
    tpu.vector_store %arg13[%c3_291, %c4_292, %c0_293], %484 {strides = array<i32>} : memref<8x16x128xf32, #tpu.memory_space<vmem>>, vector<1x1x128xf32>,
    %c5_i32_294 = arith.constant 5 : i32
    %485 = arith.addi %7, %c5_i32_294 : i32
    %486 = arith.index_cast %485 : i32 to index
    %c3_295 = arith.constant 3 : index
    %487 = memref.load %arg1[%486, %c3_295] : memref<16x8xi32, #tpu.memory_space<smem>>
    %488 = arith.index_cast %487 : i32 to index
    %c0_296 = arith.constant 0 : index
    %489 = vector.load %arg12[%488, %c0_296] : memref<32x128xf32, #tpu.memory_space<vmem>>, vector<1x128xf32>
    %490 = vector.shape_cast %489 : vector<1x128xf32> to vector<128xf32>
    %c3_297 = arith.constant 3 : index
    %c5_298 = arith.constant 5 : index
    %c0_299 = arith.constant 0 : index
    %491 = vector.load %arg13[%c3_297, %c5_298, %c0_299] : memref<8x16x128xf32, #tpu.memory_space<vmem>>, vector<1x1x128xf32>
    %492 = vector.shape_cast %491 : vector<1x1x128xf32> to vector<128xf32>
    %493 = vector.shape_cast %490 : vector<128xf32> to vector<1x1x128xf32>
    tpu.vector_store %arg13[%c3_297, %c5_298, %c0_299], %493 {strides = array<i32>} : memref<8x16x128xf32, #tpu.memory_space<vmem>>, vector<1x1x128xf32>,
    %c6_i32_300 = arith.constant 6 : i32
    %494 = arith.addi %7, %c6_i32_300 : i32
    %495 = arith.index_cast %494 : i32 to index
    %c3_301 = arith.constant 3 : index
    %496 = memref.load %arg1[%495, %c3_301] : memref<16x8xi32, #tpu.memory_space<smem>>
    %497 = arith.index_cast %496 : i32 to index
    %c0_302 = arith.constant 0 : index
    %498 = vector.load %arg12[%497, %c0_302] : memref<32x128xf32, #tpu.memory_space<vmem>>, vector<1x128xf32>
    %499 = vector.shape_cast %498 : vector<1x128xf32> to vector<128xf32>
    %c3_303 = arith.constant 3 : index
    %c6_304 = arith.constant 6 : index
    %c0_305 = arith.constant 0 : index
    %500 = vector.load %arg13[%c3_303, %c6_304, %c0_305] : memref<8x16x128xf32, #tpu.memory_space<vmem>>, vector<1x1x128xf32>
    %501 = vector.shape_cast %500 : vector<1x1x128xf32> to vector<128xf32>
    %502 = vector.shape_cast %499 : vector<128xf32> to vector<1x1x128xf32>
    tpu.vector_store %arg13[%c3_303, %c6_304, %c0_305], %502 {strides = array<i32>} : memref<8x16x128xf32, #tpu.memory_space<vmem>>, vector<1x1x128xf32>,
    %c7_i32_306 = arith.constant 7 : i32
    %503 = arith.addi %7, %c7_i32_306 : i32
    %504 = arith.index_cast %503 : i32 to index
    %c3_307 = arith.constant 3 : index
    %505 = memref.load %arg1[%504, %c3_307] : memref<16x8xi32, #tpu.memory_space<smem>>
    %506 = arith.index_cast %505 : i32 to index
    %c0_308 = arith.constant 0 : index
    %507 = vector.load %arg12[%506, %c0_308] : memref<32x128xf32, #tpu.memory_space<vmem>>, vector<1x128xf32>
    %508 = vector.shape_cast %507 : vector<1x128xf32> to vector<128xf32>
    %c3_309 = arith.constant 3 : index
    %c7_310 = arith.constant 7 : index
    %c0_311 = arith.constant 0 : index
    %509 = vector.load %arg13[%c3_309, %c7_310, %c0_311] : memref<8x16x128xf32, #tpu.memory_space<vmem>>, vector<1x1x128xf32>
    %510 = vector.shape_cast %509 : vector<1x1x128xf32> to vector<128xf32>
    %511 = vector.shape_cast %508 : vector<128xf32> to vector<1x1x128xf32>
    tpu.vector_store %arg13[%c3_309, %c7_310, %c0_311], %511 {strides = array<i32>} : memref<8x16x128xf32, #tpu.memory_space<vmem>>, vector<1x1x128xf32>,
    %c8_i32_312 = arith.constant 8 : i32
    %512 = arith.addi %7, %c8_i32_312 : i32
    %513 = arith.index_cast %512 : i32 to index
    %c3_313 = arith.constant 3 : index
    %514 = memref.load %arg1[%513, %c3_313] : memref<16x8xi32, #tpu.memory_space<smem>>
    %515 = arith.index_cast %514 : i32 to index
    %c0_314 = arith.constant 0 : index
    %516 = vector.load %arg12[%515, %c0_314] : memref<32x128xf32, #tpu.memory_space<vmem>>, vector<1x128xf32>
    %517 = vector.shape_cast %516 : vector<1x128xf32> to vector<128xf32>
    %c3_315 = arith.constant 3 : index
    %c8_316 = arith.constant 8 : index
    %c0_317 = arith.constant 0 : index
    %518 = vector.load %arg13[%c3_315, %c8_316, %c0_317] : memref<8x16x128xf32, #tpu.memory_space<vmem>>, vector<1x1x128xf32>
    %519 = vector.shape_cast %518 : vector<1x1x128xf32> to vector<128xf32>
    %520 = vector.shape_cast %517 : vector<128xf32> to vector<1x1x128xf32>
    tpu.vector_store %arg13[%c3_315, %c8_316, %c0_317], %520 {strides = array<i32>} : memref<8x16x128xf32, #tpu.memory_space<vmem>>, vector<1x1x128xf32>,
    %c9_i32_318 = arith.constant 9 : i32
    %521 = arith.addi %7, %c9_i32_318 : i32
    %522 = arith.index_cast %521 : i32 to index
    %c3_319 = arith.constant 3 : index
    %523 = memref.load %arg1[%522, %c3_319] : memref<16x8xi32, #tpu.memory_space<smem>>
    %524 = arith.index_cast %523 : i32 to index
    %c0_320 = arith.constant 0 : index
    %525 = vector.load %arg12[%524, %c0_320] : memref<32x128xf32, #tpu.memory_space<vmem>>, vector<1x128xf32>
    %526 = vector.shape_cast %525 : vector<1x128xf32> to vector<128xf32>
    %c3_321 = arith.constant 3 : index
    %c9_322 = arith.constant 9 : index
    %c0_323 = arith.constant 0 : index
    %527 = vector.load %arg13[%c3_321, %c9_322, %c0_323] : memref<8x16x128xf32, #tpu.memory_space<vmem>>, vector<1x1x128xf32>
    %528 = vector.shape_cast %527 : vector<1x1x128xf32> to vector<128xf32>
    %529 = vector.shape_cast %526 : vector<128xf32> to vector<1x1x128xf32>
    tpu.vector_store %arg13[%c3_321, %c9_322, %c0_323], %529 {strides = array<i32>} : memref<8x16x128xf32, #tpu.memory_space<vmem>>, vector<1x1x128xf32>,
    %c10_i32_324 = arith.constant 10 : i32
    %530 = arith.addi %7, %c10_i32_324 : i32
    %531 = arith.index_cast %530 : i32 to index
    %c3_325 = arith.constant 3 : index
    %532 = memref.load %arg1[%531, %c3_325] : memref<16x8xi32, #tpu.memory_space<smem>>
    %533 = arith.index_cast %532 : i32 to index
    %c0_326 = arith.constant 0 : index
    %534 = vector.load %arg12[%533, %c0_326] : memref<32x128xf32, #tpu.memory_space<vmem>>, vector<1x128xf32>
    %535 = vector.shape_cast %534 : vector<1x128xf32> to vector<128xf32>
    %c3_327 = arith.constant 3 : index
    %c10_328 = arith.constant 10 : index
    %c0_329 = arith.constant 0 : index
    %536 = vector.load %arg13[%c3_327, %c10_328, %c0_329] : memref<8x16x128xf32, #tpu.memory_space<vmem>>, vector<1x1x128xf32>
    %537 = vector.shape_cast %536 : vector<1x1x128xf32> to vector<128xf32>
    %538 = vector.shape_cast %535 : vector<128xf32> to vector<1x1x128xf32>
    tpu.vector_store %arg13[%c3_327, %c10_328, %c0_329], %538 {strides = array<i32>} : memref<8x16x128xf32, #tpu.memory_space<vmem>>, vector<1x1x128xf32>,
    %c11_i32_330 = arith.constant 11 : i32
    %539 = arith.addi %7, %c11_i32_330 : i32
    %540 = arith.index_cast %539 : i32 to index
    %c3_331 = arith.constant 3 : index
    %541 = memref.load %arg1[%540, %c3_331] : memref<16x8xi32, #tpu.memory_space<smem>>
    %542 = arith.index_cast %541 : i32 to index
    %c0_332 = arith.constant 0 : index
    %543 = vector.load %arg12[%542, %c0_332] : memref<32x128xf32, #tpu.memory_space<vmem>>, vector<1x128xf32>
    %544 = vector.shape_cast %543 : vector<1x128xf32> to vector<128xf32>
    %c3_333 = arith.constant 3 : index
    %c11_334 = arith.constant 11 : index
    %c0_335 = arith.constant 0 : index
    %545 = vector.load %arg13[%c3_333, %c11_334, %c0_335] : memref<8x16x128xf32, #tpu.memory_space<vmem>>, vector<1x1x128xf32>
    %546 = vector.shape_cast %545 : vector<1x1x128xf32> to vector<128xf32>
    %547 = vector.shape_cast %544 : vector<128xf32> to vector<1x1x128xf32>
    tpu.vector_store %arg13[%c3_333, %c11_334, %c0_335], %547 {strides = array<i32>} : memref<8x16x128xf32, #tpu.memory_space<vmem>>, vector<1x1x128xf32>,
    %c12_i32_336 = arith.constant 12 : i32
    %548 = arith.addi %7, %c12_i32_336 : i32
    %549 = arith.index_cast %548 : i32 to index
    %c3_337 = arith.constant 3 : index
    %550 = memref.load %arg1[%549, %c3_337] : memref<16x8xi32, #tpu.memory_space<smem>>
    %551 = arith.index_cast %550 : i32 to index
    %c0_338 = arith.constant 0 : index
    %552 = vector.load %arg12[%551, %c0_338] : memref<32x128xf32, #tpu.memory_space<vmem>>, vector<1x128xf32>
    %553 = vector.shape_cast %552 : vector<1x128xf32> to vector<128xf32>
    %c3_339 = arith.constant 3 : index
    %c12_340 = arith.constant 12 : index
    %c0_341 = arith.constant 0 : index
    %554 = vector.load %arg13[%c3_339, %c12_340, %c0_341] : memref<8x16x128xf32, #tpu.memory_space<vmem>>, vector<1x1x128xf32>
    %555 = vector.shape_cast %554 : vector<1x1x128xf32> to vector<128xf32>
    %556 = vector.shape_cast %553 : vector<128xf32> to vector<1x1x128xf32>
    tpu.vector_store %arg13[%c3_339, %c12_340, %c0_341], %556 {strides = array<i32>} : memref<8x16x128xf32, #tpu.memory_space<vmem>>, vector<1x1x128xf32>,
    %c13_i32_342 = arith.constant 13 : i32
    %557 = arith.addi %7, %c13_i32_342 : i32
    %558 = arith.index_cast %557 : i32 to index
    %c3_343 = arith.constant 3 : index
    %559 = memref.load %arg1[%558, %c3_343] : memref<16x8xi32, #tpu.memory_space<smem>>
    %560 = arith.index_cast %559 : i32 to index
    %c0_344 = arith.constant 0 : index
    %561 = vector.load %arg12[%560, %c0_344] : memref<32x128xf32, #tpu.memory_space<vmem>>, vector<1x128xf32>
    %562 = vector.shape_cast %561 : vector<1x128xf32> to vector<128xf32>
    %c3_345 = arith.constant 3 : index
    %c13_346 = arith.constant 13 : index
    %c0_347 = arith.constant 0 : index
    %563 = vector.load %arg13[%c3_345, %c13_346, %c0_347] : memref<8x16x128xf32, #tpu.memory_space<vmem>>, vector<1x1x128xf32>
    %564 = vector.shape_cast %563 : vector<1x1x128xf32> to vector<128xf32>
    %565 = vector.shape_cast %562 : vector<128xf32> to vector<1x1x128xf32>
    tpu.vector_store %arg13[%c3_345, %c13_346, %c0_347], %565 {strides = array<i32>} : memref<8x16x128xf32, #tpu.memory_space<vmem>>, vector<1x1x128xf32>,
    %c14_i32_348 = arith.constant 14 : i32
    %566 = arith.addi %7, %c14_i32_348 : i32
    %567 = arith.index_cast %566 : i32 to index
    %c3_349 = arith.constant 3 : index
    %568 = memref.load %arg1[%567, %c3_349] : memref<16x8xi32, #tpu.memory_space<smem>>
    %569 = arith.index_cast %568 : i32 to index
    %c0_350 = arith.constant 0 : index
    %570 = vector.load %arg12[%569, %c0_350] : memref<32x128xf32, #tpu.memory_space<vmem>>, vector<1x128xf32>
    %571 = vector.shape_cast %570 : vector<1x128xf32> to vector<128xf32>
    %c3_351 = arith.constant 3 : index
    %c14_352 = arith.constant 14 : index
    %c0_353 = arith.constant 0 : index
    %572 = vector.load %arg13[%c3_351, %c14_352, %c0_353] : memref<8x16x128xf32, #tpu.memory_space<vmem>>, vector<1x1x128xf32>
    %573 = vector.shape_cast %572 : vector<1x1x128xf32> to vector<128xf32>
    %574 = vector.shape_cast %571 : vector<128xf32> to vector<1x1x128xf32>
    tpu.vector_store %arg13[%c3_351, %c14_352, %c0_353], %574 {strides = array<i32>} : memref<8x16x128xf32, #tpu.memory_space<vmem>>, vector<1x1x128xf32>,
    %c15_i32_354 = arith.constant 15 : i32
    %575 = arith.addi %7, %c15_i32_354 : i32
    %576 = arith.index_cast %575 : i32 to index
    %c3_355 = arith.constant 3 : index
    %577 = memref.load %arg1[%576, %c3_355] : memref<16x8xi32, #tpu.memory_space<smem>>
    %578 = arith.index_cast %577 : i32 to index
    %c0_356 = arith.constant 0 : index
    %579 = vector.load %arg12[%578, %c0_356] : memref<32x128xf32, #tpu.memory_space<vmem>>, vector<1x128xf32>
    %580 = vector.shape_cast %579 : vector<1x128xf32> to vector<128xf32>
    %c3_357 = arith.constant 3 : index
    %c15_358 = arith.constant 15 : index
    %c0_359 = arith.constant 0 : index
    %581 = vector.load %arg13[%c3_357, %c15_358, %c0_359] : memref<8x16x128xf32, #tpu.memory_space<vmem>>, vector<1x1x128xf32>
    %582 = vector.shape_cast %581 : vector<1x1x128xf32> to vector<128xf32>
    %583 = vector.shape_cast %580 : vector<128xf32> to vector<1x1x128xf32>
    tpu.vector_store %arg13[%c3_357, %c15_358, %c0_359], %583 {strides = array<i32>} : memref<8x16x128xf32, #tpu.memory_space<vmem>>, vector<1x1x128xf32>,
    %c0_i32_360 = arith.constant 0 : i32
    %584 = arith.addi %7, %c0_i32_360 : i32
    %585 = arith.index_cast %584 : i32 to index
    %c4_361 = arith.constant 4 : index
    %586 = memref.load %arg1[%585, %c4_361] : memref<16x8xi32, #tpu.memory_space<smem>>
    %587 = arith.index_cast %586 : i32 to index
    %c0_362 = arith.constant 0 : index
    %588 = vector.load %arg12[%587, %c0_362] : memref<32x128xf32, #tpu.memory_space<vmem>>, vector<1x128xf32>
    %589 = vector.shape_cast %588 : vector<1x128xf32> to vector<128xf32>
    %c4_363 = arith.constant 4 : index
    %c0_364 = arith.constant 0 : index
    %c0_365 = arith.constant 0 : index
    %590 = vector.load %arg13[%c4_363, %c0_364, %c0_365] : memref<8x16x128xf32, #tpu.memory_space<vmem>>, vector<1x1x128xf32>
    %591 = vector.shape_cast %590 : vector<1x1x128xf32> to vector<128xf32>
    %592 = vector.shape_cast %589 : vector<128xf32> to vector<1x1x128xf32>
    tpu.vector_store %arg13[%c4_363, %c0_364, %c0_365], %592 {strides = array<i32>} : memref<8x16x128xf32, #tpu.memory_space<vmem>>, vector<1x1x128xf32>,
    %c1_i32_366 = arith.constant 1 : i32
    %593 = arith.addi %7, %c1_i32_366 : i32
    %594 = arith.index_cast %593 : i32 to index
    %c4_367 = arith.constant 4 : index
    %595 = memref.load %arg1[%594, %c4_367] : memref<16x8xi32, #tpu.memory_space<smem>>
    %596 = arith.index_cast %595 : i32 to index
    %c0_368 = arith.constant 0 : index
    %597 = vector.load %arg12[%596, %c0_368] : memref<32x128xf32, #tpu.memory_space<vmem>>, vector<1x128xf32>
    %598 = vector.shape_cast %597 : vector<1x128xf32> to vector<128xf32>
    %c4_369 = arith.constant 4 : index
    %c1_370 = arith.constant 1 : index
    %c0_371 = arith.constant 0 : index
    %599 = vector.load %arg13[%c4_369, %c1_370, %c0_371] : memref<8x16x128xf32, #tpu.memory_space<vmem>>, vector<1x1x128xf32>
    %600 = vector.shape_cast %599 : vector<1x1x128xf32> to vector<128xf32>
    %601 = vector.shape_cast %598 : vector<128xf32> to vector<1x1x128xf32>
    tpu.vector_store %arg13[%c4_369, %c1_370, %c0_371], %601 {strides = array<i32>} : memref<8x16x128xf32, #tpu.memory_space<vmem>>, vector<1x1x128xf32>,
    %c2_i32_372 = arith.constant 2 : i32
    %602 = arith.addi %7, %c2_i32_372 : i32
    %603 = arith.index_cast %602 : i32 to index
    %c4_373 = arith.constant 4 : index
    %604 = memref.load %arg1[%603, %c4_373] : memref<16x8xi32, #tpu.memory_space<smem>>
    %605 = arith.index_cast %604 : i32 to index
    %c0_374 = arith.constant 0 : index
    %606 = vector.load %arg12[%605, %c0_374] : memref<32x128xf32, #tpu.memory_space<vmem>>, vector<1x128xf32>
    %607 = vector.shape_cast %606 : vector<1x128xf32> to vector<128xf32>
    %c4_375 = arith.constant 4 : index
    %c2_376 = arith.constant 2 : index
    %c0_377 = arith.constant 0 : index
    %608 = vector.load %arg13[%c4_375, %c2_376, %c0_377] : memref<8x16x128xf32, #tpu.memory_space<vmem>>, vector<1x1x128xf32>
    %609 = vector.shape_cast %608 : vector<1x1x128xf32> to vector<128xf32>
    %610 = vector.shape_cast %607 : vector<128xf32> to vector<1x1x128xf32>
    tpu.vector_store %arg13[%c4_375, %c2_376, %c0_377], %610 {strides = array<i32>} : memref<8x16x128xf32, #tpu.memory_space<vmem>>, vector<1x1x128xf32>,
    %c3_i32_378 = arith.constant 3 : i32
    %611 = arith.addi %7, %c3_i32_378 : i32
    %612 = arith.index_cast %611 : i32 to index
    %c4_379 = arith.constant 4 : index
    %613 = memref.load %arg1[%612, %c4_379] : memref<16x8xi32, #tpu.memory_space<smem>>
    %614 = arith.index_cast %613 : i32 to index
    %c0_380 = arith.constant 0 : index
    %615 = vector.load %arg12[%614, %c0_380] : memref<32x128xf32, #tpu.memory_space<vmem>>, vector<1x128xf32>
    %616 = vector.shape_cast %615 : vector<1x128xf32> to vector<128xf32>
    %c4_381 = arith.constant 4 : index
    %c3_382 = arith.constant 3 : index
    %c0_383 = arith.constant 0 : index
    %617 = vector.load %arg13[%c4_381, %c3_382, %c0_383] : memref<8x16x128xf32, #tpu.memory_space<vmem>>, vector<1x1x128xf32>
    %618 = vector.shape_cast %617 : vector<1x1x128xf32> to vector<128xf32>
    %619 = vector.shape_cast %616 : vector<128xf32> to vector<1x1x128xf32>
    tpu.vector_store %arg13[%c4_381, %c3_382, %c0_383], %619 {strides = array<i32>} : memref<8x16x128xf32, #tpu.memory_space<vmem>>, vector<1x1x128xf32>,
    %c4_i32_384 = arith.constant 4 : i32
    %620 = arith.addi %7, %c4_i32_384 : i32
    %621 = arith.index_cast %620 : i32 to index
    %c4_385 = arith.constant 4 : index
    %622 = memref.load %arg1[%621, %c4_385] : memref<16x8xi32, #tpu.memory_space<smem>>
    %623 = arith.index_cast %622 : i32 to index
    %c0_386 = arith.constant 0 : index
    %624 = vector.load %arg12[%623, %c0_386] : memref<32x128xf32, #tpu.memory_space<vmem>>, vector<1x128xf32>
    %625 = vector.shape_cast %624 : vector<1x128xf32> to vector<128xf32>
    %c4_387 = arith.constant 4 : index
    %c4_388 = arith.constant 4 : index
    %c0_389 = arith.constant 0 : index
    %626 = vector.load %arg13[%c4_387, %c4_388, %c0_389] : memref<8x16x128xf32, #tpu.memory_space<vmem>>, vector<1x1x128xf32>
    %627 = vector.shape_cast %626 : vector<1x1x128xf32> to vector<128xf32>
    %628 = vector.shape_cast %625 : vector<128xf32> to vector<1x1x128xf32>
    tpu.vector_store %arg13[%c4_387, %c4_388, %c0_389], %628 {strides = array<i32>} : memref<8x16x128xf32, #tpu.memory_space<vmem>>, vector<1x1x128xf32>,
    %c5_i32_390 = arith.constant 5 : i32
    %629 = arith.addi %7, %c5_i32_390 : i32
    %630 = arith.index_cast %629 : i32 to index
    %c4_391 = arith.constant 4 : index
    %631 = memref.load %arg1[%630, %c4_391] : memref<16x8xi32, #tpu.memory_space<smem>>
    %632 = arith.index_cast %631 : i32 to index
    %c0_392 = arith.constant 0 : index
    %633 = vector.load %arg12[%632, %c0_392] : memref<32x128xf32, #tpu.memory_space<vmem>>, vector<1x128xf32>
    %634 = vector.shape_cast %633 : vector<1x128xf32> to vector<128xf32>
    %c4_393 = arith.constant 4 : index
    %c5_394 = arith.constant 5 : index
    %c0_395 = arith.constant 0 : index
    %635 = vector.load %arg13[%c4_393, %c5_394, %c0_395] : memref<8x16x128xf32, #tpu.memory_space<vmem>>, vector<1x1x128xf32>
    %636 = vector.shape_cast %635 : vector<1x1x128xf32> to vector<128xf32>
    %637 = vector.shape_cast %634 : vector<128xf32> to vector<1x1x128xf32>
    tpu.vector_store %arg13[%c4_393, %c5_394, %c0_395], %637 {strides = array<i32>} : memref<8x16x128xf32, #tpu.memory_space<vmem>>, vector<1x1x128xf32>,
    %c6_i32_396 = arith.constant 6 : i32
    %638 = arith.addi %7, %c6_i32_396 : i32
    %639 = arith.index_cast %638 : i32 to index
    %c4_397 = arith.constant 4 : index
    %640 = memref.load %arg1[%639, %c4_397] : memref<16x8xi32, #tpu.memory_space<smem>>
    %641 = arith.index_cast %640 : i32 to index
    %c0_398 = arith.constant 0 : index
    %642 = vector.load %arg12[%641, %c0_398] : memref<32x128xf32, #tpu.memory_space<vmem>>, vector<1x128xf32>
    %643 = vector.shape_cast %642 : vector<1x128xf32> to vector<128xf32>
    %c4_399 = arith.constant 4 : index
    %c6_400 = arith.constant 6 : index
    %c0_401 = arith.constant 0 : index
    %644 = vector.load %arg13[%c4_399, %c6_400, %c0_401] : memref<8x16x128xf32, #tpu.memory_space<vmem>>, vector<1x1x128xf32>
    %645 = vector.shape_cast %644 : vector<1x1x128xf32> to vector<128xf32>
    %646 = vector.shape_cast %643 : vector<128xf32> to vector<1x1x128xf32>
    tpu.vector_store %arg13[%c4_399, %c6_400, %c0_401], %646 {strides = array<i32>} : memref<8x16x128xf32, #tpu.memory_space<vmem>>, vector<1x1x128xf32>,
    %c7_i32_402 = arith.constant 7 : i32
    %647 = arith.addi %7, %c7_i32_402 : i32
    %648 = arith.index_cast %647 : i32 to index
    %c4_403 = arith.constant 4 : index
    %649 = memref.load %arg1[%648, %c4_403] : memref<16x8xi32, #tpu.memory_space<smem>>
    %650 = arith.index_cast %649 : i32 to index
    %c0_404 = arith.constant 0 : index
    %651 = vector.load %arg12[%650, %c0_404] : memref<32x128xf32, #tpu.memory_space<vmem>>, vector<1x128xf32>
    %652 = vector.shape_cast %651 : vector<1x128xf32> to vector<128xf32>
    %c4_405 = arith.constant 4 : index
    %c7_406 = arith.constant 7 : index
    %c0_407 = arith.constant 0 : index
    %653 = vector.load %arg13[%c4_405, %c7_406, %c0_407] : memref<8x16x128xf32, #tpu.memory_space<vmem>>, vector<1x1x128xf32>
    %654 = vector.shape_cast %653 : vector<1x1x128xf32> to vector<128xf32>
    %655 = vector.shape_cast %652 : vector<128xf32> to vector<1x1x128xf32>
    tpu.vector_store %arg13[%c4_405, %c7_406, %c0_407], %655 {strides = array<i32>} : memref<8x16x128xf32, #tpu.memory_space<vmem>>, vector<1x1x128xf32>,
    %c8_i32_408 = arith.constant 8 : i32
    %656 = arith.addi %7, %c8_i32_408 : i32
    %657 = arith.index_cast %656 : i32 to index
    %c4_409 = arith.constant 4 : index
    %658 = memref.load %arg1[%657, %c4_409] : memref<16x8xi32, #tpu.memory_space<smem>>
    %659 = arith.index_cast %658 : i32 to index
    %c0_410 = arith.constant 0 : index
    %660 = vector.load %arg12[%659, %c0_410] : memref<32x128xf32, #tpu.memory_space<vmem>>, vector<1x128xf32>
    %661 = vector.shape_cast %660 : vector<1x128xf32> to vector<128xf32>
    %c4_411 = arith.constant 4 : index
    %c8_412 = arith.constant 8 : index
    %c0_413 = arith.constant 0 : index
    %662 = vector.load %arg13[%c4_411, %c8_412, %c0_413] : memref<8x16x128xf32, #tpu.memory_space<vmem>>, vector<1x1x128xf32>
    %663 = vector.shape_cast %662 : vector<1x1x128xf32> to vector<128xf32>
    %664 = vector.shape_cast %661 : vector<128xf32> to vector<1x1x128xf32>
    tpu.vector_store %arg13[%c4_411, %c8_412, %c0_413], %664 {strides = array<i32>} : memref<8x16x128xf32, #tpu.memory_space<vmem>>, vector<1x1x128xf32>,
    %c9_i32_414 = arith.constant 9 : i32
    %665 = arith.addi %7, %c9_i32_414 : i32
    %666 = arith.index_cast %665 : i32 to index
    %c4_415 = arith.constant 4 : index
    %667 = memref.load %arg1[%666, %c4_415] : memref<16x8xi32, #tpu.memory_space<smem>>
    %668 = arith.index_cast %667 : i32 to index
    %c0_416 = arith.constant 0 : index
    %669 = vector.load %arg12[%668, %c0_416] : memref<32x128xf32, #tpu.memory_space<vmem>>, vector<1x128xf32>
    %670 = vector.shape_cast %669 : vector<1x128xf32> to vector<128xf32>
    %c4_417 = arith.constant 4 : index
    %c9_418 = arith.constant 9 : index
    %c0_419 = arith.constant 0 : index
    %671 = vector.load %arg13[%c4_417, %c9_418, %c0_419] : memref<8x16x128xf32, #tpu.memory_space<vmem>>, vector<1x1x128xf32>
    %672 = vector.shape_cast %671 : vector<1x1x128xf32> to vector<128xf32>
    %673 = vector.shape_cast %670 : vector<128xf32> to vector<1x1x128xf32>
    tpu.vector_store %arg13[%c4_417, %c9_418, %c0_419], %673 {strides = array<i32>} : memref<8x16x128xf32, #tpu.memory_space<vmem>>, vector<1x1x128xf32>,
    %c10_i32_420 = arith.constant 10 : i32
    %674 = arith.addi %7, %c10_i32_420 : i32
    %675 = arith.index_cast %674 : i32 to index
    %c4_421 = arith.constant 4 : index
    %676 = memref.load %arg1[%675, %c4_421] : memref<16x8xi32, #tpu.memory_space<smem>>
    %677 = arith.index_cast %676 : i32 to index
    %c0_422 = arith.constant 0 : index
    %678 = vector.load %arg12[%677, %c0_422] : memref<32x128xf32, #tpu.memory_space<vmem>>, vector<1x128xf32>
    %679 = vector.shape_cast %678 : vector<1x128xf32> to vector<128xf32>
    %c4_423 = arith.constant 4 : index
    %c10_424 = arith.constant 10 : index
    %c0_425 = arith.constant 0 : index
    %680 = vector.load %arg13[%c4_423, %c10_424, %c0_425] : memref<8x16x128xf32, #tpu.memory_space<vmem>>, vector<1x1x128xf32>
    %681 = vector.shape_cast %680 : vector<1x1x128xf32> to vector<128xf32>
    %682 = vector.shape_cast %679 : vector<128xf32> to vector<1x1x128xf32>
    tpu.vector_store %arg13[%c4_423, %c10_424, %c0_425], %682 {strides = array<i32>} : memref<8x16x128xf32, #tpu.memory_space<vmem>>, vector<1x1x128xf32>,
    %c11_i32_426 = arith.constant 11 : i32
    %683 = arith.addi %7, %c11_i32_426 : i32
    %684 = arith.index_cast %683 : i32 to index
    %c4_427 = arith.constant 4 : index
    %685 = memref.load %arg1[%684, %c4_427] : memref<16x8xi32, #tpu.memory_space<smem>>
    %686 = arith.index_cast %685 : i32 to index
    %c0_428 = arith.constant 0 : index
    %687 = vector.load %arg12[%686, %c0_428] : memref<32x128xf32, #tpu.memory_space<vmem>>, vector<1x128xf32>
    %688 = vector.shape_cast %687 : vector<1x128xf32> to vector<128xf32>
    %c4_429 = arith.constant 4 : index
    %c11_430 = arith.constant 11 : index
    %c0_431 = arith.constant 0 : index
    %689 = vector.load %arg13[%c4_429, %c11_430, %c0_431] : memref<8x16x128xf32, #tpu.memory_space<vmem>>, vector<1x1x128xf32>
    %690 = vector.shape_cast %689 : vector<1x1x128xf32> to vector<128xf32>
    %691 = vector.shape_cast %688 : vector<128xf32> to vector<1x1x128xf32>
    tpu.vector_store %arg13[%c4_429, %c11_430, %c0_431], %691 {strides = array<i32>} : memref<8x16x128xf32, #tpu.memory_space<vmem>>, vector<1x1x128xf32>,
    %c12_i32_432 = arith.constant 12 : i32
    %692 = arith.addi %7, %c12_i32_432 : i32
    %693 = arith.index_cast %692 : i32 to index
    %c4_433 = arith.constant 4 : index
    %694 = memref.load %arg1[%693, %c4_433] : memref<16x8xi32, #tpu.memory_space<smem>>
    %695 = arith.index_cast %694 : i32 to index
    %c0_434 = arith.constant 0 : index
    %696 = vector.load %arg12[%695, %c0_434] : memref<32x128xf32, #tpu.memory_space<vmem>>, vector<1x128xf32>
    %697 = vector.shape_cast %696 : vector<1x128xf32> to vector<128xf32>
    %c4_435 = arith.constant 4 : index
    %c12_436 = arith.constant 12 : index
    %c0_437 = arith.constant 0 : index
    %698 = vector.load %arg13[%c4_435, %c12_436, %c0_437] : memref<8x16x128xf32, #tpu.memory_space<vmem>>, vector<1x1x128xf32>
    %699 = vector.shape_cast %698 : vector<1x1x128xf32> to vector<128xf32>
    %700 = vector.shape_cast %697 : vector<128xf32> to vector<1x1x128xf32>
    tpu.vector_store %arg13[%c4_435, %c12_436, %c0_437], %700 {strides = array<i32>} : memref<8x16x128xf32, #tpu.memory_space<vmem>>, vector<1x1x128xf32>,
    %c13_i32_438 = arith.constant 13 : i32
    %701 = arith.addi %7, %c13_i32_438 : i32
    %702 = arith.index_cast %701 : i32 to index
    %c4_439 = arith.constant 4 : index
    %703 = memref.load %arg1[%702, %c4_439] : memref<16x8xi32, #tpu.memory_space<smem>>
    %704 = arith.index_cast %703 : i32 to index
    %c0_440 = arith.constant 0 : index
    %705 = vector.load %arg12[%704, %c0_440] : memref<32x128xf32, #tpu.memory_space<vmem>>, vector<1x128xf32>
    %706 = vector.shape_cast %705 : vector<1x128xf32> to vector<128xf32>
    %c4_441 = arith.constant 4 : index
    %c13_442 = arith.constant 13 : index
    %c0_443 = arith.constant 0 : index
    %707 = vector.load %arg13[%c4_441, %c13_442, %c0_443] : memref<8x16x128xf32, #tpu.memory_space<vmem>>, vector<1x1x128xf32>
    %708 = vector.shape_cast %707 : vector<1x1x128xf32> to vector<128xf32>
    %709 = vector.shape_cast %706 : vector<128xf32> to vector<1x1x128xf32>
    tpu.vector_store %arg13[%c4_441, %c13_442, %c0_443], %709 {strides = array<i32>} : memref<8x16x128xf32, #tpu.memory_space<vmem>>, vector<1x1x128xf32>,
    %c14_i32_444 = arith.constant 14 : i32
    %710 = arith.addi %7, %c14_i32_444 : i32
    %711 = arith.index_cast %710 : i32 to index
    %c4_445 = arith.constant 4 : index
    %712 = memref.load %arg1[%711, %c4_445] : memref<16x8xi32, #tpu.memory_space<smem>>
    %713 = arith.index_cast %712 : i32 to index
    %c0_446 = arith.constant 0 : index
    %714 = vector.load %arg12[%713, %c0_446] : memref<32x128xf32, #tpu.memory_space<vmem>>, vector<1x128xf32>
    %715 = vector.shape_cast %714 : vector<1x128xf32> to vector<128xf32>
    %c4_447 = arith.constant 4 : index
    %c14_448 = arith.constant 14 : index
    %c0_449 = arith.constant 0 : index
    %716 = vector.load %arg13[%c4_447, %c14_448, %c0_449] : memref<8x16x128xf32, #tpu.memory_space<vmem>>, vector<1x1x128xf32>
    %717 = vector.shape_cast %716 : vector<1x1x128xf32> to vector<128xf32>
    %718 = vector.shape_cast %715 : vector<128xf32> to vector<1x1x128xf32>
    tpu.vector_store %arg13[%c4_447, %c14_448, %c0_449], %718 {strides = array<i32>} : memref<8x16x128xf32, #tpu.memory_space<vmem>>, vector<1x1x128xf32>,
    %c15_i32_450 = arith.constant 15 : i32
    %719 = arith.addi %7, %c15_i32_450 : i32
    %720 = arith.index_cast %719 : i32 to index
    %c4_451 = arith.constant 4 : index
    %721 = memref.load %arg1[%720, %c4_451] : memref<16x8xi32, #tpu.memory_space<smem>>
    %722 = arith.index_cast %721 : i32 to index
    %c0_452 = arith.constant 0 : index
    %723 = vector.load %arg12[%722, %c0_452] : memref<32x128xf32, #tpu.memory_space<vmem>>, vector<1x128xf32>
    %724 = vector.shape_cast %723 : vector<1x128xf32> to vector<128xf32>
    %c4_453 = arith.constant 4 : index
    %c15_454 = arith.constant 15 : index
    %c0_455 = arith.constant 0 : index
    %725 = vector.load %arg13[%c4_453, %c15_454, %c0_455] : memref<8x16x128xf32, #tpu.memory_space<vmem>>, vector<1x1x128xf32>
    %726 = vector.shape_cast %725 : vector<1x1x128xf32> to vector<128xf32>
    %727 = vector.shape_cast %724 : vector<128xf32> to vector<1x1x128xf32>
    tpu.vector_store %arg13[%c4_453, %c15_454, %c0_455], %727 {strides = array<i32>} : memref<8x16x128xf32, #tpu.memory_space<vmem>>, vector<1x1x128xf32>,
    %c0_i32_456 = arith.constant 0 : i32
    %728 = arith.addi %7, %c0_i32_456 : i32
    %729 = arith.index_cast %728 : i32 to index
    %c5_457 = arith.constant 5 : index
    %730 = memref.load %arg1[%729, %c5_457] : memref<16x8xi32, #tpu.memory_space<smem>>
    %731 = arith.index_cast %730 : i32 to index
    %c0_458 = arith.constant 0 : index
    %732 = vector.load %arg12[%731, %c0_458] : memref<32x128xf32, #tpu.memory_space<vmem>>, vector<1x128xf32>
    %733 = vector.shape_cast %732 : vector<1x128xf32> to vector<128xf32>
    %c5_459 = arith.constant 5 : index
    %c0_460 = arith.constant 0 : index
    %c0_461 = arith.constant 0 : index
    %734 = vector.load %arg13[%c5_459, %c0_460, %c0_461] : memref<8x16x128xf32, #tpu.memory_space<vmem>>, vector<1x1x128xf32>
    %735 = vector.shape_cast %734 : vector<1x1x128xf32> to vector<128xf32>
    %736 = vector.shape_cast %733 : vector<128xf32> to vector<1x1x128xf32>
    tpu.vector_store %arg13[%c5_459, %c0_460, %c0_461], %736 {strides = array<i32>} : memref<8x16x128xf32, #tpu.memory_space<vmem>>, vector<1x1x128xf32>,
    %c1_i32_462 = arith.constant 1 : i32
    %737 = arith.addi %7, %c1_i32_462 : i32
    %738 = arith.index_cast %737 : i32 to index
    %c5_463 = arith.constant 5 : index
    %739 = memref.load %arg1[%738, %c5_463] : memref<16x8xi32, #tpu.memory_space<smem>>
    %740 = arith.index_cast %739 : i32 to index
    %c0_464 = arith.constant 0 : index
    %741 = vector.load %arg12[%740, %c0_464] : memref<32x128xf32, #tpu.memory_space<vmem>>, vector<1x128xf32>
    %742 = vector.shape_cast %741 : vector<1x128xf32> to vector<128xf32>
    %c5_465 = arith.constant 5 : index
    %c1_466 = arith.constant 1 : index
    %c0_467 = arith.constant 0 : index
    %743 = vector.load %arg13[%c5_465, %c1_466, %c0_467] : memref<8x16x128xf32, #tpu.memory_space<vmem>>, vector<1x1x128xf32>
    %744 = vector.shape_cast %743 : vector<1x1x128xf32> to vector<128xf32>
    %745 = vector.shape_cast %742 : vector<128xf32> to vector<1x1x128xf32>
    tpu.vector_store %arg13[%c5_465, %c1_466, %c0_467], %745 {strides = array<i32>} : memref<8x16x128xf32, #tpu.memory_space<vmem>>, vector<1x1x128xf32>,
    %c2_i32_468 = arith.constant 2 : i32
    %746 = arith.addi %7, %c2_i32_468 : i32
    %747 = arith.index_cast %746 : i32 to index
    %c5_469 = arith.constant 5 : index
    %748 = memref.load %arg1[%747, %c5_469] : memref<16x8xi32, #tpu.memory_space<smem>>
    %749 = arith.index_cast %748 : i32 to index
    %c0_470 = arith.constant 0 : index
    %750 = vector.load %arg12[%749, %c0_470] : memref<32x128xf32, #tpu.memory_space<vmem>>, vector<1x128xf32>
    %751 = vector.shape_cast %750 : vector<1x128xf32> to vector<128xf32>
    %c5_471 = arith.constant 5 : index
    %c2_472 = arith.constant 2 : index
    %c0_473 = arith.constant 0 : index
    %752 = vector.load %arg13[%c5_471, %c2_472, %c0_473] : memref<8x16x128xf32, #tpu.memory_space<vmem>>, vector<1x1x128xf32>
    %753 = vector.shape_cast %752 : vector<1x1x128xf32> to vector<128xf32>
    %754 = vector.shape_cast %751 : vector<128xf32> to vector<1x1x128xf32>
    tpu.vector_store %arg13[%c5_471, %c2_472, %c0_473], %754 {strides = array<i32>} : memref<8x16x128xf32, #tpu.memory_space<vmem>>, vector<1x1x128xf32>,
    %c3_i32_474 = arith.constant 3 : i32
    %755 = arith.addi %7, %c3_i32_474 : i32
    %756 = arith.index_cast %755 : i32 to index
    %c5_475 = arith.constant 5 : index
    %757 = memref.load %arg1[%756, %c5_475] : memref<16x8xi32, #tpu.memory_space<smem>>
    %758 = arith.index_cast %757 : i32 to index
    %c0_476 = arith.constant 0 : index
    %759 = vector.load %arg12[%758, %c0_476] : memref<32x128xf32, #tpu.memory_space<vmem>>, vector<1x128xf32>
    %760 = vector.shape_cast %759 : vector<1x128xf32> to vector<128xf32>
    %c5_477 = arith.constant 5 : index
    %c3_478 = arith.constant 3 : index
    %c0_479 = arith.constant 0 : index
    %761 = vector.load %arg13[%c5_477, %c3_478, %c0_479] : memref<8x16x128xf32, #tpu.memory_space<vmem>>, vector<1x1x128xf32>
    %762 = vector.shape_cast %761 : vector<1x1x128xf32> to vector<128xf32>
    %763 = vector.shape_cast %760 : vector<128xf32> to vector<1x1x128xf32>
    tpu.vector_store %arg13[%c5_477, %c3_478, %c0_479], %763 {strides = array<i32>} : memref<8x16x128xf32, #tpu.memory_space<vmem>>, vector<1x1x128xf32>,
    %c4_i32_480 = arith.constant 4 : i32
    %764 = arith.addi %7, %c4_i32_480 : i32
    %765 = arith.index_cast %764 : i32 to index
    %c5_481 = arith.constant 5 : index
    %766 = memref.load %arg1[%765, %c5_481] : memref<16x8xi32, #tpu.memory_space<smem>>
    %767 = arith.index_cast %766 : i32 to index
    %c0_482 = arith.constant 0 : index
    %768 = vector.load %arg12[%767, %c0_482] : memref<32x128xf32, #tpu.memory_space<vmem>>, vector<1x128xf32>
    %769 = vector.shape_cast %768 : vector<1x128xf32> to vector<128xf32>
    %c5_483 = arith.constant 5 : index
    %c4_484 = arith.constant 4 : index
    %c0_485 = arith.constant 0 : index
    %770 = vector.load %arg13[%c5_483, %c4_484, %c0_485] : memref<8x16x128xf32, #tpu.memory_space<vmem>>, vector<1x1x128xf32>
    %771 = vector.shape_cast %770 : vector<1x1x128xf32> to vector<128xf32>
    %772 = vector.shape_cast %769 : vector<128xf32> to vector<1x1x128xf32>
    tpu.vector_store %arg13[%c5_483, %c4_484, %c0_485], %772 {strides = array<i32>} : memref<8x16x128xf32, #tpu.memory_space<vmem>>, vector<1x1x128xf32>,
    %c5_i32_486 = arith.constant 5 : i32
    %773 = arith.addi %7, %c5_i32_486 : i32
    %774 = arith.index_cast %773 : i32 to index
    %c5_487 = arith.constant 5 : index
    %775 = memref.load %arg1[%774, %c5_487] : memref<16x8xi32, #tpu.memory_space<smem>>
    %776 = arith.index_cast %775 : i32 to index
    %c0_488 = arith.constant 0 : index
    %777 = vector.load %arg12[%776, %c0_488] : memref<32x128xf32, #tpu.memory_space<vmem>>, vector<1x128xf32>
    %778 = vector.shape_cast %777 : vector<1x128xf32> to vector<128xf32>
    %c5_489 = arith.constant 5 : index
    %c5_490 = arith.constant 5 : index
    %c0_491 = arith.constant 0 : index
    %779 = vector.load %arg13[%c5_489, %c5_490, %c0_491] : memref<8x16x128xf32, #tpu.memory_space<vmem>>, vector<1x1x128xf32>
    %780 = vector.shape_cast %779 : vector<1x1x128xf32> to vector<128xf32>
    %781 = vector.shape_cast %778 : vector<128xf32> to vector<1x1x128xf32>
    tpu.vector_store %arg13[%c5_489, %c5_490, %c0_491], %781 {strides = array<i32>} : memref<8x16x128xf32, #tpu.memory_space<vmem>>, vector<1x1x128xf32>,
    %c6_i32_492 = arith.constant 6 : i32
    %782 = arith.addi %7, %c6_i32_492 : i32
    %783 = arith.index_cast %782 : i32 to index
    %c5_493 = arith.constant 5 : index
    %784 = memref.load %arg1[%783, %c5_493] : memref<16x8xi32, #tpu.memory_space<smem>>
    %785 = arith.index_cast %784 : i32 to index
    %c0_494 = arith.constant 0 : index
    %786 = vector.load %arg12[%785, %c0_494] : memref<32x128xf32, #tpu.memory_space<vmem>>, vector<1x128xf32>
    %787 = vector.shape_cast %786 : vector<1x128xf32> to vector<128xf32>
    %c5_495 = arith.constant 5 : index
    %c6_496 = arith.constant 6 : index
    %c0_497 = arith.constant 0 : index
    %788 = vector.load %arg13[%c5_495, %c6_496, %c0_497] : memref<8x16x128xf32, #tpu.memory_space<vmem>>, vector<1x1x128xf32>
    %789 = vector.shape_cast %788 : vector<1x1x128xf32> to vector<128xf32>
    %790 = vector.shape_cast %787 : vector<128xf32> to vector<1x1x128xf32>
    tpu.vector_store %arg13[%c5_495, %c6_496, %c0_497], %790 {strides = array<i32>} : memref<8x16x128xf32, #tpu.memory_space<vmem>>, vector<1x1x128xf32>,
    %c7_i32_498 = arith.constant 7 : i32
    %791 = arith.addi %7, %c7_i32_498 : i32
    %792 = arith.index_cast %791 : i32 to index
    %c5_499 = arith.constant 5 : index
    %793 = memref.load %arg1[%792, %c5_499] : memref<16x8xi32, #tpu.memory_space<smem>>
    %794 = arith.index_cast %793 : i32 to index
    %c0_500 = arith.constant 0 : index
    %795 = vector.load %arg12[%794, %c0_500] : memref<32x128xf32, #tpu.memory_space<vmem>>, vector<1x128xf32>
    %796 = vector.shape_cast %795 : vector<1x128xf32> to vector<128xf32>
    %c5_501 = arith.constant 5 : index
    %c7_502 = arith.constant 7 : index
    %c0_503 = arith.constant 0 : index
    %797 = vector.load %arg13[%c5_501, %c7_502, %c0_503] : memref<8x16x128xf32, #tpu.memory_space<vmem>>, vector<1x1x128xf32>
    %798 = vector.shape_cast %797 : vector<1x1x128xf32> to vector<128xf32>
    %799 = vector.shape_cast %796 : vector<128xf32> to vector<1x1x128xf32>
    tpu.vector_store %arg13[%c5_501, %c7_502, %c0_503], %799 {strides = array<i32>} : memref<8x16x128xf32, #tpu.memory_space<vmem>>, vector<1x1x128xf32>,
    %c8_i32_504 = arith.constant 8 : i32
    %800 = arith.addi %7, %c8_i32_504 : i32
    %801 = arith.index_cast %800 : i32 to index
    %c5_505 = arith.constant 5 : index
    %802 = memref.load %arg1[%801, %c5_505] : memref<16x8xi32, #tpu.memory_space<smem>>
    %803 = arith.index_cast %802 : i32 to index
    %c0_506 = arith.constant 0 : index
    %804 = vector.load %arg12[%803, %c0_506] : memref<32x128xf32, #tpu.memory_space<vmem>>, vector<1x128xf32>
    %805 = vector.shape_cast %804 : vector<1x128xf32> to vector<128xf32>
    %c5_507 = arith.constant 5 : index
    %c8_508 = arith.constant 8 : index
    %c0_509 = arith.constant 0 : index
    %806 = vector.load %arg13[%c5_507, %c8_508, %c0_509] : memref<8x16x128xf32, #tpu.memory_space<vmem>>, vector<1x1x128xf32>
    %807 = vector.shape_cast %806 : vector<1x1x128xf32> to vector<128xf32>
    %808 = vector.shape_cast %805 : vector<128xf32> to vector<1x1x128xf32>
    tpu.vector_store %arg13[%c5_507, %c8_508, %c0_509], %808 {strides = array<i32>} : memref<8x16x128xf32, #tpu.memory_space<vmem>>, vector<1x1x128xf32>,
    %c9_i32_510 = arith.constant 9 : i32
    %809 = arith.addi %7, %c9_i32_510 : i32
    %810 = arith.index_cast %809 : i32 to index
    %c5_511 = arith.constant 5 : index
    %811 = memref.load %arg1[%810, %c5_511] : memref<16x8xi32, #tpu.memory_space<smem>>
    %812 = arith.index_cast %811 : i32 to index
    %c0_512 = arith.constant 0 : index
    %813 = vector.load %arg12[%812, %c0_512] : memref<32x128xf32, #tpu.memory_space<vmem>>, vector<1x128xf32>
    %814 = vector.shape_cast %813 : vector<1x128xf32> to vector<128xf32>
    %c5_513 = arith.constant 5 : index
    %c9_514 = arith.constant 9 : index
    %c0_515 = arith.constant 0 : index
    %815 = vector.load %arg13[%c5_513, %c9_514, %c0_515] : memref<8x16x128xf32, #tpu.memory_space<vmem>>, vector<1x1x128xf32>
    %816 = vector.shape_cast %815 : vector<1x1x128xf32> to vector<128xf32>
    %817 = vector.shape_cast %814 : vector<128xf32> to vector<1x1x128xf32>
    tpu.vector_store %arg13[%c5_513, %c9_514, %c0_515], %817 {strides = array<i32>} : memref<8x16x128xf32, #tpu.memory_space<vmem>>, vector<1x1x128xf32>,
    %c10_i32_516 = arith.constant 10 : i32
    %818 = arith.addi %7, %c10_i32_516 : i32
    %819 = arith.index_cast %818 : i32 to index
    %c5_517 = arith.constant 5 : index
    %820 = memref.load %arg1[%819, %c5_517] : memref<16x8xi32, #tpu.memory_space<smem>>
    %821 = arith.index_cast %820 : i32 to index
    %c0_518 = arith.constant 0 : index
    %822 = vector.load %arg12[%821, %c0_518] : memref<32x128xf32, #tpu.memory_space<vmem>>, vector<1x128xf32>
    %823 = vector.shape_cast %822 : vector<1x128xf32> to vector<128xf32>
    %c5_519 = arith.constant 5 : index
    %c10_520 = arith.constant 10 : index
    %c0_521 = arith.constant 0 : index
    %824 = vector.load %arg13[%c5_519, %c10_520, %c0_521] : memref<8x16x128xf32, #tpu.memory_space<vmem>>, vector<1x1x128xf32>
    %825 = vector.shape_cast %824 : vector<1x1x128xf32> to vector<128xf32>
    %826 = vector.shape_cast %823 : vector<128xf32> to vector<1x1x128xf32>
    tpu.vector_store %arg13[%c5_519, %c10_520, %c0_521], %826 {strides = array<i32>} : memref<8x16x128xf32, #tpu.memory_space<vmem>>, vector<1x1x128xf32>,
    %c11_i32_522 = arith.constant 11 : i32
    %827 = arith.addi %7, %c11_i32_522 : i32
    %828 = arith.index_cast %827 : i32 to index
    %c5_523 = arith.constant 5 : index
    %829 = memref.load %arg1[%828, %c5_523] : memref<16x8xi32, #tpu.memory_space<smem>>
    %830 = arith.index_cast %829 : i32 to index
    %c0_524 = arith.constant 0 : index
    %831 = vector.load %arg12[%830, %c0_524] : memref<32x128xf32, #tpu.memory_space<vmem>>, vector<1x128xf32>
    %832 = vector.shape_cast %831 : vector<1x128xf32> to vector<128xf32>
    %c5_525 = arith.constant 5 : index
    %c11_526 = arith.constant 11 : index
    %c0_527 = arith.constant 0 : index
    %833 = vector.load %arg13[%c5_525, %c11_526, %c0_527] : memref<8x16x128xf32, #tpu.memory_space<vmem>>, vector<1x1x128xf32>
    %834 = vector.shape_cast %833 : vector<1x1x128xf32> to vector<128xf32>
    %835 = vector.shape_cast %832 : vector<128xf32> to vector<1x1x128xf32>
    tpu.vector_store %arg13[%c5_525, %c11_526, %c0_527], %835 {strides = array<i32>} : memref<8x16x128xf32, #tpu.memory_space<vmem>>, vector<1x1x128xf32>,
    %c12_i32_528 = arith.constant 12 : i32
    %836 = arith.addi %7, %c12_i32_528 : i32
    %837 = arith.index_cast %836 : i32 to index
    %c5_529 = arith.constant 5 : index
    %838 = memref.load %arg1[%837, %c5_529] : memref<16x8xi32, #tpu.memory_space<smem>>
    %839 = arith.index_cast %838 : i32 to index
    %c0_530 = arith.constant 0 : index
    %840 = vector.load %arg12[%839, %c0_530] : memref<32x128xf32, #tpu.memory_space<vmem>>, vector<1x128xf32>
    %841 = vector.shape_cast %840 : vector<1x128xf32> to vector<128xf32>
    %c5_531 = arith.constant 5 : index
    %c12_532 = arith.constant 12 : index
    %c0_533 = arith.constant 0 : index
    %842 = vector.load %arg13[%c5_531, %c12_532, %c0_533] : memref<8x16x128xf32, #tpu.memory_space<vmem>>, vector<1x1x128xf32>
    %843 = vector.shape_cast %842 : vector<1x1x128xf32> to vector<128xf32>
    %844 = vector.shape_cast %841 : vector<128xf32> to vector<1x1x128xf32>
    tpu.vector_store %arg13[%c5_531, %c12_532, %c0_533], %844 {strides = array<i32>} : memref<8x16x128xf32, #tpu.memory_space<vmem>>, vector<1x1x128xf32>,
    %c13_i32_534 = arith.constant 13 : i32
    %845 = arith.addi %7, %c13_i32_534 : i32
    %846 = arith.index_cast %845 : i32 to index
    %c5_535 = arith.constant 5 : index
    %847 = memref.load %arg1[%846, %c5_535] : memref<16x8xi32, #tpu.memory_space<smem>>
    %848 = arith.index_cast %847 : i32 to index
    %c0_536 = arith.constant 0 : index
    %849 = vector.load %arg12[%848, %c0_536] : memref<32x128xf32, #tpu.memory_space<vmem>>, vector<1x128xf32>
    %850 = vector.shape_cast %849 : vector<1x128xf32> to vector<128xf32>
    %c5_537 = arith.constant 5 : index
    %c13_538 = arith.constant 13 : index
    %c0_539 = arith.constant 0 : index
    %851 = vector.load %arg13[%c5_537, %c13_538, %c0_539] : memref<8x16x128xf32, #tpu.memory_space<vmem>>, vector<1x1x128xf32>
    %852 = vector.shape_cast %851 : vector<1x1x128xf32> to vector<128xf32>
    %853 = vector.shape_cast %850 : vector<128xf32> to vector<1x1x128xf32>
    tpu.vector_store %arg13[%c5_537, %c13_538, %c0_539], %853 {strides = array<i32>} : memref<8x16x128xf32, #tpu.memory_space<vmem>>, vector<1x1x128xf32>,
    %c14_i32_540 = arith.constant 14 : i32
    %854 = arith.addi %7, %c14_i32_540 : i32
    %855 = arith.index_cast %854 : i32 to index
    %c5_541 = arith.constant 5 : index
    %856 = memref.load %arg1[%855, %c5_541] : memref<16x8xi32, #tpu.memory_space<smem>>
    %857 = arith.index_cast %856 : i32 to index
    %c0_542 = arith.constant 0 : index
    %858 = vector.load %arg12[%857, %c0_542] : memref<32x128xf32, #tpu.memory_space<vmem>>, vector<1x128xf32>
    %859 = vector.shape_cast %858 : vector<1x128xf32> to vector<128xf32>
    %c5_543 = arith.constant 5 : index
    %c14_544 = arith.constant 14 : index
    %c0_545 = arith.constant 0 : index
    %860 = vector.load %arg13[%c5_543, %c14_544, %c0_545] : memref<8x16x128xf32, #tpu.memory_space<vmem>>, vector<1x1x128xf32>
    %861 = vector.shape_cast %860 : vector<1x1x128xf32> to vector<128xf32>
    %862 = vector.shape_cast %859 : vector<128xf32> to vector<1x1x128xf32>
    tpu.vector_store %arg13[%c5_543, %c14_544, %c0_545], %862 {strides = array<i32>} : memref<8x16x128xf32, #tpu.memory_space<vmem>>, vector<1x1x128xf32>,
    %c15_i32_546 = arith.constant 15 : i32
    %863 = arith.addi %7, %c15_i32_546 : i32
    %864 = arith.index_cast %863 : i32 to index
    %c5_547 = arith.constant 5 : index
    %865 = memref.load %arg1[%864, %c5_547] : memref<16x8xi32, #tpu.memory_space<smem>>
    %866 = arith.index_cast %865 : i32 to index
    %c0_548 = arith.constant 0 : index
    %867 = vector.load %arg12[%866, %c0_548] : memref<32x128xf32, #tpu.memory_space<vmem>>, vector<1x128xf32>
    %868 = vector.shape_cast %867 : vector<1x128xf32> to vector<128xf32>
    %c5_549 = arith.constant 5 : index
    %c15_550 = arith.constant 15 : index
    %c0_551 = arith.constant 0 : index
    %869 = vector.load %arg13[%c5_549, %c15_550, %c0_551] : memref<8x16x128xf32, #tpu.memory_space<vmem>>, vector<1x1x128xf32>
    %870 = vector.shape_cast %869 : vector<1x1x128xf32> to vector<128xf32>
    %871 = vector.shape_cast %868 : vector<128xf32> to vector<1x1x128xf32>
    tpu.vector_store %arg13[%c5_549, %c15_550, %c0_551], %871 {strides = array<i32>} : memref<8x16x128xf32, #tpu.memory_space<vmem>>, vector<1x1x128xf32>,
    %c0_i32_552 = arith.constant 0 : i32
    %872 = arith.addi %7, %c0_i32_552 : i32
    %873 = arith.index_cast %872 : i32 to index
    %c6_553 = arith.constant 6 : index
    %874 = memref.load %arg1[%873, %c6_553] : memref<16x8xi32, #tpu.memory_space<smem>>
    %875 = arith.index_cast %874 : i32 to index
    %c0_554 = arith.constant 0 : index
    %876 = vector.load %arg12[%875, %c0_554] : memref<32x128xf32, #tpu.memory_space<vmem>>, vector<1x128xf32>
    %877 = vector.shape_cast %876 : vector<1x128xf32> to vector<128xf32>
    %c6_555 = arith.constant 6 : index
    %c0_556 = arith.constant 0 : index
    %c0_557 = arith.constant 0 : index
    %878 = vector.load %arg13[%c6_555, %c0_556, %c0_557] : memref<8x16x128xf32, #tpu.memory_space<vmem>>, vector<1x1x128xf32>
    %879 = vector.shape_cast %878 : vector<1x1x128xf32> to vector<128xf32>
    %880 = vector.shape_cast %877 : vector<128xf32> to vector<1x1x128xf32>
    tpu.vector_store %arg13[%c6_555, %c0_556, %c0_557], %880 {strides = array<i32>} : memref<8x16x128xf32, #tpu.memory_space<vmem>>, vector<1x1x128xf32>,
    %c1_i32_558 = arith.constant 1 : i32
    %881 = arith.addi %7, %c1_i32_558 : i32
    %882 = arith.index_cast %881 : i32 to index
    %c6_559 = arith.constant 6 : index
    %883 = memref.load %arg1[%882, %c6_559] : memref<16x8xi32, #tpu.memory_space<smem>>
    %884 = arith.index_cast %883 : i32 to index
    %c0_560 = arith.constant 0 : index
    %885 = vector.load %arg12[%884, %c0_560] : memref<32x128xf32, #tpu.memory_space<vmem>>, vector<1x128xf32>
    %886 = vector.shape_cast %885 : vector<1x128xf32> to vector<128xf32>
    %c6_561 = arith.constant 6 : index
    %c1_562 = arith.constant 1 : index
    %c0_563 = arith.constant 0 : index
    %887 = vector.load %arg13[%c6_561, %c1_562, %c0_563] : memref<8x16x128xf32, #tpu.memory_space<vmem>>, vector<1x1x128xf32>
    %888 = vector.shape_cast %887 : vector<1x1x128xf32> to vector<128xf32>
    %889 = vector.shape_cast %886 : vector<128xf32> to vector<1x1x128xf32>
    tpu.vector_store %arg13[%c6_561, %c1_562, %c0_563], %889 {strides = array<i32>} : memref<8x16x128xf32, #tpu.memory_space<vmem>>, vector<1x1x128xf32>,
    %c2_i32_564 = arith.constant 2 : i32
    %890 = arith.addi %7, %c2_i32_564 : i32
    %891 = arith.index_cast %890 : i32 to index
    %c6_565 = arith.constant 6 : index
    %892 = memref.load %arg1[%891, %c6_565] : memref<16x8xi32, #tpu.memory_space<smem>>
    %893 = arith.index_cast %892 : i32 to index
    %c0_566 = arith.constant 0 : index
    %894 = vector.load %arg12[%893, %c0_566] : memref<32x128xf32, #tpu.memory_space<vmem>>, vector<1x128xf32>
    %895 = vector.shape_cast %894 : vector<1x128xf32> to vector<128xf32>
    %c6_567 = arith.constant 6 : index
    %c2_568 = arith.constant 2 : index
    %c0_569 = arith.constant 0 : index
    %896 = vector.load %arg13[%c6_567, %c2_568, %c0_569] : memref<8x16x128xf32, #tpu.memory_space<vmem>>, vector<1x1x128xf32>
    %897 = vector.shape_cast %896 : vector<1x1x128xf32> to vector<128xf32>
    %898 = vector.shape_cast %895 : vector<128xf32> to vector<1x1x128xf32>
    tpu.vector_store %arg13[%c6_567, %c2_568, %c0_569], %898 {strides = array<i32>} : memref<8x16x128xf32, #tpu.memory_space<vmem>>, vector<1x1x128xf32>,
    %c3_i32_570 = arith.constant 3 : i32
    %899 = arith.addi %7, %c3_i32_570 : i32
    %900 = arith.index_cast %899 : i32 to index
    %c6_571 = arith.constant 6 : index
    %901 = memref.load %arg1[%900, %c6_571] : memref<16x8xi32, #tpu.memory_space<smem>>
    %902 = arith.index_cast %901 : i32 to index
    %c0_572 = arith.constant 0 : index
    %903 = vector.load %arg12[%902, %c0_572] : memref<32x128xf32, #tpu.memory_space<vmem>>, vector<1x128xf32>
    %904 = vector.shape_cast %903 : vector<1x128xf32> to vector<128xf32>
    %c6_573 = arith.constant 6 : index
    %c3_574 = arith.constant 3 : index
    %c0_575 = arith.constant 0 : index
    %905 = vector.load %arg13[%c6_573, %c3_574, %c0_575] : memref<8x16x128xf32, #tpu.memory_space<vmem>>, vector<1x1x128xf32>
    %906 = vector.shape_cast %905 : vector<1x1x128xf32> to vector<128xf32>
    %907 = vector.shape_cast %904 : vector<128xf32> to vector<1x1x128xf32>
    tpu.vector_store %arg13[%c6_573, %c3_574, %c0_575], %907 {strides = array<i32>} : memref<8x16x128xf32, #tpu.memory_space<vmem>>, vector<1x1x128xf32>,
    %c4_i32_576 = arith.constant 4 : i32
    %908 = arith.addi %7, %c4_i32_576 : i32
    %909 = arith.index_cast %908 : i32 to index
    %c6_577 = arith.constant 6 : index
    %910 = memref.load %arg1[%909, %c6_577] : memref<16x8xi32, #tpu.memory_space<smem>>
    %911 = arith.index_cast %910 : i32 to index
    %c0_578 = arith.constant 0 : index
    %912 = vector.load %arg12[%911, %c0_578] : memref<32x128xf32, #tpu.memory_space<vmem>>, vector<1x128xf32>
    %913 = vector.shape_cast %912 : vector<1x128xf32> to vector<128xf32>
    %c6_579 = arith.constant 6 : index
    %c4_580 = arith.constant 4 : index
    %c0_581 = arith.constant 0 : index
    %914 = vector.load %arg13[%c6_579, %c4_580, %c0_581] : memref<8x16x128xf32, #tpu.memory_space<vmem>>, vector<1x1x128xf32>
    %915 = vector.shape_cast %914 : vector<1x1x128xf32> to vector<128xf32>
    %916 = vector.shape_cast %913 : vector<128xf32> to vector<1x1x128xf32>
    tpu.vector_store %arg13[%c6_579, %c4_580, %c0_581], %916 {strides = array<i32>} : memref<8x16x128xf32, #tpu.memory_space<vmem>>, vector<1x1x128xf32>,
    %c5_i32_582 = arith.constant 5 : i32
    %917 = arith.addi %7, %c5_i32_582 : i32
    %918 = arith.index_cast %917 : i32 to index
    %c6_583 = arith.constant 6 : index
    %919 = memref.load %arg1[%918, %c6_583] : memref<16x8xi32, #tpu.memory_space<smem>>
    %920 = arith.index_cast %919 : i32 to index
    %c0_584 = arith.constant 0 : index
    %921 = vector.load %arg12[%920, %c0_584] : memref<32x128xf32, #tpu.memory_space<vmem>>, vector<1x128xf32>
    %922 = vector.shape_cast %921 : vector<1x128xf32> to vector<128xf32>
    %c6_585 = arith.constant 6 : index
    %c5_586 = arith.constant 5 : index
    %c0_587 = arith.constant 0 : index
    %923 = vector.load %arg13[%c6_585, %c5_586, %c0_587] : memref<8x16x128xf32, #tpu.memory_space<vmem>>, vector<1x1x128xf32>
    %924 = vector.shape_cast %923 : vector<1x1x128xf32> to vector<128xf32>
    %925 = vector.shape_cast %922 : vector<128xf32> to vector<1x1x128xf32>
    tpu.vector_store %arg13[%c6_585, %c5_586, %c0_587], %925 {strides = array<i32>} : memref<8x16x128xf32, #tpu.memory_space<vmem>>, vector<1x1x128xf32>,
    %c6_i32_588 = arith.constant 6 : i32
    %926 = arith.addi %7, %c6_i32_588 : i32
    %927 = arith.index_cast %926 : i32 to index
    %c6_589 = arith.constant 6 : index
    %928 = memref.load %arg1[%927, %c6_589] : memref<16x8xi32, #tpu.memory_space<smem>>
    %929 = arith.index_cast %928 : i32 to index
    %c0_590 = arith.constant 0 : index
    %930 = vector.load %arg12[%929, %c0_590] : memref<32x128xf32, #tpu.memory_space<vmem>>, vector<1x128xf32>
    %931 = vector.shape_cast %930 : vector<1x128xf32> to vector<128xf32>
    %c6_591 = arith.constant 6 : index
    %c6_592 = arith.constant 6 : index
    %c0_593 = arith.constant 0 : index
    %932 = vector.load %arg13[%c6_591, %c6_592, %c0_593] : memref<8x16x128xf32, #tpu.memory_space<vmem>>, vector<1x1x128xf32>
    %933 = vector.shape_cast %932 : vector<1x1x128xf32> to vector<128xf32>
    %934 = vector.shape_cast %931 : vector<128xf32> to vector<1x1x128xf32>
    tpu.vector_store %arg13[%c6_591, %c6_592, %c0_593], %934 {strides = array<i32>} : memref<8x16x128xf32, #tpu.memory_space<vmem>>, vector<1x1x128xf32>,
    %c7_i32_594 = arith.constant 7 : i32
    %935 = arith.addi %7, %c7_i32_594 : i32
    %936 = arith.index_cast %935 : i32 to index
    %c6_595 = arith.constant 6 : index
    %937 = memref.load %arg1[%936, %c6_595] : memref<16x8xi32, #tpu.memory_space<smem>>
    %938 = arith.index_cast %937 : i32 to index
    %c0_596 = arith.constant 0 : index
    %939 = vector.load %arg12[%938, %c0_596] : memref<32x128xf32, #tpu.memory_space<vmem>>, vector<1x128xf32>
    %940 = vector.shape_cast %939 : vector<1x128xf32> to vector<128xf32>
    %c6_597 = arith.constant 6 : index
    %c7_598 = arith.constant 7 : index
    %c0_599 = arith.constant 0 : index
    %941 = vector.load %arg13[%c6_597, %c7_598, %c0_599] : memref<8x16x128xf32, #tpu.memory_space<vmem>>, vector<1x1x128xf32>
    %942 = vector.shape_cast %941 : vector<1x1x128xf32> to vector<128xf32>
    %943 = vector.shape_cast %940 : vector<128xf32> to vector<1x1x128xf32>
    tpu.vector_store %arg13[%c6_597, %c7_598, %c0_599], %943 {strides = array<i32>} : memref<8x16x128xf32, #tpu.memory_space<vmem>>, vector<1x1x128xf32>,
    %c8_i32_600 = arith.constant 8 : i32
    %944 = arith.addi %7, %c8_i32_600 : i32
    %945 = arith.index_cast %944 : i32 to index
    %c6_601 = arith.constant 6 : index
    %946 = memref.load %arg1[%945, %c6_601] : memref<16x8xi32, #tpu.memory_space<smem>>
    %947 = arith.index_cast %946 : i32 to index
    %c0_602 = arith.constant 0 : index
    %948 = vector.load %arg12[%947, %c0_602] : memref<32x128xf32, #tpu.memory_space<vmem>>, vector<1x128xf32>
    %949 = vector.shape_cast %948 : vector<1x128xf32> to vector<128xf32>
    %c6_603 = arith.constant 6 : index
    %c8_604 = arith.constant 8 : index
    %c0_605 = arith.constant 0 : index
    %950 = vector.load %arg13[%c6_603, %c8_604, %c0_605] : memref<8x16x128xf32, #tpu.memory_space<vmem>>, vector<1x1x128xf32>
    %951 = vector.shape_cast %950 : vector<1x1x128xf32> to vector<128xf32>
    %952 = vector.shape_cast %949 : vector<128xf32> to vector<1x1x128xf32>
    tpu.vector_store %arg13[%c6_603, %c8_604, %c0_605], %952 {strides = array<i32>} : memref<8x16x128xf32, #tpu.memory_space<vmem>>, vector<1x1x128xf32>,
    %c9_i32_606 = arith.constant 9 : i32
    %953 = arith.addi %7, %c9_i32_606 : i32
    %954 = arith.index_cast %953 : i32 to index
    %c6_607 = arith.constant 6 : index
    %955 = memref.load %arg1[%954, %c6_607] : memref<16x8xi32, #tpu.memory_space<smem>>
    %956 = arith.index_cast %955 : i32 to index
    %c0_608 = arith.constant 0 : index
    %957 = vector.load %arg12[%956, %c0_608] : memref<32x128xf32, #tpu.memory_space<vmem>>, vector<1x128xf32>
    %958 = vector.shape_cast %957 : vector<1x128xf32> to vector<128xf32>
    %c6_609 = arith.constant 6 : index
    %c9_610 = arith.constant 9 : index
    %c0_611 = arith.constant 0 : index
    %959 = vector.load %arg13[%c6_609, %c9_610, %c0_611] : memref<8x16x128xf32, #tpu.memory_space<vmem>>, vector<1x1x128xf32>
    %960 = vector.shape_cast %959 : vector<1x1x128xf32> to vector<128xf32>
    %961 = vector.shape_cast %958 : vector<128xf32> to vector<1x1x128xf32>
    tpu.vector_store %arg13[%c6_609, %c9_610, %c0_611], %961 {strides = array<i32>} : memref<8x16x128xf32, #tpu.memory_space<vmem>>, vector<1x1x128xf32>,
    %c10_i32_612 = arith.constant 10 : i32
    %962 = arith.addi %7, %c10_i32_612 : i32
    %963 = arith.index_cast %962 : i32 to index
    %c6_613 = arith.constant 6 : index
    %964 = memref.load %arg1[%963, %c6_613] : memref<16x8xi32, #tpu.memory_space<smem>>
    %965 = arith.index_cast %964 : i32 to index
    %c0_614 = arith.constant 0 : index
    %966 = vector.load %arg12[%965, %c0_614] : memref<32x128xf32, #tpu.memory_space<vmem>>, vector<1x128xf32>
    %967 = vector.shape_cast %966 : vector<1x128xf32> to vector<128xf32>
    %c6_615 = arith.constant 6 : index
    %c10_616 = arith.constant 10 : index
    %c0_617 = arith.constant 0 : index
    %968 = vector.load %arg13[%c6_615, %c10_616, %c0_617] : memref<8x16x128xf32, #tpu.memory_space<vmem>>, vector<1x1x128xf32>
    %969 = vector.shape_cast %968 : vector<1x1x128xf32> to vector<128xf32>
    %970 = vector.shape_cast %967 : vector<128xf32> to vector<1x1x128xf32>
    tpu.vector_store %arg13[%c6_615, %c10_616, %c0_617], %970 {strides = array<i32>} : memref<8x16x128xf32, #tpu.memory_space<vmem>>, vector<1x1x128xf32>,
    %c11_i32_618 = arith.constant 11 : i32
    %971 = arith.addi %7, %c11_i32_618 : i32
    %972 = arith.index_cast %971 : i32 to index
    %c6_619 = arith.constant 6 : index
    %973 = memref.load %arg1[%972, %c6_619] : memref<16x8xi32, #tpu.memory_space<smem>>
    %974 = arith.index_cast %973 : i32 to index
    %c0_620 = arith.constant 0 : index
    %975 = vector.load %arg12[%974, %c0_620] : memref<32x128xf32, #tpu.memory_space<vmem>>, vector<1x128xf32>
    %976 = vector.shape_cast %975 : vector<1x128xf32> to vector<128xf32>
    %c6_621 = arith.constant 6 : index
    %c11_622 = arith.constant 11 : index
    %c0_623 = arith.constant 0 : index
    %977 = vector.load %arg13[%c6_621, %c11_622, %c0_623] : memref<8x16x128xf32, #tpu.memory_space<vmem>>, vector<1x1x128xf32>
    %978 = vector.shape_cast %977 : vector<1x1x128xf32> to vector<128xf32>
    %979 = vector.shape_cast %976 : vector<128xf32> to vector<1x1x128xf32>
    tpu.vector_store %arg13[%c6_621, %c11_622, %c0_623], %979 {strides = array<i32>} : memref<8x16x128xf32, #tpu.memory_space<vmem>>, vector<1x1x128xf32>,
    %c12_i32_624 = arith.constant 12 : i32
    %980 = arith.addi %7, %c12_i32_624 : i32
    %981 = arith.index_cast %980 : i32 to index
    %c6_625 = arith.constant 6 : index
    %982 = memref.load %arg1[%981, %c6_625] : memref<16x8xi32, #tpu.memory_space<smem>>
    %983 = arith.index_cast %982 : i32 to index
    %c0_626 = arith.constant 0 : index
    %984 = vector.load %arg12[%983, %c0_626] : memref<32x128xf32, #tpu.memory_space<vmem>>, vector<1x128xf32>
    %985 = vector.shape_cast %984 : vector<1x128xf32> to vector<128xf32>
    %c6_627 = arith.constant 6 : index
    %c12_628 = arith.constant 12 : index
    %c0_629 = arith.constant 0 : index
    %986 = vector.load %arg13[%c6_627, %c12_628, %c0_629] : memref<8x16x128xf32, #tpu.memory_space<vmem>>, vector<1x1x128xf32>
    %987 = vector.shape_cast %986 : vector<1x1x128xf32> to vector<128xf32>
    %988 = vector.shape_cast %985 : vector<128xf32> to vector<1x1x128xf32>
    tpu.vector_store %arg13[%c6_627, %c12_628, %c0_629], %988 {strides = array<i32>} : memref<8x16x128xf32, #tpu.memory_space<vmem>>, vector<1x1x128xf32>,
    %c13_i32_630 = arith.constant 13 : i32
    %989 = arith.addi %7, %c13_i32_630 : i32
    %990 = arith.index_cast %989 : i32 to index
    %c6_631 = arith.constant 6 : index
    %991 = memref.load %arg1[%990, %c6_631] : memref<16x8xi32, #tpu.memory_space<smem>>
    %992 = arith.index_cast %991 : i32 to index
    %c0_632 = arith.constant 0 : index
    %993 = vector.load %arg12[%992, %c0_632] : memref<32x128xf32, #tpu.memory_space<vmem>>, vector<1x128xf32>
    %994 = vector.shape_cast %993 : vector<1x128xf32> to vector<128xf32>
    %c6_633 = arith.constant 6 : index
    %c13_634 = arith.constant 13 : index
    %c0_635 = arith.constant 0 : index
    %995 = vector.load %arg13[%c6_633, %c13_634, %c0_635] : memref<8x16x128xf32, #tpu.memory_space<vmem>>, vector<1x1x128xf32>
    %996 = vector.shape_cast %995 : vector<1x1x128xf32> to vector<128xf32>
    %997 = vector.shape_cast %994 : vector<128xf32> to vector<1x1x128xf32>
    tpu.vector_store %arg13[%c6_633, %c13_634, %c0_635], %997 {strides = array<i32>} : memref<8x16x128xf32, #tpu.memory_space<vmem>>, vector<1x1x128xf32>,
    %c14_i32_636 = arith.constant 14 : i32
    %998 = arith.addi %7, %c14_i32_636 : i32
    %999 = arith.index_cast %998 : i32 to index
    %c6_637 = arith.constant 6 : index
    %1000 = memref.load %arg1[%999, %c6_637] : memref<16x8xi32, #tpu.memory_space<smem>>
    %1001 = arith.index_cast %1000 : i32 to index
    %c0_638 = arith.constant 0 : index
    %1002 = vector.load %arg12[%1001, %c0_638] : memref<32x128xf32, #tpu.memory_space<vmem>>, vector<1x128xf32>
    %1003 = vector.shape_cast %1002 : vector<1x128xf32> to vector<128xf32>
    %c6_639 = arith.constant 6 : index
    %c14_640 = arith.constant 14 : index
    %c0_641 = arith.constant 0 : index
    %1004 = vector.load %arg13[%c6_639, %c14_640, %c0_641] : memref<8x16x128xf32, #tpu.memory_space<vmem>>, vector<1x1x128xf32>
    %1005 = vector.shape_cast %1004 : vector<1x1x128xf32> to vector<128xf32>
    %1006 = vector.shape_cast %1003 : vector<128xf32> to vector<1x1x128xf32>
    tpu.vector_store %arg13[%c6_639, %c14_640, %c0_641], %1006 {strides = array<i32>} : memref<8x16x128xf32, #tpu.memory_space<vmem>>, vector<1x1x128xf32>,
    %c15_i32_642 = arith.constant 15 : i32
    %1007 = arith.addi %7, %c15_i32_642 : i32
    %1008 = arith.index_cast %1007 : i32 to index
    %c6_643 = arith.constant 6 : index
    %1009 = memref.load %arg1[%1008, %c6_643] : memref<16x8xi32, #tpu.memory_space<smem>>
    %1010 = arith.index_cast %1009 : i32 to index
    %c0_644 = arith.constant 0 : index
    %1011 = vector.load %arg12[%1010, %c0_644] : memref<32x128xf32, #tpu.memory_space<vmem>>, vector<1x128xf32>
    %1012 = vector.shape_cast %1011 : vector<1x128xf32> to vector<128xf32>
    %c6_645 = arith.constant 6 : index
    %c15_646 = arith.constant 15 : index
    %c0_647 = arith.constant 0 : index
    %1013 = vector.load %arg13[%c6_645, %c15_646, %c0_647] : memref<8x16x128xf32, #tpu.memory_space<vmem>>, vector<1x1x128xf32>
    %1014 = vector.shape_cast %1013 : vector<1x1x128xf32> to vector<128xf32>
    %1015 = vector.shape_cast %1012 : vector<128xf32> to vector<1x1x128xf32>
    tpu.vector_store %arg13[%c6_645, %c15_646, %c0_647], %1015 {strides = array<i32>} : memref<8x16x128xf32, #tpu.memory_space<vmem>>, vector<1x1x128xf32>,
    %c0_i32_648 = arith.constant 0 : i32
    %1016 = arith.addi %7, %c0_i32_648 : i32
    %1017 = arith.index_cast %1016 : i32 to index
    %c7_649 = arith.constant 7 : index
    %1018 = memref.load %arg1[%1017, %c7_649] : memref<16x8xi32, #tpu.memory_space<smem>>
    %1019 = arith.index_cast %1018 : i32 to index
    %c0_650 = arith.constant 0 : index
    %1020 = vector.load %arg12[%1019, %c0_650] : memref<32x128xf32, #tpu.memory_space<vmem>>, vector<1x128xf32>
    %1021 = vector.shape_cast %1020 : vector<1x128xf32> to vector<128xf32>
    %c7_651 = arith.constant 7 : index
    %c0_652 = arith.constant 0 : index
    %c0_653 = arith.constant 0 : index
    %1022 = vector.load %arg13[%c7_651, %c0_652, %c0_653] : memref<8x16x128xf32, #tpu.memory_space<vmem>>, vector<1x1x128xf32>
    %1023 = vector.shape_cast %1022 : vector<1x1x128xf32> to vector<128xf32>
    %1024 = vector.shape_cast %1021 : vector<128xf32> to vector<1x1x128xf32>
    tpu.vector_store %arg13[%c7_651, %c0_652, %c0_653], %1024 {strides = array<i32>} : memref<8x16x128xf32, #tpu.memory_space<vmem>>, vector<1x1x128xf32>,
    %c1_i32_654 = arith.constant 1 : i32
    %1025 = arith.addi %7, %c1_i32_654 : i32
    %1026 = arith.index_cast %1025 : i32 to index
    %c7_655 = arith.constant 7 : index
    %1027 = memref.load %arg1[%1026, %c7_655] : memref<16x8xi32, #tpu.memory_space<smem>>
    %1028 = arith.index_cast %1027 : i32 to index
    %c0_656 = arith.constant 0 : index
    %1029 = vector.load %arg12[%1028, %c0_656] : memref<32x128xf32, #tpu.memory_space<vmem>>, vector<1x128xf32>
    %1030 = vector.shape_cast %1029 : vector<1x128xf32> to vector<128xf32>
    %c7_657 = arith.constant 7 : index
    %c1_658 = arith.constant 1 : index
    %c0_659 = arith.constant 0 : index
    %1031 = vector.load %arg13[%c7_657, %c1_658, %c0_659] : memref<8x16x128xf32, #tpu.memory_space<vmem>>, vector<1x1x128xf32>
    %1032 = vector.shape_cast %1031 : vector<1x1x128xf32> to vector<128xf32>
    %1033 = vector.shape_cast %1030 : vector<128xf32> to vector<1x1x128xf32>
    tpu.vector_store %arg13[%c7_657, %c1_658, %c0_659], %1033 {strides = array<i32>} : memref<8x16x128xf32, #tpu.memory_space<vmem>>, vector<1x1x128xf32>,
    %c2_i32_660 = arith.constant 2 : i32
    %1034 = arith.addi %7, %c2_i32_660 : i32
    %1035 = arith.index_cast %1034 : i32 to index
    %c7_661 = arith.constant 7 : index
    %1036 = memref.load %arg1[%1035, %c7_661] : memref<16x8xi32, #tpu.memory_space<smem>>
    %1037 = arith.index_cast %1036 : i32 to index
    %c0_662 = arith.constant 0 : index
    %1038 = vector.load %arg12[%1037, %c0_662] : memref<32x128xf32, #tpu.memory_space<vmem>>, vector<1x128xf32>
    %1039 = vector.shape_cast %1038 : vector<1x128xf32> to vector<128xf32>
    %c7_663 = arith.constant 7 : index
    %c2_664 = arith.constant 2 : index
    %c0_665 = arith.constant 0 : index
    %1040 = vector.load %arg13[%c7_663, %c2_664, %c0_665] : memref<8x16x128xf32, #tpu.memory_space<vmem>>, vector<1x1x128xf32>
    %1041 = vector.shape_cast %1040 : vector<1x1x128xf32> to vector<128xf32>
    %1042 = vector.shape_cast %1039 : vector<128xf32> to vector<1x1x128xf32>
    tpu.vector_store %arg13[%c7_663, %c2_664, %c0_665], %1042 {strides = array<i32>} : memref<8x16x128xf32, #tpu.memory_space<vmem>>, vector<1x1x128xf32>,
    %c3_i32_666 = arith.constant 3 : i32
    %1043 = arith.addi %7, %c3_i32_666 : i32
    %1044 = arith.index_cast %1043 : i32 to index
    %c7_667 = arith.constant 7 : index
    %1045 = memref.load %arg1[%1044, %c7_667] : memref<16x8xi32, #tpu.memory_space<smem>>
    %1046 = arith.index_cast %1045 : i32 to index
    %c0_668 = arith.constant 0 : index
    %1047 = vector.load %arg12[%1046, %c0_668] : memref<32x128xf32, #tpu.memory_space<vmem>>, vector<1x128xf32>
    %1048 = vector.shape_cast %1047 : vector<1x128xf32> to vector<128xf32>
    %c7_669 = arith.constant 7 : index
    %c3_670 = arith.constant 3 : index
    %c0_671 = arith.constant 0 : index
    %1049 = vector.load %arg13[%c7_669, %c3_670, %c0_671] : memref<8x16x128xf32, #tpu.memory_space<vmem>>, vector<1x1x128xf32>
    %1050 = vector.shape_cast %1049 : vector<1x1x128xf32> to vector<128xf32>
    %1051 = vector.shape_cast %1048 : vector<128xf32> to vector<1x1x128xf32>
    tpu.vector_store %arg13[%c7_669, %c3_670, %c0_671], %1051 {strides = array<i32>} : memref<8x16x128xf32, #tpu.memory_space<vmem>>, vector<1x1x128xf32>,
    %c4_i32_672 = arith.constant 4 : i32
    %1052 = arith.addi %7, %c4_i32_672 : i32
    %1053 = arith.index_cast %1052 : i32 to index
    %c7_673 = arith.constant 7 : index
    %1054 = memref.load %arg1[%1053, %c7_673] : memref<16x8xi32, #tpu.memory_space<smem>>
    %1055 = arith.index_cast %1054 : i32 to index
    %c0_674 = arith.constant 0 : index
    %1056 = vector.load %arg12[%1055, %c0_674] : memref<32x128xf32, #tpu.memory_space<vmem>>, vector<1x128xf32>
    %1057 = vector.shape_cast %1056 : vector<1x128xf32> to vector<128xf32>
    %c7_675 = arith.constant 7 : index
    %c4_676 = arith.constant 4 : index
    %c0_677 = arith.constant 0 : index
    %1058 = vector.load %arg13[%c7_675, %c4_676, %c0_677] : memref<8x16x128xf32, #tpu.memory_space<vmem>>, vector<1x1x128xf32>
    %1059 = vector.shape_cast %1058 : vector<1x1x128xf32> to vector<128xf32>
    %1060 = vector.shape_cast %1057 : vector<128xf32> to vector<1x1x128xf32>
    tpu.vector_store %arg13[%c7_675, %c4_676, %c0_677], %1060 {strides = array<i32>} : memref<8x16x128xf32, #tpu.memory_space<vmem>>, vector<1x1x128xf32>,
    %c5_i32_678 = arith.constant 5 : i32
    %1061 = arith.addi %7, %c5_i32_678 : i32
    %1062 = arith.index_cast %1061 : i32 to index
    %c7_679 = arith.constant 7 : index
    %1063 = memref.load %arg1[%1062, %c7_679] : memref<16x8xi32, #tpu.memory_space<smem>>
    %1064 = arith.index_cast %1063 : i32 to index
    %c0_680 = arith.constant 0 : index
    %1065 = vector.load %arg12[%1064, %c0_680] : memref<32x128xf32, #tpu.memory_space<vmem>>, vector<1x128xf32>
    %1066 = vector.shape_cast %1065 : vector<1x128xf32> to vector<128xf32>
    %c7_681 = arith.constant 7 : index
    %c5_682 = arith.constant 5 : index
    %c0_683 = arith.constant 0 : index
    %1067 = vector.load %arg13[%c7_681, %c5_682, %c0_683] : memref<8x16x128xf32, #tpu.memory_space<vmem>>, vector<1x1x128xf32>
    %1068 = vector.shape_cast %1067 : vector<1x1x128xf32> to vector<128xf32>
    %1069 = vector.shape_cast %1066 : vector<128xf32> to vector<1x1x128xf32>
    tpu.vector_store %arg13[%c7_681, %c5_682, %c0_683], %1069 {strides = array<i32>} : memref<8x16x128xf32, #tpu.memory_space<vmem>>, vector<1x1x128xf32>,
    %c6_i32_684 = arith.constant 6 : i32
    %1070 = arith.addi %7, %c6_i32_684 : i32
    %1071 = arith.index_cast %1070 : i32 to index
    %c7_685 = arith.constant 7 : index
    %1072 = memref.load %arg1[%1071, %c7_685] : memref<16x8xi32, #tpu.memory_space<smem>>
    %1073 = arith.index_cast %1072 : i32 to index
    %c0_686 = arith.constant 0 : index
    %1074 = vector.load %arg12[%1073, %c0_686] : memref<32x128xf32, #tpu.memory_space<vmem>>, vector<1x128xf32>
    %1075 = vector.shape_cast %1074 : vector<1x128xf32> to vector<128xf32>
    %c7_687 = arith.constant 7 : index
    %c6_688 = arith.constant 6 : index
    %c0_689 = arith.constant 0 : index
    %1076 = vector.load %arg13[%c7_687, %c6_688, %c0_689] : memref<8x16x128xf32, #tpu.memory_space<vmem>>, vector<1x1x128xf32>
    %1077 = vector.shape_cast %1076 : vector<1x1x128xf32> to vector<128xf32>
    %1078 = vector.shape_cast %1075 : vector<128xf32> to vector<1x1x128xf32>
    tpu.vector_store %arg13[%c7_687, %c6_688, %c0_689], %1078 {strides = array<i32>} : memref<8x16x128xf32, #tpu.memory_space<vmem>>, vector<1x1x128xf32>,
    %c7_i32_690 = arith.constant 7 : i32
    %1079 = arith.addi %7, %c7_i32_690 : i32
    %1080 = arith.index_cast %1079 : i32 to index
    %c7_691 = arith.constant 7 : index
    %1081 = memref.load %arg1[%1080, %c7_691] : memref<16x8xi32, #tpu.memory_space<smem>>
    %1082 = arith.index_cast %1081 : i32 to index
    %c0_692 = arith.constant 0 : index
    %1083 = vector.load %arg12[%1082, %c0_692] : memref<32x128xf32, #tpu.memory_space<vmem>>, vector<1x128xf32>
    %1084 = vector.shape_cast %1083 : vector<1x128xf32> to vector<128xf32>
    %c7_693 = arith.constant 7 : index
    %c7_694 = arith.constant 7 : index
    %c0_695 = arith.constant 0 : index
    %1085 = vector.load %arg13[%c7_693, %c7_694, %c0_695] : memref<8x16x128xf32, #tpu.memory_space<vmem>>, vector<1x1x128xf32>
    %1086 = vector.shape_cast %1085 : vector<1x1x128xf32> to vector<128xf32>
    %1087 = vector.shape_cast %1084 : vector<128xf32> to vector<1x1x128xf32>
    tpu.vector_store %arg13[%c7_693, %c7_694, %c0_695], %1087 {strides = array<i32>} : memref<8x16x128xf32, #tpu.memory_space<vmem>>, vector<1x1x128xf32>,
    %c8_i32_696 = arith.constant 8 : i32
    %1088 = arith.addi %7, %c8_i32_696 : i32
    %1089 = arith.index_cast %1088 : i32 to index
    %c7_697 = arith.constant 7 : index
    %1090 = memref.load %arg1[%1089, %c7_697] : memref<16x8xi32, #tpu.memory_space<smem>>
    %1091 = arith.index_cast %1090 : i32 to index
    %c0_698 = arith.constant 0 : index
    %1092 = vector.load %arg12[%1091, %c0_698] : memref<32x128xf32, #tpu.memory_space<vmem>>, vector<1x128xf32>
    %1093 = vector.shape_cast %1092 : vector<1x128xf32> to vector<128xf32>
    %c7_699 = arith.constant 7 : index
    %c8_700 = arith.constant 8 : index
    %c0_701 = arith.constant 0 : index
    %1094 = vector.load %arg13[%c7_699, %c8_700, %c0_701] : memref<8x16x128xf32, #tpu.memory_space<vmem>>, vector<1x1x128xf32>
    %1095 = vector.shape_cast %1094 : vector<1x1x128xf32> to vector<128xf32>
    %1096 = vector.shape_cast %1093 : vector<128xf32> to vector<1x1x128xf32>
    tpu.vector_store %arg13[%c7_699, %c8_700, %c0_701], %1096 {strides = array<i32>} : memref<8x16x128xf32, #tpu.memory_space<vmem>>, vector<1x1x128xf32>,
    %c9_i32_702 = arith.constant 9 : i32
    %1097 = arith.addi %7, %c9_i32_702 : i32
    %1098 = arith.index_cast %1097 : i32 to index
    %c7_703 = arith.constant 7 : index
    %1099 = memref.load %arg1[%1098, %c7_703] : memref<16x8xi32, #tpu.memory_space<smem>>
    %1100 = arith.index_cast %1099 : i32 to index
    %c0_704 = arith.constant 0 : index
    %1101 = vector.load %arg12[%1100, %c0_704] : memref<32x128xf32, #tpu.memory_space<vmem>>, vector<1x128xf32>
    %1102 = vector.shape_cast %1101 : vector<1x128xf32> to vector<128xf32>
    %c7_705 = arith.constant 7 : index
    %c9_706 = arith.constant 9 : index
    %c0_707 = arith.constant 0 : index
    %1103 = vector.load %arg13[%c7_705, %c9_706, %c0_707] : memref<8x16x128xf32, #tpu.memory_space<vmem>>, vector<1x1x128xf32>
    %1104 = vector.shape_cast %1103 : vector<1x1x128xf32> to vector<128xf32>
    %1105 = vector.shape_cast %1102 : vector<128xf32> to vector<1x1x128xf32>
    tpu.vector_store %arg13[%c7_705, %c9_706, %c0_707], %1105 {strides = array<i32>} : memref<8x16x128xf32, #tpu.memory_space<vmem>>, vector<1x1x128xf32>,
    %c10_i32_708 = arith.constant 10 : i32
    %1106 = arith.addi %7, %c10_i32_708 : i32
    %1107 = arith.index_cast %1106 : i32 to index
    %c7_709 = arith.constant 7 : index
    %1108 = memref.load %arg1[%1107, %c7_709] : memref<16x8xi32, #tpu.memory_space<smem>>
    %1109 = arith.index_cast %1108 : i32 to index
    %c0_710 = arith.constant 0 : index
    %1110 = vector.load %arg12[%1109, %c0_710] : memref<32x128xf32, #tpu.memory_space<vmem>>, vector<1x128xf32>
    %1111 = vector.shape_cast %1110 : vector<1x128xf32> to vector<128xf32>
    %c7_711 = arith.constant 7 : index
    %c10_712 = arith.constant 10 : index
    %c0_713 = arith.constant 0 : index
    %1112 = vector.load %arg13[%c7_711, %c10_712, %c0_713] : memref<8x16x128xf32, #tpu.memory_space<vmem>>, vector<1x1x128xf32>
    %1113 = vector.shape_cast %1112 : vector<1x1x128xf32> to vector<128xf32>
    %1114 = vector.shape_cast %1111 : vector<128xf32> to vector<1x1x128xf32>
    tpu.vector_store %arg13[%c7_711, %c10_712, %c0_713], %1114 {strides = array<i32>} : memref<8x16x128xf32, #tpu.memory_space<vmem>>, vector<1x1x128xf32>,
    %c11_i32_714 = arith.constant 11 : i32
    %1115 = arith.addi %7, %c11_i32_714 : i32
    %1116 = arith.index_cast %1115 : i32 to index
    %c7_715 = arith.constant 7 : index
    %1117 = memref.load %arg1[%1116, %c7_715] : memref<16x8xi32, #tpu.memory_space<smem>>
    %1118 = arith.index_cast %1117 : i32 to index
    %c0_716 = arith.constant 0 : index
    %1119 = vector.load %arg12[%1118, %c0_716] : memref<32x128xf32, #tpu.memory_space<vmem>>, vector<1x128xf32>
    %1120 = vector.shape_cast %1119 : vector<1x128xf32> to vector<128xf32>
    %c7_717 = arith.constant 7 : index
    %c11_718 = arith.constant 11 : index
    %c0_719 = arith.constant 0 : index
    %1121 = vector.load %arg13[%c7_717, %c11_718, %c0_719] : memref<8x16x128xf32, #tpu.memory_space<vmem>>, vector<1x1x128xf32>
    %1122 = vector.shape_cast %1121 : vector<1x1x128xf32> to vector<128xf32>
    %1123 = vector.shape_cast %1120 : vector<128xf32> to vector<1x1x128xf32>
    tpu.vector_store %arg13[%c7_717, %c11_718, %c0_719], %1123 {strides = array<i32>} : memref<8x16x128xf32, #tpu.memory_space<vmem>>, vector<1x1x128xf32>,
    %c12_i32_720 = arith.constant 12 : i32
    %1124 = arith.addi %7, %c12_i32_720 : i32
    %1125 = arith.index_cast %1124 : i32 to index
    %c7_721 = arith.constant 7 : index
    %1126 = memref.load %arg1[%1125, %c7_721] : memref<16x8xi32, #tpu.memory_space<smem>>
    %1127 = arith.index_cast %1126 : i32 to index
    %c0_722 = arith.constant 0 : index
    %1128 = vector.load %arg12[%1127, %c0_722] : memref<32x128xf32, #tpu.memory_space<vmem>>, vector<1x128xf32>
    %1129 = vector.shape_cast %1128 : vector<1x128xf32> to vector<128xf32>
    %c7_723 = arith.constant 7 : index
    %c12_724 = arith.constant 12 : index
    %c0_725 = arith.constant 0 : index
    %1130 = vector.load %arg13[%c7_723, %c12_724, %c0_725] : memref<8x16x128xf32, #tpu.memory_space<vmem>>, vector<1x1x128xf32>
    %1131 = vector.shape_cast %1130 : vector<1x1x128xf32> to vector<128xf32>
    %1132 = vector.shape_cast %1129 : vector<128xf32> to vector<1x1x128xf32>
    tpu.vector_store %arg13[%c7_723, %c12_724, %c0_725], %1132 {strides = array<i32>} : memref<8x16x128xf32, #tpu.memory_space<vmem>>, vector<1x1x128xf32>,
    %c13_i32_726 = arith.constant 13 : i32
    %1133 = arith.addi %7, %c13_i32_726 : i32
    %1134 = arith.index_cast %1133 : i32 to index
    %c7_727 = arith.constant 7 : index
    %1135 = memref.load %arg1[%1134, %c7_727] : memref<16x8xi32, #tpu.memory_space<smem>>
    %1136 = arith.index_cast %1135 : i32 to index
    %c0_728 = arith.constant 0 : index
    %1137 = vector.load %arg12[%1136, %c0_728] : memref<32x128xf32, #tpu.memory_space<vmem>>, vector<1x128xf32>
    %1138 = vector.shape_cast %1137 : vector<1x128xf32> to vector<128xf32>
    %c7_729 = arith.constant 7 : index
    %c13_730 = arith.constant 13 : index
    %c0_731 = arith.constant 0 : index
    %1139 = vector.load %arg13[%c7_729, %c13_730, %c0_731] : memref<8x16x128xf32, #tpu.memory_space<vmem>>, vector<1x1x128xf32>
    %1140 = vector.shape_cast %1139 : vector<1x1x128xf32> to vector<128xf32>
    %1141 = vector.shape_cast %1138 : vector<128xf32> to vector<1x1x128xf32>
    tpu.vector_store %arg13[%c7_729, %c13_730, %c0_731], %1141 {strides = array<i32>} : memref<8x16x128xf32, #tpu.memory_space<vmem>>, vector<1x1x128xf32>,
    %c14_i32_732 = arith.constant 14 : i32
    %1142 = arith.addi %7, %c14_i32_732 : i32
    %1143 = arith.index_cast %1142 : i32 to index
    %c7_733 = arith.constant 7 : index
    %1144 = memref.load %arg1[%1143, %c7_733] : memref<16x8xi32, #tpu.memory_space<smem>>
    %1145 = arith.index_cast %1144 : i32 to index
    %c0_734 = arith.constant 0 : index
    %1146 = vector.load %arg12[%1145, %c0_734] : memref<32x128xf32, #tpu.memory_space<vmem>>, vector<1x128xf32>
    %1147 = vector.shape_cast %1146 : vector<1x128xf32> to vector<128xf32>
    %c7_735 = arith.constant 7 : index
    %c14_736 = arith.constant 14 : index
    %c0_737 = arith.constant 0 : index
    %1148 = vector.load %arg13[%c7_735, %c14_736, %c0_737] : memref<8x16x128xf32, #tpu.memory_space<vmem>>, vector<1x1x128xf32>
    %1149 = vector.shape_cast %1148 : vector<1x1x128xf32> to vector<128xf32>
    %1150 = vector.shape_cast %1147 : vector<128xf32> to vector<1x1x128xf32>
    tpu.vector_store %arg13[%c7_735, %c14_736, %c0_737], %1150 {strides = array<i32>} : memref<8x16x128xf32, #tpu.memory_space<vmem>>, vector<1x1x128xf32>,
    %c15_i32_738 = arith.constant 15 : i32
    %1151 = arith.addi %7, %c15_i32_738 : i32
    %1152 = arith.index_cast %1151 : i32 to index
    %c7_739 = arith.constant 7 : index
    %1153 = memref.load %arg1[%1152, %c7_739] : memref<16x8xi32, #tpu.memory_space<smem>>
    %1154 = arith.index_cast %1153 : i32 to index
    %c0_740 = arith.constant 0 : index
    %1155 = vector.load %arg12[%1154, %c0_740] : memref<32x128xf32, #tpu.memory_space<vmem>>, vector<1x128xf32>
    %1156 = vector.shape_cast %1155 : vector<1x128xf32> to vector<128xf32>
    %c7_741 = arith.constant 7 : index
    %c15_742 = arith.constant 15 : index
    %c0_743 = arith.constant 0 : index
    %1157 = vector.load %arg13[%c7_741, %c15_742, %c0_743] : memref<8x16x128xf32, #tpu.memory_space<vmem>>, vector<1x1x128xf32>
    %1158 = vector.shape_cast %1157 : vector<1x1x128xf32> to vector<128xf32>
    %1159 = vector.shape_cast %1156 : vector<128xf32> to vector<1x1x128xf32>
    tpu.vector_store %arg13[%c7_741, %c15_742, %c0_743], %1159 {strides = array<i32>} : memref<8x16x128xf32, #tpu.memory_space<vmem>>, vector<1x1x128xf32>,
    %c0_744 = arith.constant 0 : index
    %c0_745 = arith.constant 0 : index
    %1160 = vector.load %arg6[%c0_744, %c0_745] : memref<256x256xf32, #tpu.memory_space<vmem>>, vector<256x256xf32>
    %c0_746 = arith.constant 0 : index
    %c0_747 = arith.constant 0 : index
    %1161 = vector.load %arg7[%c0_746, %c0_747] : memref<1x128xf32, #tpu.memory_space<vmem>>, vector<1x128xf32>
    %c0_748 = arith.constant 0 : index
    %c0_749 = arith.constant 0 : index
    %c0_750 = arith.constant 0 : index
    %1162 = vector.load %arg13[%c0_748, %c0_749, %c0_750] : memref<8x16x128xf32, #tpu.memory_space<vmem>>, vector<1x16x128xf32>
    %1163 = vector.shape_cast %1162 : vector<1x16x128xf32> to vector<16x128xf32>
    %c0_751 = arith.constant 0 : index
    %c0_752 = arith.constant 0 : index
    %c0_753 = arith.constant 0 : index
    %1164 = vector.load %arg2[%c0_751, %c0_752, %c0_753] : memref<2x16x128xf32, #tpu.memory_space<vmem>>, vector<1x16x128xf32>
    %1165 = vector.shape_cast %1164 : vector<1x16x128xf32> to vector<16x128xf32>
    %c0_754 = arith.constant 0 : index
    %c0_755 = arith.constant 0 : index
    %1166 = vector.load %arg6[%c0_754, %c0_755] : memref<256x256xf32, #tpu.memory_space<vmem>>, vector<128x128xf32>
    %cst_756 = arith.constant dense<0.000000e+00> : vector<16x128xf32>
    %1167 = tpu.matmul %1165, %1166, %cst_756 {dimension_numbers = #tpu.dot_dimension_numbers<[1], [0], [0], [1], [0, 0, 1, 1], [], []>} : vector<16x128xf32>, vector<128x128xf32>, vector<16x128xf32> -> vector<16x128xf32>
    %1168 = arith.addf %1163, %1167 : vector<16x128xf32>
    %1169 = math.tanh %1168 : vector<16x128xf32>
    %c1_757 = arith.constant 1 : index
    %c0_758 = arith.constant 0 : index
    %c0_759 = arith.constant 0 : index
    %1170 = vector.load %arg2[%c1_757, %c0_758, %c0_759] : memref<2x16x128xf32, #tpu.memory_space<vmem>>, vector<1x16x128xf32>
    %1171 = vector.shape_cast %1170 : vector<1x16x128xf32> to vector<16x128xf32>
    %1172 = tpu.concatenate %1169, %1171 in 1 : vector<16x128xf32>, vector<16x128xf32> -> vector<16x256xf32>
    %c0_i32_760 = arith.constant 0 : i32
    %cst_761 = arith.constant dense<0.000000e+00> : vector<16x256xf32>
    %1173 = tpu.matmul %1172, %1160, %cst_761 {dimension_numbers = #tpu.dot_dimension_numbers<[1], [0], [0], [1], [0, 0, 1, 1], [], []>} : vector<16x256xf32>, vector<256x256xf32>, vector<16x256xf32> -> vector<16x256xf32>
    %1174 = vector.extract_strided_slice %1173 {offsets = [0, 128], sizes = [16, 128], strides = [1, 1]} : vector<16x256xf32> to vector<16x128xf32>
    %1175 = vector.broadcast %1161 : vector<1x128xf32> to vector<16x128xf32>
    %1176 = arith.addf %1174, %1175 : vector<16x128xf32>
    %1177 = math.tanh %1176 : vector<16x128xf32>
    %c1_i32_762 = arith.constant 1 : i32
    %1178 = arith.addi %c0_i32_760, %c1_i32_762 : i32
    %1179 = arith.index_cast %1178 : i32 to index
    %c0_763 = arith.constant 0 : index
    %c0_764 = arith.constant 0 : index
    %1180 = vector.load %arg13[%1179, %c0_763, %c0_764] : memref<8x16x128xf32, #tpu.memory_space<vmem>>, vector<1x16x128xf32>
    %1181 = vector.shape_cast %1180 : vector<1x16x128xf32> to vector<16x128xf32>
    %1182 = arith.index_cast %c0_i32_760 : i32 to index
    %c0_765 = arith.constant 0 : index
    %c0_766 = arith.constant 0 : index
    %1183 = vector.load %arg13[%1182, %c0_765, %c0_766] : memref<8x16x128xf32, #tpu.memory_space<vmem>>, vector<1x16x128xf32>
    %1184 = vector.shape_cast %1183 : vector<1x16x128xf32> to vector<16x128xf32>
    %1185 = vector.shape_cast %1177 : vector<16x128xf32> to vector<1x16x128xf32>
    tpu.vector_store %arg13[%1182, %c0_765, %c0_766], %1185 {strides = array<i32>} : memref<8x16x128xf32, #tpu.memory_space<vmem>>, vector<1x16x128xf32>,
    %1186 = vector.extract_strided_slice %1173 {offsets = [0, 0], sizes = [16, 128], strides = [1, 1]} : vector<16x256xf32> to vector<16x128xf32>
    %1187 = arith.addf %1186, %1181 : vector<16x128xf32>
    %1188 = math.tanh %1187 : vector<16x128xf32>
    %1189 = tpu.concatenate %1188, %1177 in 1 : vector<16x128xf32>, vector<16x128xf32> -> vector<16x256xf32>
    %c1_i32_767 = arith.constant 1 : i32
    %cst_768 = arith.constant dense<0.000000e+00> : vector<16x256xf32>
    %1190 = tpu.matmul %1189, %1160, %cst_768 {dimension_numbers = #tpu.dot_dimension_numbers<[1], [0], [0], [1], [0, 0, 1, 1], [], []>} : vector<16x256xf32>, vector<256x256xf32>, vector<16x256xf32> -> vector<16x256xf32>
    %1191 = vector.extract_strided_slice %1190 {offsets = [0, 128], sizes = [16, 128], strides = [1, 1]} : vector<16x256xf32> to vector<16x128xf32>
    %1192 = vector.broadcast %1161 : vector<1x128xf32> to vector<16x128xf32>
    %1193 = arith.addf %1191, %1192 : vector<16x128xf32>
    %1194 = math.tanh %1193 : vector<16x128xf32>
    %c1_i32_769 = arith.constant 1 : i32
    %1195 = arith.addi %c1_i32_767, %c1_i32_769 : i32
    %1196 = arith.index_cast %1195 : i32 to index
    %c0_770 = arith.constant 0 : index
    %c0_771 = arith.constant 0 : index
    %1197 = vector.load %arg13[%1196, %c0_770, %c0_771] : memref<8x16x128xf32, #tpu.memory_space<vmem>>, vector<1x16x128xf32>
    %1198 = vector.shape_cast %1197 : vector<1x16x128xf32> to vector<16x128xf32>
    %1199 = arith.index_cast %c1_i32_767 : i32 to index
    %c0_772 = arith.constant 0 : index
    %c0_773 = arith.constant 0 : index
    %1200 = vector.load %arg13[%1199, %c0_772, %c0_773] : memref<8x16x128xf32, #tpu.memory_space<vmem>>, vector<1x16x128xf32>
    %1201 = vector.shape_cast %1200 : vector<1x16x128xf32> to vector<16x128xf32>
    %1202 = vector.shape_cast %1194 : vector<16x128xf32> to vector<1x16x128xf32>
    tpu.vector_store %arg13[%1199, %c0_772, %c0_773], %1202 {strides = array<i32>} : memref<8x16x128xf32, #tpu.memory_space<vmem>>, vector<1x16x128xf32>,
    %1203 = vector.extract_strided_slice %1190 {offsets = [0, 0], sizes = [16, 128], strides = [1, 1]} : vector<16x256xf32> to vector<16x128xf32>
    %1204 = arith.addf %1203, %1198 : vector<16x128xf32>
    %1205 = math.tanh %1204 : vector<16x128xf32>
    %1206 = tpu.concatenate %1205, %1194 in 1 : vector<16x128xf32>, vector<16x128xf32> -> vector<16x256xf32>
    %c2_i32_774 = arith.constant 2 : i32
    %cst_775 = arith.constant dense<0.000000e+00> : vector<16x256xf32>
    %1207 = tpu.matmul %1206, %1160, %cst_775 {dimension_numbers = #tpu.dot_dimension_numbers<[1], [0], [0], [1], [0, 0, 1, 1], [], []>} : vector<16x256xf32>, vector<256x256xf32>, vector<16x256xf32> -> vector<16x256xf32>
    %1208 = vector.extract_strided_slice %1207 {offsets = [0, 128], sizes = [16, 128], strides = [1, 1]} : vector<16x256xf32> to vector<16x128xf32>
    %1209 = vector.broadcast %1161 : vector<1x128xf32> to vector<16x128xf32>
    %1210 = arith.addf %1208, %1209 : vector<16x128xf32>
    %1211 = math.tanh %1210 : vector<16x128xf32>
    %c1_i32_776 = arith.constant 1 : i32
    %1212 = arith.addi %c2_i32_774, %c1_i32_776 : i32
    %1213 = arith.index_cast %1212 : i32 to index
    %c0_777 = arith.constant 0 : index
    %c0_778 = arith.constant 0 : index
    %1214 = vector.load %arg13[%1213, %c0_777, %c0_778] : memref<8x16x128xf32, #tpu.memory_space<vmem>>, vector<1x16x128xf32>
    %1215 = vector.shape_cast %1214 : vector<1x16x128xf32> to vector<16x128xf32>
    %1216 = arith.index_cast %c2_i32_774 : i32 to index
    %c0_779 = arith.constant 0 : index
    %c0_780 = arith.constant 0 : index
    %1217 = vector.load %arg13[%1216, %c0_779, %c0_780] : memref<8x16x128xf32, #tpu.memory_space<vmem>>, vector<1x16x128xf32>
    %1218 = vector.shape_cast %1217 : vector<1x16x128xf32> to vector<16x128xf32>
    %1219 = vector.shape_cast %1211 : vector<16x128xf32> to vector<1x16x128xf32>
    tpu.vector_store %arg13[%1216, %c0_779, %c0_780], %1219 {strides = array<i32>} : memref<8x16x128xf32, #tpu.memory_space<vmem>>, vector<1x16x128xf32>,
    %1220 = vector.extract_strided_slice %1207 {offsets = [0, 0], sizes = [16, 128], strides = [1, 1]} : vector<16x256xf32> to vector<16x128xf32>
    %1221 = arith.addf %1220, %1215 : vector<16x128xf32>
    %1222 = math.tanh %1221 : vector<16x128xf32>
    %1223 = tpu.concatenate %1222, %1211 in 1 : vector<16x128xf32>, vector<16x128xf32> -> vector<16x256xf32>
    %c3_i32_781 = arith.constant 3 : i32
    %cst_782 = arith.constant dense<0.000000e+00> : vector<16x256xf32>
    %1224 = tpu.matmul %1223, %1160, %cst_782 {dimension_numbers = #tpu.dot_dimension_numbers<[1], [0], [0], [1], [0, 0, 1, 1], [], []>} : vector<16x256xf32>, vector<256x256xf32>, vector<16x256xf32> -> vector<16x256xf32>
    %1225 = vector.extract_strided_slice %1224 {offsets = [0, 128], sizes = [16, 128], strides = [1, 1]} : vector<16x256xf32> to vector<16x128xf32>
    %1226 = vector.broadcast %1161 : vector<1x128xf32> to vector<16x128xf32>
    %1227 = arith.addf %1225, %1226 : vector<16x128xf32>
    %1228 = math.tanh %1227 : vector<16x128xf32>
    %c1_i32_783 = arith.constant 1 : i32
    %1229 = arith.addi %c3_i32_781, %c1_i32_783 : i32
    %1230 = arith.index_cast %1229 : i32 to index
    %c0_784 = arith.constant 0 : index
    %c0_785 = arith.constant 0 : index
    %1231 = vector.load %arg13[%1230, %c0_784, %c0_785] : memref<8x16x128xf32, #tpu.memory_space<vmem>>, vector<1x16x128xf32>
    %1232 = vector.shape_cast %1231 : vector<1x16x128xf32> to vector<16x128xf32>
    %1233 = arith.index_cast %c3_i32_781 : i32 to index
    %c0_786 = arith.constant 0 : index
    %c0_787 = arith.constant 0 : index
    %1234 = vector.load %arg13[%1233, %c0_786, %c0_787] : memref<8x16x128xf32, #tpu.memory_space<vmem>>, vector<1x16x128xf32>
    %1235 = vector.shape_cast %1234 : vector<1x16x128xf32> to vector<16x128xf32>
    %1236 = vector.shape_cast %1228 : vector<16x128xf32> to vector<1x16x128xf32>
    tpu.vector_store %arg13[%1233, %c0_786, %c0_787], %1236 {strides = array<i32>} : memref<8x16x128xf32, #tpu.memory_space<vmem>>, vector<1x16x128xf32>,
    %1237 = vector.extract_strided_slice %1224 {offsets = [0, 0], sizes = [16, 128], strides = [1, 1]} : vector<16x256xf32> to vector<16x128xf32>
    %1238 = arith.addf %1237, %1232 : vector<16x128xf32>
    %1239 = math.tanh %1238 : vector<16x128xf32>
    %1240 = tpu.concatenate %1239, %1228 in 1 : vector<16x128xf32>, vector<16x128xf32> -> vector<16x256xf32>
    %c4_i32_788 = arith.constant 4 : i32
    %cst_789 = arith.constant dense<0.000000e+00> : vector<16x256xf32>
    %1241 = tpu.matmul %1240, %1160, %cst_789 {dimension_numbers = #tpu.dot_dimension_numbers<[1], [0], [0], [1], [0, 0, 1, 1], [], []>} : vector<16x256xf32>, vector<256x256xf32>, vector<16x256xf32> -> vector<16x256xf32>
    %1242 = vector.extract_strided_slice %1241 {offsets = [0, 128], sizes = [16, 128], strides = [1, 1]} : vector<16x256xf32> to vector<16x128xf32>
    %1243 = vector.broadcast %1161 : vector<1x128xf32> to vector<16x128xf32>
    %1244 = arith.addf %1242, %1243 : vector<16x128xf32>
    %1245 = math.tanh %1244 : vector<16x128xf32>
    %c1_i32_790 = arith.constant 1 : i32
    %1246 = arith.addi %c4_i32_788, %c1_i32_790 : i32
    %1247 = arith.index_cast %1246 : i32 to index
    %c0_791 = arith.constant 0 : index
    %c0_792 = arith.constant 0 : index
    %1248 = vector.load %arg13[%1247, %c0_791, %c0_792] : memref<8x16x128xf32, #tpu.memory_space<vmem>>, vector<1x16x128xf32>
    %1249 = vector.shape_cast %1248 : vector<1x16x128xf32> to vector<16x128xf32>
    %1250 = arith.index_cast %c4_i32_788 : i32 to index
    %c0_793 = arith.constant 0 : index
    %c0_794 = arith.constant 0 : index
    %1251 = vector.load %arg13[%1250, %c0_793, %c0_794] : memref<8x16x128xf32, #tpu.memory_space<vmem>>, vector<1x16x128xf32>
    %1252 = vector.shape_cast %1251 : vector<1x16x128xf32> to vector<16x128xf32>
    %1253 = vector.shape_cast %1245 : vector<16x128xf32> to vector<1x16x128xf32>
    tpu.vector_store %arg13[%1250, %c0_793, %c0_794], %1253 {strides = array<i32>} : memref<8x16x128xf32, #tpu.memory_space<vmem>>, vector<1x16x128xf32>,
    %1254 = vector.extract_strided_slice %1241 {offsets = [0, 0], sizes = [16, 128], strides = [1, 1]} : vector<16x256xf32> to vector<16x128xf32>
    %1255 = arith.addf %1254, %1249 : vector<16x128xf32>
    %1256 = math.tanh %1255 : vector<16x128xf32>
    %1257 = tpu.concatenate %1256, %1245 in 1 : vector<16x128xf32>, vector<16x128xf32> -> vector<16x256xf32>
    %c5_i32_795 = arith.constant 5 : i32
    %cst_796 = arith.constant dense<0.000000e+00> : vector<16x256xf32>
    %1258 = tpu.matmul %1257, %1160, %cst_796 {dimension_numbers = #tpu.dot_dimension_numbers<[1], [0], [0], [1], [0, 0, 1, 1], [], []>} : vector<16x256xf32>, vector<256x256xf32>, vector<16x256xf32> -> vector<16x256xf32>
    %1259 = vector.extract_strided_slice %1258 {offsets = [0, 128], sizes = [16, 128], strides = [1, 1]} : vector<16x256xf32> to vector<16x128xf32>
    %1260 = vector.broadcast %1161 : vector<1x128xf32> to vector<16x128xf32>
    %1261 = arith.addf %1259, %1260 : vector<16x128xf32>
    %1262 = math.tanh %1261 : vector<16x128xf32>
    %c1_i32_797 = arith.constant 1 : i32
    %1263 = arith.addi %c5_i32_795, %c1_i32_797 : i32
    %1264 = arith.index_cast %1263 : i32 to index
    %c0_798 = arith.constant 0 : index
    %c0_799 = arith.constant 0 : index
    %1265 = vector.load %arg13[%1264, %c0_798, %c0_799] : memref<8x16x128xf32, #tpu.memory_space<vmem>>, vector<1x16x128xf32>
    %1266 = vector.shape_cast %1265 : vector<1x16x128xf32> to vector<16x128xf32>
    %1267 = arith.index_cast %c5_i32_795 : i32 to index
    %c0_800 = arith.constant 0 : index
    %c0_801 = arith.constant 0 : index
    %1268 = vector.load %arg13[%1267, %c0_800, %c0_801] : memref<8x16x128xf32, #tpu.memory_space<vmem>>, vector<1x16x128xf32>
    %1269 = vector.shape_cast %1268 : vector<1x16x128xf32> to vector<16x128xf32>
    %1270 = vector.shape_cast %1262 : vector<16x128xf32> to vector<1x16x128xf32>
    tpu.vector_store %arg13[%1267, %c0_800, %c0_801], %1270 {strides = array<i32>} : memref<8x16x128xf32, #tpu.memory_space<vmem>>, vector<1x16x128xf32>,
    %1271 = vector.extract_strided_slice %1258 {offsets = [0, 0], sizes = [16, 128], strides = [1, 1]} : vector<16x256xf32> to vector<16x128xf32>
    %1272 = arith.addf %1271, %1266 : vector<16x128xf32>
    %1273 = math.tanh %1272 : vector<16x128xf32>
    %1274 = tpu.concatenate %1273, %1262 in 1 : vector<16x128xf32>, vector<16x128xf32> -> vector<16x256xf32>
    %c6_i32_802 = arith.constant 6 : i32
    %cst_803 = arith.constant dense<0.000000e+00> : vector<16x256xf32>
    %1275 = tpu.matmul %1274, %1160, %cst_803 {dimension_numbers = #tpu.dot_dimension_numbers<[1], [0], [0], [1], [0, 0, 1, 1], [], []>} : vector<16x256xf32>, vector<256x256xf32>, vector<16x256xf32> -> vector<16x256xf32>
    %1276 = vector.extract_strided_slice %1275 {offsets = [0, 128], sizes = [16, 128], strides = [1, 1]} : vector<16x256xf32> to vector<16x128xf32>
    %1277 = vector.broadcast %1161 : vector<1x128xf32> to vector<16x128xf32>
    %1278 = arith.addf %1276, %1277 : vector<16x128xf32>
    %1279 = math.tanh %1278 : vector<16x128xf32>
    %c1_i32_804 = arith.constant 1 : i32
    %1280 = arith.addi %c6_i32_802, %c1_i32_804 : i32
    %1281 = arith.index_cast %1280 : i32 to index
    %c0_805 = arith.constant 0 : index
    %c0_806 = arith.constant 0 : index
    %1282 = vector.load %arg13[%1281, %c0_805, %c0_806] : memref<8x16x128xf32, #tpu.memory_space<vmem>>, vector<1x16x128xf32>
    %1283 = vector.shape_cast %1282 : vector<1x16x128xf32> to vector<16x128xf32>
    %1284 = arith.index_cast %c6_i32_802 : i32 to index
    %c0_807 = arith.constant 0 : index
    %c0_808 = arith.constant 0 : index
    %1285 = vector.load %arg13[%1284, %c0_807, %c0_808] : memref<8x16x128xf32, #tpu.memory_space<vmem>>, vector<1x16x128xf32>
    %1286 = vector.shape_cast %1285 : vector<1x16x128xf32> to vector<16x128xf32>
    %1287 = vector.shape_cast %1279 : vector<16x128xf32> to vector<1x16x128xf32>
    tpu.vector_store %arg13[%1284, %c0_807, %c0_808], %1287 {strides = array<i32>} : memref<8x16x128xf32, #tpu.memory_space<vmem>>, vector<1x16x128xf32>,
    %1288 = vector.extract_strided_slice %1275 {offsets = [0, 0], sizes = [16, 128], strides = [1, 1]} : vector<16x256xf32> to vector<16x128xf32>
    %1289 = arith.addf %1288, %1283 : vector<16x128xf32>
    %1290 = math.tanh %1289 : vector<16x128xf32>
    %1291 = tpu.concatenate %1290, %1279 in 1 : vector<16x128xf32>, vector<16x128xf32> -> vector<16x256xf32>
    %c7_i32_809 = arith.constant 7 : i32
    %cst_810 = arith.constant dense<0.000000e+00> : vector<16x256xf32>
    %1292 = tpu.matmul %1291, %1160, %cst_810 {dimension_numbers = #tpu.dot_dimension_numbers<[1], [0], [0], [1], [0, 0, 1, 1], [], []>} : vector<16x256xf32>, vector<256x256xf32>, vector<16x256xf32> -> vector<16x256xf32>
    %1293 = vector.extract_strided_slice %1292 {offsets = [0, 128], sizes = [16, 128], strides = [1, 1]} : vector<16x256xf32> to vector<16x128xf32>
    %1294 = vector.broadcast %1161 : vector<1x128xf32> to vector<16x128xf32>
    %1295 = arith.addf %1293, %1294 : vector<16x128xf32>
    %1296 = math.tanh %1295 : vector<16x128xf32>
    %c7_811 = arith.constant 7 : index
    %c0_812 = arith.constant 0 : index
    %c0_813 = arith.constant 0 : index
    %1297 = vector.load %arg13[%c7_811, %c0_812, %c0_813] : memref<8x16x128xf32, #tpu.memory_space<vmem>>, vector<1x16x128xf32>
    %1298 = vector.shape_cast %1297 : vector<1x16x128xf32> to vector<16x128xf32>
    %1299 = vector.shape_cast %1296 : vector<16x128xf32> to vector<1x16x128xf32>
    tpu.vector_store %arg13[%c7_811, %c0_812, %c0_813], %1299 {strides = array<i32>} : memref<8x16x128xf32, #tpu.memory_space<vmem>>, vector<1x16x128xf32>,
    %1300 = vector.extract_strided_slice %1291 {offsets = [0, 0], sizes = [16, 128], strides = [1, 1]} : vector<16x256xf32> to vector<16x128xf32>
    %c0_814 = arith.constant 0 : index
    %c0_815 = arith.constant 0 : index
    %c0_816 = arith.constant 0 : index
    %1301 = vector.load %arg11[%c0_814, %c0_815, %c0_816] : memref<2x16x128xf32, #tpu.memory_space<vmem>>, vector<1x16x128xf32>
    %1302 = vector.shape_cast %1301 : vector<1x16x128xf32> to vector<16x128xf32>
    %1303 = vector.shape_cast %1300 : vector<16x128xf32> to vector<1x16x128xf32>
    tpu.vector_store %arg11[%c0_814, %c0_815, %c0_816], %1303 {strides = array<i32>} : memref<2x16x128xf32, #tpu.memory_space<vmem>>, vector<1x16x128xf32>,
    %c1_817 = arith.constant 1 : index
    %c0_818 = arith.constant 0 : index
    %c0_819 = arith.constant 0 : index
    %1304 = vector.load %arg11[%c1_817, %c0_818, %c0_819] : memref<2x16x128xf32, #tpu.memory_space<vmem>>, vector<1x16x128xf32>
    %1305 = vector.shape_cast %1304 : vector<1x16x128xf32> to vector<16x128xf32>
    %1306 = vector.shape_cast %1296 : vector<16x128xf32> to vector<1x16x128xf32>
    tpu.vector_store %arg11[%c1_817, %c0_818, %c0_819], %1306 {strides = array<i32>} : memref<2x16x128xf32, #tpu.memory_space<vmem>>, vector<1x16x128xf32>,
    %c0_820 = arith.constant 0 : index
    %c0_821 = arith.constant 0 : index
    %c0_822 = arith.constant 0 : index
    %1307 = vector.load %arg13[%c0_820, %c0_821, %c0_822] : memref<8x16x128xf32, #tpu.memory_space<vmem>>, vector<8x16x128xf32>
    %1308 = vector.shape_cast %1307 : vector<8x16x128xf32> to vector<128x128xf32>
    %c0_823 = arith.constant 0 : index
    %c0_824 = arith.constant 0 : index
    %1309 = vector.load %arg8[%c0_823, %c0_824] : memref<128x128xf32, #tpu.memory_space<vmem>>, vector<128x128xf32>
    %cst_825 = arith.constant dense<0.000000e+00> : vector<128x128xf32>
    %1310 = tpu.matmul %1308, %1309, %cst_825 {dimension_numbers = #tpu.dot_dimension_numbers<[1], [0], [0], [1], [0, 0, 1, 1], [], []>} : vector<128x128xf32>, vector<128x128xf32>, vector<128x128xf32> -> vector<128x128xf32>
    %c0_826 = arith.constant 0 : index
    %c0_827 = arith.constant 0 : index
    %1311 = vector.load %arg9[%c0_826, %c0_827] : memref<1x128xf32, #tpu.memory_space<vmem>>, vector<1x128xf32>
    %1312 = vector.broadcast %1311 : vector<1x128xf32> to vector<128x128xf32>
    %1313 = arith.addf %1310, %1312 : vector<128x128xf32>
    %1314 = vector.shape_cast %1313 : vector<128x128xf32> to vector<8x16x128xf32>
    %c0_828 = arith.constant 0 : index
    %c0_829 = arith.constant 0 : index
    %c0_830 = arith.constant 0 : index
    %1315 = vector.load %arg10[%c0_828, %c0_829, %c0_830] : memref<8x16x128xf32, #tpu.memory_space<vmem>>, vector<8x16x128xf32>
    tpu.vector_store %arg10[%c0_828, %c0_829, %c0_830], %1314 {strides = array<i32>} : memref<8x16x128xf32, #tpu.memory_space<vmem>>, vector<8x16x128xf32>,
    return
  }
  func.func @transform_0(%arg0: i32, %arg1: memref<16x8xi32, #tpu.memory_space<smem>>) -> (i32, i32, i32) {
    %c0_i32 = arith.constant 0 : i32
    %c0_i32_0 = arith.constant 0 : i32
    %c0_i32_1 = arith.constant 0 : i32
    return %c0_i32, %arg0, %c0_i32_0 : i32, i32, i32
  }
  func.func @transform_1(%arg0: i32, %arg1: memref<16x8xi32, #tpu.memory_space<smem>>) -> (i32, i32) {
    %c0_i32 = arith.constant 0 : i32
    %c0_i32_0 = arith.constant 0 : i32
    %c0_i32_1 = arith.constant 0 : i32
    return %c0_i32, %c0_i32_0 : i32, i32
  }
  func.func @transform_2(%arg0: i32, %arg1: memref<16x8xi32, #tpu.memory_space<smem>>) -> (i32, i32) {
    %c0_i32 = arith.constant 0 : i32
    %c0_i32_0 = arith.constant 0 : i32
    %c0_i32_1 = arith.constant 0 : i32
    return %c0_i32, %c0_i32_0 : i32, i32
  }
  func.func @transform_3(%arg0: i32, %arg1: memref<16x8xi32, #tpu.memory_space<smem>>) -> (i32, i32) {
    %c0_i32 = arith.constant 0 : i32
    %c0_i32_0 = arith.constant 0 : i32
    %c0_i32_1 = arith.constant 0 : i32
    return %c0_i32, %c0_i32_0 : i32, i32
  }
  func.func @transform_4(%arg0: i32, %arg1: memref<16x8xi32, #tpu.memory_space<smem>>) -> (i32, i32) {
    %c0_i32 = arith.constant 0 : i32
    %c0_i32_0 = arith.constant 0 : i32
    %c0_i32_1 = arith.constant 0 : i32
    return %c0_i32, %c0_i32_0 : i32, i32
  }
  func.func @transform_5(%arg0: i32, %arg1: memref<16x8xi32, #tpu.memory_space<smem>>) -> (i32, i32) {
    %c0_i32 = arith.constant 0 : i32
    %c0_i32_0 = arith.constant 0 : i32
    %c0_i32_1 = arith.constant 0 : i32
    return %c0_i32, %c0_i32_0 : i32, i32
  }
  func.func @transform_6(%arg0: i32, %arg1: memref<16x8xi32, #tpu.memory_space<smem>>) -> (i32, i32) {
    %c0_i32 = arith.constant 0 : i32
    %c0_i32_0 = arith.constant 0 : i32
    %c0_i32_1 = arith.constant 0 : i32
    return %c0_i32, %c0_i32_0 : i32, i32
  }
  func.func @transform_7(%arg0: i32, %arg1: memref<16x8xi32, #tpu.memory_space<smem>>) -> (i32, i32) {
    %c0_i32 = arith.constant 0 : i32
    %c0_i32_0 = arith.constant 0 : i32
    %c0_i32_1 = arith.constant 0 : i32
    return %c0_i32, %c0_i32_0 : i32, i32
  }
  func.func @transform_8(%arg0: i32, %arg1: memref<16x8xi32, #tpu.memory_space<smem>>) -> (i32, i32, i32) {
    %c0_i32 = arith.constant 0 : i32
    %c0_i32_0 = arith.constant 0 : i32
    %c0_i32_1 = arith.constant 0 : i32
    return %c0_i32, %arg0, %c0_i32_0 : i32, i32, i32
  }
  func.func @transform_9(%arg0: i32, %arg1: memref<16x8xi32, #tpu.memory_space<smem>>) -> (i32, i32, i32) {
    %c0_i32 = arith.constant 0 : i32
    %c0_i32_0 = arith.constant 0 : i32
    %c0_i32_1 = arith.constant 0 : i32
    return %c0_i32, %arg0, %c0_i32_0 : i32, i32, i32
  }
}

</mosaic_0001>

<llo_original>
// kernel: rnn_forward.1
$region0: #{rnn_forward.1}
  #allocation0 [shape = 'u32[]', space=smem, size = 0x4, offset = 0x4, fixed_abs, tag = 'smem constant byte address 0x4 - core index']
  #allocation1 [shape = 'u32[144,128]{1,0:T(1,128)}', space=vmem, size = 0x12000, scoped, tag = 'internal scratch']
  #allocation2 [shape = 'f32[32,128]{1,0:T(8,128)}', space=vmem, size = 0x4000, scoped, tag = 'scratch operand']
  #allocation3 [shape = 'f32[8,16,128]{2,1,0:T(8,128)}', space=vmem, size = 0x10000, scoped, tag = 'scratch operand']
  #allocation4 [shape = 's32[1]{0}', space=sflag, size = 0x4, scoped, tag = 'scoped memory for rnn_forward.1']
  #allocation5 [shape = 'u8[8192]{0}', space=smem, size = 0x2000, scoped, tag = 'prefetched SMEM operand 0']
  %s0 = inlined_call_operand.vmem [shape: s32[16,8], index: 0, kind: input, shape index: {}]
  %s1 = inlined_call_operand.vmem [shape: f32[2,16,128], index: 1, kind: input, shape index: {}]
  %s2 = inlined_call_operand.vmem [shape: f32[32,128], index: 2, kind: input, shape index: {}]
  %s3 = inlined_call_operand.vmem [shape: f32[128,128], index: 3, kind: input, shape index: {}]
  %s4 = inlined_call_operand.vmem [shape: f32[1,128], index: 4, kind: input, shape index: {}]
  %s5 = inlined_call_operand.vmem [shape: f32[256,256], index: 5, kind: input, shape index: {}]
  %s6 = inlined_call_operand.vmem [shape: f32[1,128], index: 6, kind: input, shape index: {}]
  %s7 = inlined_call_operand.vmem [shape: f32[128,128], index: 7, kind: input, shape index: {}]
  %s8 = inlined_call_operand.vmem [shape: f32[1,128], index: 8, kind: input, shape index: {}]
  %s9 = inlined_call_operand.vmem [shape: f32[8,16,128], index: 9, kind: output, shape index: {0}]
  %s10 = inlined_call_operand.vmem [shape: f32[2,16,128], index: 10, kind: output, shape index: {1}]
  %11 = xla_tuple %s9, %s10
  %s12 = sld [smem:[#allocation0]]
  $region50: #{rnn_forward.1} parent=0
    _
  %s14 = ssub.s32 1, %s12
  %s15 = scalar_select 0, %s14, %s12
  %s16 = sshll.u32 %s0, 4
  %s17 = int_to_ptr.vmem [resolvable:$true] %s16
  %19 = dma.vmem_to_smem %s17, 256, [#allocation5], [#allocation4]
  %20 = dma.done [#allocation4], 256
  %21 = sfence
  // Predicated region
  $region2: #{rnn_forward.1} parent=0 // pred_check
    _
  $region3: #{rnn_forward.1} parent=0 // pred_check_branch
    %23 = sbr.rel (0) target = $region5
  $region4: #{rnn_forward.1} parent=0 // pred_region
    _
  $region5: #{rnn_forward.1} parent=0 // pred_fallthru
    _
  // Predicated region
  $region6: #{rnn_forward.1} parent=0 // pred_check
    _
  $region7: #{rnn_forward.1} parent=0 // pred_check_branch
    %25 = sbr.rel (0) target = $region9
  $region8: #{rnn_forward.1} parent=0 // pred_region
    _
  $region9: #{rnn_forward.1} parent=0 // pred_fallthru
    _
  // Predicated region
  $region10: #{rnn_forward.1} parent=0 // pred_check
    _
  $region11: #{rnn_forward.1} parent=0 // pred_check_branch
    %27 = sbr.rel (0) target = $region13
  $region12: #{rnn_forward.1} parent=0 // pred_region
    _
  $region13: #{rnn_forward.1} parent=0 // pred_fallthru
    _
  // Predicated region
  $region14: #{rnn_forward.1} parent=0 // pred_check
    _
  $region15: #{rnn_forward.1} parent=0 // pred_check_branch
    %29 = sbr.rel (0) target = $region17
  $region16: #{rnn_forward.1} parent=0 // pred_region
    _
  $region17: #{rnn_forward.1} parent=0 // pred_fallthru
    _
  // Predicated region
  $region18: #{rnn_forward.1} parent=0 // pred_check
    _
  $region19: #{rnn_forward.1} parent=0 // pred_check_branch
    %31 = sbr.rel (0) target = $region21
  $region20: #{rnn_forward.1} parent=0 // pred_region
    _
  $region21: #{rnn_forward.1} parent=0 // pred_fallthru
    _
  // Predicated region
  $region22: #{rnn_forward.1} parent=0 // pred_check
    _
  $region23: #{rnn_forward.1} parent=0 // pred_check_branch
    %33 = sbr.rel (0) target = $region25
  $region24: #{rnn_forward.1} parent=0 // pred_region
    _
  $region25: #{rnn_forward.1} parent=0 // pred_fallthru
    _
  // Predicated region
  $region26: #{rnn_forward.1} parent=0 // pred_check
    _
  $region27: #{rnn_forward.1} parent=0 // pred_check_branch
    %35 = sbr.rel (0) target = $region29
  $region28: #{rnn_forward.1} parent=0 // pred_region
    _
  $region29: #{rnn_forward.1} parent=0 // pred_fallthru
    _
  // Predicated region
  $region30: #{rnn_forward.1} parent=0 // pred_check
    _
  $region31: #{rnn_forward.1} parent=0 // pred_check_branch
    %37 = sbr.rel (0) target = $region33
  $region32: #{rnn_forward.1} parent=0 // pred_region
    _
  $region33: #{rnn_forward.1} parent=0 // pred_fallthru
    _
  %v38 = vld [vmem:[%s2] sm:$0xff]
  %v39 = vld [vmem:[%s2 + $0x8] sm:$0xff]
  %v40 = vld [vmem:[%s2 + $0x10] sm:$0xff]
  %v41 = vld [vmem:[%s2 + $0x18] sm:$0xff]
  %v42 = vld [vmem:[%s3] sm:$0xff]
  %v43 = vld [vmem:[%s3 + $0x8] sm:$0xff]
  %v44 = vld [vmem:[%s3 + $0x10] sm:$0xff]
  %v45 = vld [vmem:[%s3 + $0x18] sm:$0xff]
  %v46 = vld [vmem:[%s3 + $0x20] sm:$0xff]
  %v47 = vld [vmem:[%s3 + $0x28] sm:$0xff]
  %v48 = vld [vmem:[%s3 + $0x30] sm:$0xff]
  %v49 = vld [vmem:[%s3 + $0x38] sm:$0xff]
  %v50 = vld [vmem:[%s3 + $0x40] sm:$0xff]
  %v51 = vld [vmem:[%s3 + $0x48] sm:$0xff]
  %v52 = vld [vmem:[%s3 + $0x50] sm:$0xff]
  %v53 = vld [vmem:[%s3 + $0x58] sm:$0xff]
  %v54 = vld [vmem:[%s3 + $0x60] sm:$0xff]
  %v55 = vld [vmem:[%s3 + $0x68] sm:$0xff]
  %v56 = vld [vmem:[%s3 + $0x70] sm:$0xff]
  %v57 = vld [vmem:[%s3 + $0x78] sm:$0xff]
  %v58 = vld [vmem:[%s4] sm:$0x1]
  %v60 = vlaneseq
  %v61 = vshrl.u32 %v60, 7
  %v62 = vsub.s32 0, %v61
  %v63 = vrot.slane %v58, %v62
  %65 = vmatprep.subr.mxu0 0.0
  %66 = vmatpush1.msra.mxu0 %v42
  %67 = vmatprep.subr.mxu0 0.0
  %68 = vmatpush1.msra.mxu0 %v43
  %69 = vmatprep.subr.mxu0 0.0
  %70 = vmatpush1.msra.mxu0 %v44
  %71 = vmatprep.subr.mxu0 0.0
  %72 = vmatpush1.msra.mxu0 %v45
  %73 = vmatprep.subr.mxu0 0.0
  %74 = vmatpush1.msra.mxu0 %v46
  %75 = vmatprep.subr.mxu0 0.0
  %76 = vmatpush1.msra.mxu0 %v47
  %77 = vmatprep.subr.mxu0 0.0
  %78 = vmatpush1.msra.mxu0 %v48
  %79 = vmatprep.subr.mxu0 0.0
  %80 = vmatpush1.msra.mxu0 %v49
  %81 = vmatprep.subr.mxu0 0.0
  %82 = vmatpush1.msra.mxu0 %v50
  %83 = vmatprep.subr.mxu0 0.0
  %84 = vmatpush1.msra.mxu0 %v51
  %85 = vmatprep.subr.mxu0 0.0
  %86 = vmatpush1.msra.mxu0 %v52
  %87 = vmatprep.subr.mxu0 0.0
  %88 = vmatpush1.msra.mxu0 %v53
  %89 = vmatprep.subr.mxu0 0.0
  %90 = vmatpush1.msra.mxu0 %v54
  %91 = vmatprep.subr.mxu0 0.0
  %92 = vmatpush1.msra.mxu0 %v55
  %93 = vmatprep.subr.mxu0 0.0
  %94 = vmatpush1.msra.mxu0 %v56
  %95 = vmatprep.subr.mxu0 0.0
  %96 = vmatpush1.msra.mxu0 %v57
  %97 = vmatprep.subr.mxu0 0.0
  %98 = vmatpush1.msra.mxu0 0.0
  %99 = vmatprep.subr.mxu0 0.0
  %100 = vmatpush1.msra.mxu0 0.0
  %101 = vmatprep.subr.mxu0 0.0
  %102 = vmatpush1.msra.mxu0 0.0
  %103 = vmatprep.subr.mxu0 0.0
  %104 = vmatpush1.msra.mxu0 0.0
  %105 = vmatprep.subr.mxu0 0.0
  %106 = vmatpush1.msra.mxu0 0.0
  %107 = vmatprep.subr.mxu0 0.0
  %108 = vmatpush1.msra.mxu0 0.0
  %109 = vmatprep.subr.mxu0 0.0
  %110 = vmatpush1.msra.mxu0 0.0
  %111 = vmatprep.subr.mxu0 0.0
  %112 = vmatpush1.msra.mxu0 0.0
  %113 = vmatprep.subr.mxu0 0.0
  %114 = vmatpush1.msra.mxu0 0.0
  %115 = vmatprep.subr.mxu0 0.0
  %116 = vmatpush1.msra.mxu0 0.0
  %117 = vmatprep.subr.mxu0 0.0
  %118 = vmatpush1.msra.mxu0 0.0
  %119 = vmatprep.subr.mxu0 0.0
  %120 = vmatpush1.msra.mxu0 0.0
  %121 = vmatprep.subr.mxu0 0.0
  %122 = vmatpush1.msra.mxu0 0.0
  %123 = vmatprep.subr.mxu0 0.0
  %124 = vmatpush1.msra.mxu0 0.0
  %125 = vmatprep.subr.mxu0 0.0
  %126 = vmatpush1.msra.mxu0 0.0
  %127 = vmatprep.subr.mxu0 0.0
  %128 = vmatpush1.msra.mxu0 0.0
  %129 = vmatprep.mubr.f32.mxu0 0.0
  %130 = vmatmul.mubr.f32.gmra.mrb[0].mxu0 %v38
  %v131 = vpop.f32.mrb[0].mxu0
  %v132 = vadd.f32 %v63, %v131
  %v133 = vpop.f32.mrb[0].mxu0
  %134 = vmatprep.mubr.f32.mxu0 0.0
  %135 = vmatmul.mubr.f32.gmra.mrb[0].mxu0 %v39
  %v136 = vpop.f32.mrb[0].mxu0
  %v137 = vadd.f32 %v63, %v136
  %v138 = vpop.f32.mrb[0].mxu0
  %139 = vmatprep.mubr.f32.mxu0 0.0
  %140 = vmatmul.mubr.f32.gmra.mrb[0].mxu0 %v40
  %v141 = vpop.f32.mrb[0].mxu0
  %v142 = vadd.f32 %v63, %v141
  %v143 = vpop.f32.mrb[0].mxu0
  %144 = vmatprep.mubr.f32.mxu0 0.0
  %145 = vmatmul.mubr.f32.gmra.mrb[0].mxu0 %v41
  %v146 = vpop.f32.mrb[0].mxu0
  %v147 = vadd.f32 %v63, %v146
  %v148 = vpop.f32.mrb[0].mxu0
  %149 = vdwg.mxu0
  %150 = vst [vmem:[#allocation2] sm:$0xff] %v132
  %151 = vst [vmem:[#allocation2 + $0x8] sm:$0xff] %v137
  %152 = vst [vmem:[#allocation2 + $0x10] sm:$0xff] %v142
  %153 = vst [vmem:[#allocation2 + $0x18] sm:$0xff] %v147
  %s154 = smul.u32 0, 16
  %s155 = smul.u32 %s154, 128
  %s156 = sld [smem:[#allocation5 + %s155]]
  %s157 = scalar_lea.vmem [#allocation2], %s156
  %v158 = vld [vmem:[%s157] sm:$0x1]
  %159 = vst [vmem:[#allocation3] sm:$0x1] %v158
  %s160 = sadd.s32 %s154, 1
  %s161 = smul.u32 %s160, 128
  %s162 = sld [smem:[#allocation5 + %s161]]
  %s163 = scalar_lea.vmem [#allocation2], %s162
  %v164 = vld [vmem:[%s163] sm:$0x1]
  %165 = vst [vmem:[#allocation3 + $0x1] sm:$0x1] %v164
  %s166 = sadd.s32 %s154, 2
  %s167 = smul.u32 %s166, 128
  %s168 = sld [smem:[#allocation5 + %s167]]
  %s169 = scalar_lea.vmem [#allocation2], %s168
  %v170 = vld [vmem:[%s169] sm:$0x1]
  %171 = vst [vmem:[#allocation3 + $0x2] sm:$0x1] %v170
  %s172 = sadd.s32 %s154, 3
  %s173 = smul.u32 %s172, 128
  %s174 = sld [smem:[#allocation5 + %s173]]
  %s175 = scalar_lea.vmem [#allocation2], %s174
  %v176 = vld [vmem:[%s175] sm:$0x1]
  %177 = vst [vmem:[#allocation3 + $0x3] sm:$0x1] %v176
  %s178 = sadd.s32 %s154, 4
  %s179 = smul.u32 %s178, 128
  %s180 = sld [smem:[#allocation5 + %s179]]
  %s181 = scalar_lea.vmem [#allocation2], %s180
  %v182 = vld [vmem:[%s181] sm:$0x1]
  %183 = vst [vmem:[#allocation3 + $0x4] sm:$0x1] %v182
  %s184 = sadd.s32 %s154, 5
  %s185 = smul.u32 %s184, 128
  %s186 = sld [smem:[#allocation5 + %s185]]
  %s187 = scalar_lea.vmem [#allocation2], %s186
  %v188 = vld [vmem:[%s187] sm:$0x1]
  %189 = vst [vmem:[#allocation3 + $0x5] sm:$0x1] %v188
  %s190 = sadd.s32 %s154, 6
  %s191 = smul.u32 %s190, 128
  %s192 = sld [smem:[#allocation5 + %s191]]
  %s193 = scalar_lea.vmem [#allocation2], %s192
  %v194 = vld [vmem:[%s193] sm:$0x1]
  %195 = vst [vmem:[#allocation3 + $0x6] sm:$0x1] %v194
  %s196 = sadd.s32 %s154, 7
  %s197 = smul.u32 %s196, 128
  %s198 = sld [smem:[#allocation5 + %s197]]
  %s199 = scalar_lea.vmem [#allocation2], %s198
  %v200 = vld [vmem:[%s199] sm:$0x1]
  %201 = vst [vmem:[#allocation3 + $0x7] sm:$0x1] %v200
  %s202 = sadd.s32 %s154, 8
  %s203 = smul.u32 %s202, 128
  %s204 = sld [smem:[#allocation5 + %s203]]
  %s205 = scalar_lea.vmem [#allocation2], %s204
  %v206 = vld [vmem:[%s205] sm:$0x1]
  %207 = vst [vmem:[#allocation3 + $0x8] sm:$0x1] %v206
  %s208 = sadd.s32 %s154, 9
  %s209 = smul.u32 %s208, 128
  %s210 = sld [smem:[#allocation5 + %s209]]
  %s211 = scalar_lea.vmem [#allocation2], %s210
  %v212 = vld [vmem:[%s211] sm:$0x1]
  %213 = vst [vmem:[#allocation3 + $0x9] sm:$0x1] %v212
  %s214 = sadd.s32 %s154, 10
  %s215 = smul.u32 %s214, 128
  %s216 = sld [smem:[#allocation5 + %s215]]
  %s217 = scalar_lea.vmem [#allocation2], %s216
  %v218 = vld [vmem:[%s217] sm:$0x1]
  %219 = vst [vmem:[#allocation3 + $0xa] sm:$0x1] %v218
  %s220 = sadd.s32 %s154, 11
  %s221 = smul.u32 %s220, 128
  %s222 = sld [smem:[#allocation5 + %s221]]
  %s223 = scalar_lea.vmem [#allocation2], %s222
  %v224 = vld [vmem:[%s223] sm:$0x1]
  %225 = vst [vmem:[#allocation3 + $0xb] sm:$0x1] %v224
  %s226 = sadd.s32 %s154, 12
  %s227 = smul.u32 %s226, 128
  %s228 = sld [smem:[#allocation5 + %s227]]
  %s229 = scalar_lea.vmem [#allocation2], %s228
  %v230 = vld [vmem:[%s229] sm:$0x1]
  %231 = vst [vmem:[#allocation3 + $0xc] sm:$0x1] %v230
  %s232 = sadd.s32 %s154, 13
  %s233 = smul.u32 %s232, 128
  %s234 = sld [smem:[#allocation5 + %s233]]
  %s235 = scalar_lea.vmem [#allocation2], %s234
  %v236 = vld [vmem:[%s235] sm:$0x1]
  %237 = vst [vmem:[#allocation3 + $0xd] sm:$0x1] %v236
  %s238 = sadd.s32 %s154, 14
  %s239 = smul.u32 %s238, 128
  %s240 = sld [smem:[#allocation5 + %s239]]
  %s241 = scalar_lea.vmem [#allocation2], %s240
  %v242 = vld [vmem:[%s241] sm:$0x1]
  %243 = vst [vmem:[#allocation3 + $0xe] sm:$0x1] %v242
  %s244 = sadd.s32 %s154, 15
  %s245 = smul.u32 %s244, 128
  %s246 = sld [smem:[#allocation5 + %s245]]
  %s247 = scalar_lea.vmem [#allocation2], %s246
  %v248 = vld [vmem:[%s247] sm:$0x1]
  %249 = vst [vmem:[#allocation3 + $0xf] sm:$0x1] %v248
  %s250 = sadd.s32 %s155, 1
  %s251 = sld [smem:[#allocation5 + %s250]]
  %s252 = scalar_lea.vmem [#allocation2], %s251
  %v253 = vld [vmem:[%s252] sm:$0x1]
  %s254 = scalar_lea.vmem [#allocation3], 16
  %255 = vst [vmem:[%s254] sm:$0x1] %v253
  %s256 = sadd.s32 %s161, 1
  %s257 = sld [smem:[#allocation5 + %s256]]
  %s258 = scalar_lea.vmem [#allocation2], %s257
  %v259 = vld [vmem:[%s258] sm:$0x1]
  %260 = vst [vmem:[%s254 + $0x1] sm:$0x1] %v259
  %s261 = sadd.s32 %s167, 1
  %s262 = sld [smem:[#allocation5 + %s261]]
  %s263 = scalar_lea.vmem [#allocation2], %s262
  %v264 = vld [vmem:[%s263] sm:$0x1]
  %265 = vst [vmem:[%s254 + $0x2] sm:$0x1] %v264
  %s266 = sadd.s32 %s173, 1
  %s267 = sld [smem:[#allocation5 + %s266]]
  %s268 = scalar_lea.vmem [#allocation2], %s267
  %v269 = vld [vmem:[%s268] sm:$0x1]
  %270 = vst [vmem:[%s254 + $0x3] sm:$0x1] %v269
  %s271 = sadd.s32 %s179, 1
  %s272 = sld [smem:[#allocation5 + %s271]]
  %s273 = scalar_lea.vmem [#allocation2], %s272
  %v274 = vld [vmem:[%s273] sm:$0x1]
  %275 = vst [vmem:[%s254 + $0x4] sm:$0x1] %v274
  %s276 = sadd.s32 %s185, 1
  %s277 = sld [smem:[#allocation5 + %s276]]
  %s278 = scalar_lea.vmem [#allocation2], %s277
  %v279 = vld [vmem:[%s278] sm:$0x1]
  %280 = vst [vmem:[%s254 + $0x5] sm:$0x1] %v279
  %s281 = sadd.s32 %s191, 1
  %s282 = sld [smem:[#allocation5 + %s281]]
  %s283 = scalar_lea.vmem [#allocation2], %s282
  %v284 = vld [vmem:[%s283] sm:$0x1]
  %285 = vst [vmem:[%s254 + $0x6] sm:$0x1] %v284
  %s286 = sadd.s32 %s197, 1
  %s287 = sld [smem:[#allocation5 + %s286]]
  %s288 = scalar_lea.vmem [#allocation2], %s287
  %v289 = vld [vmem:[%s288] sm:$0x1]
  %290 = vst [vmem:[%s254 + $0x7] sm:$0x1] %v289
  %s291 = sadd.s32 %s203, 1
  %s292 = sld [smem:[#allocation5 + %s291]]
  %s293 = scalar_lea.vmem [#allocation2], %s292
  %v294 = vld [vmem:[%s293] sm:$0x1]
  %295 = vst [vmem:[%s254 + $0x8] sm:$0x1] %v294
  %s296 = sadd.s32 %s209, 1
  %s297 = sld [smem:[#allocation5 + %s296]]
  %s298 = scalar_lea.vmem [#allocation2], %s297
  %v299 = vld [vmem:[%s298] sm:$0x1]
  %300 = vst [vmem:[%s254 + $0x9] sm:$0x1] %v299
  %s301 = sadd.s32 %s215, 1
  %s302 = sld [smem:[#allocation5 + %s301]]
  %s303 = scalar_lea.vmem [#allocation2], %s302
  %v304 = vld [vmem:[%s303] sm:$0x1]
  %305 = vst [vmem:[%s254 + $0xa] sm:$0x1] %v304
  %s306 = sadd.s32 %s221, 1
  %s307 = sld [smem:[#allocation5 + %s306]]
  %s308 = scalar_lea.vmem [#allocation2], %s307
  %v309 = vld [vmem:[%s308] sm:$0x1]
  %310 = vst [vmem:[%s254 + $0xb] sm:$0x1] %v309
  %s311 = sadd.s32 %s227, 1
  %s312 = sld [smem:[#allocation5 + %s311]]
  %s313 = scalar_lea.vmem [#allocation2], %s312
  %v314 = vld [vmem:[%s313] sm:$0x1]
  %315 = vst [vmem:[%s254 + $0xc] sm:$0x1] %v314
  %s316 = sadd.s32 %s233, 1
  %s317 = sld [smem:[#allocation5 + %s316]]
  %s318 = scalar_lea.vmem [#allocation2], %s317
  %v319 = vld [vmem:[%s318] sm:$0x1]
  %320 = vst [vmem:[%s254 + $0xd] sm:$0x1] %v319
  %s321 = sadd.s32 %s239, 1
  %s322 = sld [smem:[#allocation5 + %s321]]
  %s323 = scalar_lea.vmem [#allocation2], %s322
  %v324 = vld [vmem:[%s323] sm:$0x1]
  %325 = vst [vmem:[%s254 + $0xe] sm:$0x1] %v324
  %s326 = sadd.s32 %s245, 1
  %s327 = sld [smem:[#allocation5 + %s326]]
  %s328 = scalar_lea.vmem [#allocation2], %s327
  %v329 = vld [vmem:[%s328] sm:$0x1]
  %330 = vst [vmem:[%s254 + $0xf] sm:$0x1] %v329
  %s331 = sadd.s32 %s155, 2
  %s332 = sld [smem:[#allocation5 + %s331]]
  %s333 = scalar_lea.vmem [#allocation2], %s332
  %v334 = vld [vmem:[%s333] sm:$0x1]
  %s335 = scalar_lea.vmem [#allocation3], 32
  %336 = vst [vmem:[%s335] sm:$0x1] %v334
  %s337 = sadd.s32 %s161, 2
  %s338 = sld [smem:[#allocation5 + %s337]]
  %s339 = scalar_lea.vmem [#allocation2], %s338
  %v340 = vld [vmem:[%s339] sm:$0x1]
  %341 = vst [vmem:[%s335 + $0x1] sm:$0x1] %v340
  %s342 = sadd.s32 %s167, 2
  %s343 = sld [smem:[#allocation5 + %s342]]
  %s344 = scalar_lea.vmem [#allocation2], %s343
  %v345 = vld [vmem:[%s344] sm:$0x1]
  %346 = vst [vmem:[%s335 + $0x2] sm:$0x1] %v345
  %s347 = sadd.s32 %s173, 2
  %s348 = sld [smem:[#allocation5 + %s347]]
  %s349 = scalar_lea.vmem [#allocation2], %s348
  %v350 = vld [vmem:[%s349] sm:$0x1]
  %351 = vst [vmem:[%s335 + $0x3] sm:$0x1] %v350
  %s352 = sadd.s32 %s179, 2
  %s353 = sld [smem:[#allocation5 + %s352]]
  %s354 = scalar_lea.vmem [#allocation2], %s353
  %v355 = vld [vmem:[%s354] sm:$0x1]
  %356 = vst [vmem:[%s335 + $0x4] sm:$0x1] %v355
  %s357 = sadd.s32 %s185, 2
  %s358 = sld [smem:[#allocation5 + %s357]]
  %s359 = scalar_lea.vmem [#allocation2], %s358
  %v360 = vld [vmem:[%s359] sm:$0x1]
  %361 = vst [vmem:[%s335 + $0x5] sm:$0x1] %v360
  %s362 = sadd.s32 %s191, 2
  %s363 = sld [smem:[#allocation5 + %s362]]
  %s364 = scalar_lea.vmem [#allocation2], %s363
  %v365 = vld [vmem:[%s364] sm:$0x1]
  %366 = vst [vmem:[%s335 + $0x6] sm:$0x1] %v365
  %s367 = sadd.s32 %s197, 2
  %s368 = sld [smem:[#allocation5 + %s367]]
  %s369 = scalar_lea.vmem [#allocation2], %s368
  %v370 = vld [vmem:[%s369] sm:$0x1]
  %371 = vst [vmem:[%s335 + $0x7] sm:$0x1] %v370
  %s372 = sadd.s32 %s203, 2
  %s373 = sld [smem:[#allocation5 + %s372]]
  %s374 = scalar_lea.vmem [#allocation2], %s373
  %v375 = vld [vmem:[%s374] sm:$0x1]
  %376 = vst [vmem:[%s335 + $0x8] sm:$0x1] %v375
  %s377 = sadd.s32 %s209, 2
  %s378 = sld [smem:[#allocation5 + %s377]]
  %s379 = scalar_lea.vmem [#allocation2], %s378
  %v380 = vld [vmem:[%s379] sm:$0x1]
  %381 = vst [vmem:[%s335 + $0x9] sm:$0x1] %v380
  %s382 = sadd.s32 %s215, 2
  %s383 = sld [smem:[#allocation5 + %s382]]
  %s384 = scalar_lea.vmem [#allocation2], %s383
  %v385 = vld [vmem:[%s384] sm:$0x1]
  %386 = vst [vmem:[%s335 + $0xa] sm:$0x1] %v385
  %s387 = sadd.s32 %s221, 2
  %s388 = sld [smem:[#allocation5 + %s387]]
  %s389 = scalar_lea.vmem [#allocation2], %s388
  %v390 = vld [vmem:[%s389] sm:$0x1]
  %391 = vst [vmem:[%s335 + $0xb] sm:$0x1] %v390
  %s392 = sadd.s32 %s227, 2
  %s393 = sld [smem:[#allocation5 + %s392]]
  %s394 = scalar_lea.vmem [#allocation2], %s393
  %v395 = vld [vmem:[%s394] sm:$0x1]
  %396 = vst [vmem:[%s335 + $0xc] sm:$0x1] %v395
  %s397 = sadd.s32 %s233, 2
  %s398 = sld [smem:[#allocation5 + %s397]]
  %s399 = scalar_lea.vmem [#allocation2], %s398
  %v400 = vld [vmem:[%s399] sm:$0x1]
  %401 = vst [vmem:[%s335 + $0xd] sm:$0x1] %v400
  %s402 = sadd.s32 %s239, 2
  %s403 = sld [smem:[#allocation5 + %s402]]
  %s404 = scalar_lea.vmem [#allocation2], %s403
  %v405 = vld [vmem:[%s404] sm:$0x1]
  %406 = vst [vmem:[%s335 + $0xe] sm:$0x1] %v405
  %s407 = sadd.s32 %s245, 2
  %s408 = sld [smem:[#allocation5 + %s407]]
  %s409 = scalar_lea.vmem [#allocation2], %s408
  %v410 = vld [vmem:[%s409] sm:$0x1]
  %411 = vst [vmem:[%s335 + $0xf] sm:$0x1] %v410
  %s412 = sadd.s32 %s155, 3
  %s413 = sld [smem:[#allocation5 + %s412]]
  %s414 = scalar_lea.vmem [#allocation2], %s413
  %v415 = vld [vmem:[%s414] sm:$0x1]
  %s416 = scalar_lea.vmem [#allocation3], 48
  %417 = vst [vmem:[%s416] sm:$0x1] %v415
  %s418 = sadd.s32 %s161, 3
  %s419 = sld [smem:[#allocation5 + %s418]]
  %s420 = scalar_lea.vmem [#allocation2], %s419
  %v421 = vld [vmem:[%s420] sm:$0x1]
  %422 = vst [vmem:[%s416 + $0x1] sm:$0x1] %v421
  %s423 = sadd.s32 %s167, 3
  %s424 = sld [smem:[#allocation5 + %s423]]
  %s425 = scalar_lea.vmem [#allocation2], %s424
  %v426 = vld [vmem:[%s425] sm:$0x1]
  %427 = vst [vmem:[%s416 + $0x2] sm:$0x1] %v426
  %s428 = sadd.s32 %s173, 3
  %s429 = sld [smem:[#allocation5 + %s428]]
  %s430 = scalar_lea.vmem [#allocation2], %s429
  %v431 = vld [vmem:[%s430] sm:$0x1]
  %432 = vst [vmem:[%s416 + $0x3] sm:$0x1] %v431
  %s433 = sadd.s32 %s179, 3
  %s434 = sld [smem:[#allocation5 + %s433]]
  %s435 = scalar_lea.vmem [#allocation2], %s434
  %v436 = vld [vmem:[%s435] sm:$0x1]
  %437 = vst [vmem:[%s416 + $0x4] sm:$0x1] %v436
  %s438 = sadd.s32 %s185, 3
  %s439 = sld [smem:[#allocation5 + %s438]]
  %s440 = scalar_lea.vmem [#allocation2], %s439
  %v441 = vld [vmem:[%s440] sm:$0x1]
  %442 = vst [vmem:[%s416 + $0x5] sm:$0x1] %v441
  %s443 = sadd.s32 %s191, 3
  %s444 = sld [smem:[#allocation5 + %s443]]
  %s445 = scalar_lea.vmem [#allocation2], %s444
  %v446 = vld [vmem:[%s445] sm:$0x1]
  %447 = vst [vmem:[%s416 + $0x6] sm:$0x1] %v446
  %s448 = sadd.s32 %s197, 3
  %s449 = sld [smem:[#allocation5 + %s448]]
  %s450 = scalar_lea.vmem [#allocation2], %s449
  %v451 = vld [vmem:[%s450] sm:$0x1]
  %452 = vst [vmem:[%s416 + $0x7] sm:$0x1] %v451
  %s453 = sadd.s32 %s203, 3
  %s454 = sld [smem:[#allocation5 + %s453]]
  %s455 = scalar_lea.vmem [#allocation2], %s454
  %v456 = vld [vmem:[%s455] sm:$0x1]
  %457 = vst [vmem:[%s416 + $0x8] sm:$0x1] %v456
  %s458 = sadd.s32 %s209, 3
  %s459 = sld [smem:[#allocation5 + %s458]]
  %s460 = scalar_lea.vmem [#allocation2], %s459
  %v461 = vld [vmem:[%s460] sm:$0x1]
  %462 = vst [vmem:[%s416 + $0x9] sm:$0x1] %v461
  %s463 = sadd.s32 %s215, 3
  %s464 = sld [smem:[#allocation5 + %s463]]
  %s465 = scalar_lea.vmem [#allocation2], %s464
  %v466 = vld [vmem:[%s465] sm:$0x1]
  %467 = vst [vmem:[%s416 + $0xa] sm:$0x1] %v466
  %s468 = sadd.s32 %s221, 3
  %s469 = sld [smem:[#allocation5 + %s468]]
  %s470 = scalar_lea.vmem [#allocation2], %s469
  %v471 = vld [vmem:[%s470] sm:$0x1]
  %472 = vst [vmem:[%s416 + $0xb] sm:$0x1] %v471
  %s473 = sadd.s32 %s227, 3
  %s474 = sld [smem:[#allocation5 + %s473]]
  %s475 = scalar_lea.vmem [#allocation2], %s474
  %v476 = vld [vmem:[%s475] sm:$0x1]
  %477 = vst [vmem:[%s416 + $0xc] sm:$0x1] %v476
  %s478 = sadd.s32 %s233, 3
  %s479 = sld [smem:[#allocation5 + %s478]]
  %s480 = scalar_lea.vmem [#allocation2], %s479
  %v481 = vld [vmem:[%s480] sm:$0x1]
  %482 = vst [vmem:[%s416 + $0xd] sm:$0x1] %v481
  %s483 = sadd.s32 %s239, 3
  %s484 = sld [smem:[#allocation5 + %s483]]
  %s485 = scalar_lea.vmem [#allocation2], %s484
  %v486 = vld [vmem:[%s485] sm:$0x1]
  %487 = vst [vmem:[%s416 + $0xe] sm:$0x1] %v486
  %s488 = sadd.s32 %s245, 3
  %s489 = sld [smem:[#allocation5 + %s488]]
  %s490 = scalar_lea.vmem [#allocation2], %s489
  %v491 = vld [vmem:[%s490] sm:$0x1]
  %492 = vst [vmem:[%s416 + $0xf] sm:$0x1] %v491
  %s493 = sadd.s32 %s155, 4
  %s494 = sld [smem:[#allocation5 + %s493]]
  %s495 = scalar_lea.vmem [#allocation2], %s494
  %v496 = vld [vmem:[%s495] sm:$0x1]
  %s497 = scalar_lea.vmem [#allocation3], 64
  %498 = vst [vmem:[%s497] sm:$0x1] %v496
  %s499 = sadd.s32 %s161, 4
  %s500 = sld [smem:[#allocation5 + %s499]]
  %s501 = scalar_lea.vmem [#allocation2], %s500
  %v502 = vld [vmem:[%s501] sm:$0x1]
  %503 = vst [vmem:[%s497 + $0x1] sm:$0x1] %v502
  %s504 = sadd.s32 %s167, 4
  %s505 = sld [smem:[#allocation5 + %s504]]
  %s506 = scalar_lea.vmem [#allocation2], %s505
  %v507 = vld [vmem:[%s506] sm:$0x1]
  %508 = vst [vmem:[%s497 + $0x2] sm:$0x1] %v507
  %s509 = sadd.s32 %s173, 4
  %s510 = sld [smem:[#allocation5 + %s509]]
  %s511 = scalar_lea.vmem [#allocation2], %s510
  %v512 = vld [vmem:[%s511] sm:$0x1]
  %513 = vst [vmem:[%s497 + $0x3] sm:$0x1] %v512
  %s514 = sadd.s32 %s179, 4
  %s515 = sld [smem:[#allocation5 + %s514]]
  %s516 = scalar_lea.vmem [#allocation2], %s515
  %v517 = vld [vmem:[%s516] sm:$0x1]
  %518 = vst [vmem:[%s497 + $0x4] sm:$0x1] %v517
  %s519 = sadd.s32 %s185, 4
  %s520 = sld [smem:[#allocation5 + %s519]]
  %s521 = scalar_lea.vmem [#allocation2], %s520
  %v522 = vld [vmem:[%s521] sm:$0x1]
  %523 = vst [vmem:[%s497 + $0x5] sm:$0x1] %v522
  %s524 = sadd.s32 %s191, 4
  %s525 = sld [smem:[#allocation5 + %s524]]
  %s526 = scalar_lea.vmem [#allocation2], %s525
  %v527 = vld [vmem:[%s526] sm:$0x1]
  %528 = vst [vmem:[%s497 + $0x6] sm:$0x1] %v527
  %s529 = sadd.s32 %s197, 4
  %s530 = sld [smem:[#allocation5 + %s529]]
  %s531 = scalar_lea.vmem [#allocation2], %s530
  %v532 = vld [vmem:[%s531] sm:$0x1]
  %533 = vst [vmem:[%s497 + $0x7] sm:$0x1] %v532
  %s534 = sadd.s32 %s203, 4
  %s535 = sld [smem:[#allocation5 + %s534]]
  %s536 = scalar_lea.vmem [#allocation2], %s535
  %v537 = vld [vmem:[%s536] sm:$0x1]
  %538 = vst [vmem:[%s497 + $0x8] sm:$0x1] %v537
  %s539 = sadd.s32 %s209, 4
  %s540 = sld [smem:[#allocation5 + %s539]]
  %s541 = scalar_lea.vmem [#allocation2], %s540
  %v542 = vld [vmem:[%s541] sm:$0x1]
  %543 = vst [vmem:[%s497 + $0x9] sm:$0x1] %v542
  %s544 = sadd.s32 %s215, 4
  %s545 = sld [smem:[#allocation5 + %s544]]
  %s546 = scalar_lea.vmem [#allocation2], %s545
  %v547 = vld [vmem:[%s546] sm:$0x1]
  %548 = vst [vmem:[%s497 + $0xa] sm:$0x1] %v547
  %s549 = sadd.s32 %s221, 4
  %s550 = sld [smem:[#allocation5 + %s549]]
  %s551 = scalar_lea.vmem [#allocation2], %s550
  %v552 = vld [vmem:[%s551] sm:$0x1]
  %553 = vst [vmem:[%s497 + $0xb] sm:$0x1] %v552
  %s554 = sadd.s32 %s227, 4
  %s555 = sld [smem:[#allocation5 + %s554]]
  %s556 = scalar_lea.vmem [#allocation2], %s555
  %v557 = vld [vmem:[%s556] sm:$0x1]
  %558 = vst [vmem:[%s497 + $0xc] sm:$0x1] %v557
  %s559 = sadd.s32 %s233, 4
  %s560 = sld [smem:[#allocation5 + %s559]]
  %s561 = scalar_lea.vmem [#allocation2], %s560
  %v562 = vld [vmem:[%s561] sm:$0x1]
  %563 = vst [vmem:[%s497 + $0xd] sm:$0x1] %v562
  %s564 = sadd.s32 %s239, 4
  %s565 = sld [smem:[#allocation5 + %s564]]
  %s566 = scalar_lea.vmem [#allocation2], %s565
  %v567 = vld [vmem:[%s566] sm:$0x1]
  %568 = vst [vmem:[%s497 + $0xe] sm:$0x1] %v567
  %s569 = sadd.s32 %s245, 4
  %s570 = sld [smem:[#allocation5 + %s569]]
  %s571 = scalar_lea.vmem [#allocation2], %s570
  %v572 = vld [vmem:[%s571] sm:$0x1]
  %573 = vst [vmem:[%s497 + $0xf] sm:$0x1] %v572
  %s574 = sadd.s32 %s155, 5
  %s575 = sld [smem:[#allocation5 + %s574]]
  %s576 = scalar_lea.vmem [#allocation2], %s575
  %v577 = vld [vmem:[%s576] sm:$0x1]
  %s578 = scalar_lea.vmem [#allocation3], 80
  %579 = vst [vmem:[%s578] sm:$0x1] %v577
  %s580 = sadd.s32 %s161, 5
  %s581 = sld [smem:[#allocation5 + %s580]]
  %s582 = scalar_lea.vmem [#allocation2], %s581
  %v583 = vld [vmem:[%s582] sm:$0x1]
  %584 = vst [vmem:[%s578 + $0x1] sm:$0x1] %v583
  %s585 = sadd.s32 %s167, 5
  %s586 = sld [smem:[#allocation5 + %s585]]
  %s587 = scalar_lea.vmem [#allocation2], %s586
  %v588 = vld [vmem:[%s587] sm:$0x1]
  %589 = vst [vmem:[%s578 + $0x2] sm:$0x1] %v588
  %s590 = sadd.s32 %s173, 5
  %s591 = sld [smem:[#allocation5 + %s590]]
  %s592 = scalar_lea.vmem [#allocation2], %s591
  %v593 = vld [vmem:[%s592] sm:$0x1]
  %594 = vst [vmem:[%s578 + $0x3] sm:$0x1] %v593
  %s595 = sadd.s32 %s179, 5
  %s596 = sld [smem:[#allocation5 + %s595]]
  %s597 = scalar_lea.vmem [#allocation2], %s596
  %v598 = vld [vmem:[%s597] sm:$0x1]
  %599 = vst [vmem:[%s578 + $0x4] sm:$0x1] %v598
  %s600 = sadd.s32 %s185, 5
  %s601 = sld [smem:[#allocation5 + %s600]]
  %s602 = scalar_lea.vmem [#allocation2], %s601
  %v603 = vld [vmem:[%s602] sm:$0x1]
  %604 = vst [vmem:[%s578 + $0x5] sm:$0x1] %v603
  %s605 = sadd.s32 %s191, 5
  %s606 = sld [smem:[#allocation5 + %s605]]
  %s607 = scalar_lea.vmem [#allocation2], %s606
  %v608 = vld [vmem:[%s607] sm:$0x1]
  %609 = vst [vmem:[%s578 + $0x6] sm:$0x1] %v608
  %s610 = sadd.s32 %s197, 5
  %s611 = sld [smem:[#allocation5 + %s610]]
  %s612 = scalar_lea.vmem [#allocation2], %s611
  %v613 = vld [vmem:[%s612] sm:$0x1]
  %614 = vst [vmem:[%s578 + $0x7] sm:$0x1] %v613
  %s615 = sadd.s32 %s203, 5
  %s616 = sld [smem:[#allocation5 + %s615]]
  %s617 = scalar_lea.vmem [#allocation2], %s616
  %v618 = vld [vmem:[%s617] sm:$0x1]
  %619 = vst [vmem:[%s578 + $0x8] sm:$0x1] %v618
  %s620 = sadd.s32 %s209, 5
  %s621 = sld [smem:[#allocation5 + %s620]]
  %s622 = scalar_lea.vmem [#allocation2], %s621
  %v623 = vld [vmem:[%s622] sm:$0x1]
  %624 = vst [vmem:[%s578 + $0x9] sm:$0x1] %v623
  %s625 = sadd.s32 %s215, 5
  %s626 = sld [smem:[#allocation5 + %s625]]
  %s627 = scalar_lea.vmem [#allocation2], %s626
  %v628 = vld [vmem:[%s627] sm:$0x1]
  %629 = vst [vmem:[%s578 + $0xa] sm:$0x1] %v628
  %s630 = sadd.s32 %s221, 5
  %s631 = sld [smem:[#allocation5 + %s630]]
  %s632 = scalar_lea.vmem [#allocation2], %s631
  %v633 = vld [vmem:[%s632] sm:$0x1]
  %634 = vst [vmem:[%s578 + $0xb] sm:$0x1] %v633
  %s635 = sadd.s32 %s227, 5
  %s636 = sld [smem:[#allocation5 + %s635]]
  %s637 = scalar_lea.vmem [#allocation2], %s636
  %v638 = vld [vmem:[%s637] sm:$0x1]
  %639 = vst [vmem:[%s578 + $0xc] sm:$0x1] %v638
  %s640 = sadd.s32 %s233, 5
  %s641 = sld [smem:[#allocation5 + %s640]]
  %s642 = scalar_lea.vmem [#allocation2], %s641
  %v643 = vld [vmem:[%s642] sm:$0x1]
  %644 = vst [vmem:[%s578 + $0xd] sm:$0x1] %v643
  %s645 = sadd.s32 %s239, 5
  %s646 = sld [smem:[#allocation5 + %s645]]
  %s647 = scalar_lea.vmem [#allocation2], %s646
  %v648 = vld [vmem:[%s647] sm:$0x1]
  %649 = vst [vmem:[%s578 + $0xe] sm:$0x1] %v648
  %s650 = sadd.s32 %s245, 5
  %s651 = sld [smem:[#allocation5 + %s650]]
  %s652 = scalar_lea.vmem [#allocation2], %s651
  %v653 = vld [vmem:[%s652] sm:$0x1]
  %654 = vst [vmem:[%s578 + $0xf] sm:$0x1] %v653
  %s655 = sadd.s32 %s155, 6
  %s656 = sld [smem:[#allocation5 + %s655]]
  %s657 = scalar_lea.vmem [#allocation2], %s656
  %v658 = vld [vmem:[%s657] sm:$0x1]
  %s659 = scalar_lea.vmem [#allocation3], 96
  %660 = vst [vmem:[%s659] sm:$0x1] %v658
  %s661 = sadd.s32 %s161, 6
  %s662 = sld [smem:[#allocation5 + %s661]]
  %s663 = scalar_lea.vmem [#allocation2], %s662
  %v664 = vld [vmem:[%s663] sm:$0x1]
  %665 = vst [vmem:[%s659 + $0x1] sm:$0x1] %v664
  %s666 = sadd.s32 %s167, 6
  %s667 = sld [smem:[#allocation5 + %s666]]
  %s668 = scalar_lea.vmem [#allocation2], %s667
  %v669 = vld [vmem:[%s668] sm:$0x1]
  %670 = vst [vmem:[%s659 + $0x2] sm:$0x1] %v669
  %s671 = sadd.s32 %s173, 6
  %s672 = sld [smem:[#allocation5 + %s671]]
  %s673 = scalar_lea.vmem [#allocation2], %s672
  %v674 = vld [vmem:[%s673] sm:$0x1]
  %675 = vst [vmem:[%s659 + $0x3] sm:$0x1] %v674
  %s676 = sadd.s32 %s179, 6
  %s677 = sld [smem:[#allocation5 + %s676]]
  %s678 = scalar_lea.vmem [#allocation2], %s677
  %v679 = vld [vmem:[%s678] sm:$0x1]
  %680 = vst [vmem:[%s659 + $0x4] sm:$0x1] %v679
  %s681 = sadd.s32 %s185, 6
  %s682 = sld [smem:[#allocation5 + %s681]]
  %s683 = scalar_lea.vmem [#allocation2], %s682
  %v684 = vld [vmem:[%s683] sm:$0x1]
  %685 = vst [vmem:[%s659 + $0x5] sm:$0x1] %v684
  %s686 = sadd.s32 %s191, 6
  %s687 = sld [smem:[#allocation5 + %s686]]
  %s688 = scalar_lea.vmem [#allocation2], %s687
  %v689 = vld [vmem:[%s688] sm:$0x1]
  %690 = vst [vmem:[%s659 + $0x6] sm:$0x1] %v689
  %s691 = sadd.s32 %s197, 6
  %s692 = sld [smem:[#allocation5 + %s691]]
  %s693 = scalar_lea.vmem [#allocation2], %s692
  %v694 = vld [vmem:[%s693] sm:$0x1]
  %695 = vst [vmem:[%s659 + $0x7] sm:$0x1] %v694
  %s696 = sadd.s32 %s203, 6
  %s697 = sld [smem:[#allocation5 + %s696]]
  %s698 = scalar_lea.vmem [#allocation2], %s697
  %v699 = vld [vmem:[%s698] sm:$0x1]
  %700 = vst [vmem:[%s659 + $0x8] sm:$0x1] %v699
  %s701 = sadd.s32 %s209, 6
  %s702 = sld [smem:[#allocation5 + %s701]]
  %s703 = scalar_lea.vmem [#allocation2], %s702
  %v704 = vld [vmem:[%s703] sm:$0x1]
  %705 = vst [vmem:[%s659 + $0x9] sm:$0x1] %v704
  %s706 = sadd.s32 %s215, 6
  %s707 = sld [smem:[#allocation5 + %s706]]
  %s708 = scalar_lea.vmem [#allocation2], %s707
  %v709 = vld [vmem:[%s708] sm:$0x1]
  %710 = vst [vmem:[%s659 + $0xa] sm:$0x1] %v709
  %s711 = sadd.s32 %s221, 6
  %s712 = sld [smem:[#allocation5 + %s711]]
  %s713 = scalar_lea.vmem [#allocation2], %s712
  %v714 = vld [vmem:[%s713] sm:$0x1]
  %715 = vst [vmem:[%s659 + $0xb] sm:$0x1] %v714
  %s716 = sadd.s32 %s227, 6
  %s717 = sld [smem:[#allocation5 + %s716]]
  %s718 = scalar_lea.vmem [#allocation2], %s717
  %v719 = vld [vmem:[%s718] sm:$0x1]
  %720 = vst [vmem:[%s659 + $0xc] sm:$0x1] %v719
  %s721 = sadd.s32 %s233, 6
  %s722 = sld [smem:[#allocation5 + %s721]]
  %s723 = scalar_lea.vmem [#allocation2], %s722
  %v724 = vld [vmem:[%s723] sm:$0x1]
  %725 = vst [vmem:[%s659 + $0xd] sm:$0x1] %v724
  %s726 = sadd.s32 %s239, 6
  %s727 = sld [smem:[#allocation5 + %s726]]
  %s728 = scalar_lea.vmem [#allocation2], %s727
  %v729 = vld [vmem:[%s728] sm:$0x1]
  %730 = vst [vmem:[%s659 + $0xe] sm:$0x1] %v729
  %s731 = sadd.s32 %s245, 6
  %s732 = sld [smem:[#allocation5 + %s731]]
  %s733 = scalar_lea.vmem [#allocation2], %s732
  %v734 = vld [vmem:[%s733] sm:$0x1]
  %735 = vst [vmem:[%s659 + $0xf] sm:$0x1] %v734
  %s736 = sadd.s32 %s155, 7
  %s737 = sld [smem:[#allocation5 + %s736]]
  %s738 = scalar_lea.vmem [#allocation2], %s737
  %v739 = vld [vmem:[%s738] sm:$0x1]
  %s740 = scalar_lea.vmem [#allocation3], 112
  %741 = vst [vmem:[%s740] sm:$0x1] %v739
  %s742 = sadd.s32 %s161, 7
  %s743 = sld [smem:[#allocation5 + %s742]]
  %s744 = scalar_lea.vmem [#allocation2], %s743
  %v745 = vld [vmem:[%s744] sm:$0x1]
  %746 = vst [vmem:[%s740 + $0x1] sm:$0x1] %v745
  %s747 = sadd.s32 %s167, 7
  %s748 = sld [smem:[#allocation5 + %s747]]
  %s749 = scalar_lea.vmem [#allocation2], %s748
  %v750 = vld [vmem:[%s749] sm:$0x1]
  %751 = vst [vmem:[%s740 + $0x2] sm:$0x1] %v750
  %s752 = sadd.s32 %s173, 7
  %s753 = sld [smem:[#allocation5 + %s752]]
  %s754 = scalar_lea.vmem [#allocation2], %s753
  %v755 = vld [vmem:[%s754] sm:$0x1]
  %756 = vst [vmem:[%s740 + $0x3] sm:$0x1] %v755
  %s757 = sadd.s32 %s179, 7
  %s758 = sld [smem:[#allocation5 + %s757]]
  %s759 = scalar_lea.vmem [#allocation2], %s758
  %v760 = vld [vmem:[%s759] sm:$0x1]
  %761 = vst [vmem:[%s740 + $0x4] sm:$0x1] %v760
  %s762 = sadd.s32 %s185, 7
  %s763 = sld [smem:[#allocation5 + %s762]]
  %s764 = scalar_lea.vmem [#allocation2], %s763
  %v765 = vld [vmem:[%s764] sm:$0x1]
  %766 = vst [vmem:[%s740 + $0x5] sm:$0x1] %v765
  %s767 = sadd.s32 %s191, 7
  %s768 = sld [smem:[#allocation5 + %s767]]
  %s769 = scalar_lea.vmem [#allocation2], %s768
  %v770 = vld [vmem:[%s769] sm:$0x1]
  %771 = vst [vmem:[%s740 + $0x6] sm:$0x1] %v770
  %s772 = sadd.s32 %s197, 7
  %s773 = sld [smem:[#allocation5 + %s772]]
  %s774 = scalar_lea.vmem [#allocation2], %s773
  %v775 = vld [vmem:[%s774] sm:$0x1]
  %776 = vst [vmem:[%s740 + $0x7] sm:$0x1] %v775
  %s777 = sadd.s32 %s203, 7
  %s778 = sld [smem:[#allocation5 + %s777]]
  %s779 = scalar_lea.vmem [#allocation2], %s778
  %v780 = vld [vmem:[%s779] sm:$0x1]
  %781 = vst [vmem:[%s740 + $0x8] sm:$0x1] %v780
  %s782 = sadd.s32 %s209, 7
  %s783 = sld [smem:[#allocation5 + %s782]]
  %s784 = scalar_lea.vmem [#allocation2], %s783
  %v785 = vld [vmem:[%s784] sm:$0x1]
  %786 = vst [vmem:[%s740 + $0x9] sm:$0x1] %v785
  %s787 = sadd.s32 %s215, 7
  %s788 = sld [smem:[#allocation5 + %s787]]
  %s789 = scalar_lea.vmem [#allocation2], %s788
  %v790 = vld [vmem:[%s789] sm:$0x1]
  %791 = vst [vmem:[%s740 + $0xa] sm:$0x1] %v790
  %s792 = sadd.s32 %s221, 7
  %s793 = sld [smem:[#allocation5 + %s792]]
  %s794 = scalar_lea.vmem [#allocation2], %s793
  %v795 = vld [vmem:[%s794] sm:$0x1]
  %796 = vst [vmem:[%s740 + $0xb] sm:$0x1] %v795
  %s797 = sadd.s32 %s227, 7
  %s798 = sld [smem:[#allocation5 + %s797]]
  %s799 = scalar_lea.vmem [#allocation2], %s798
  %v800 = vld [vmem:[%s799] sm:$0x1]
  %801 = vst [vmem:[%s740 + $0xc] sm:$0x1] %v800
  %s802 = sadd.s32 %s233, 7
  %s803 = sld [smem:[#allocation5 + %s802]]
  %s804 = scalar_lea.vmem [#allocation2], %s803
  %v805 = vld [vmem:[%s804] sm:$0x1]
  %806 = vst [vmem:[%s740 + $0xd] sm:$0x1] %v805
  %s807 = sadd.s32 %s239, 7
  %s808 = sld [smem:[#allocation5 + %s807]]
  %s809 = scalar_lea.vmem [#allocation2], %s808
  %v810 = vld [vmem:[%s809] sm:$0x1]
  %811 = vst [vmem:[%s740 + $0xe] sm:$0x1] %v810
  %s812 = sadd.s32 %s245, 7
  %s813 = sld [smem:[#allocation5 + %s812]]
  %s814 = scalar_lea.vmem [#allocation2], %s813
  %v815 = vld [vmem:[%s814] sm:$0x1]
  %816 = vst [vmem:[%s740 + $0xf] sm:$0x1] %v815
  %v817 = vld [vmem:[%s5] sm:$0xff]
  %v818 = vld [vmem:[%s5 + $0x8] sm:$0xff]
  %v819 = vld [vmem:[%s5 + $0x10] sm:$0xff]
  %v820 = vld [vmem:[%s5 + $0x18] sm:$0xff]
  %v821 = vld [vmem:[%s5 + $0x20] sm:$0xff]
  %v822 = vld [vmem:[%s5 + $0x28] sm:$0xff]
  %v823 = vld [vmem:[%s5 + $0x30] sm:$0xff]
  %v824 = vld [vmem:[%s5 + $0x38] sm:$0xff]
  %v825 = vld [vmem:[%s5 + $0x40] sm:$0xff]
  %v826 = vld [vmem:[%s5 + $0x48] sm:$0xff]
  %v827 = vld [vmem:[%s5 + $0x50] sm:$0xff]
  %v828 = vld [vmem:[%s5 + $0x58] sm:$0xff]
  %v829 = vld [vmem:[%s5 + $0x60] sm:$0xff]
  %v830 = vld [vmem:[%s5 + $0x68] sm:$0xff]
  %v831 = vld [vmem:[%s5 + $0x70] sm:$0xff]
  %v832 = vld [vmem:[%s5 + $0x78] sm:$0xff]
  %v833 = vld [vmem:[%s5 + $0x80] sm:$0xff]
  %v834 = vld [vmem:[%s5 + $0x88] sm:$0xff]
  %v835 = vld [vmem:[%s5 + $0x90] sm:$0xff]
  %v836 = vld [vmem:[%s5 + $0x98] sm:$0xff]
  %v837 = vld [vmem:[%s5 + $0xa0] sm:$0xff]
  %v838 = vld [vmem:[%s5 + $0xa8] sm:$0xff]
  %v839 = vld [vmem:[%s5 + $0xb0] sm:$0xff]
  %v840 = vld [vmem:[%s5 + $0xb8] sm:$0xff]
  %v841 = vld [vmem:[%s5 + $0xc0] sm:$0xff]
  %v842 = vld [vmem:[%s5 + $0xc8] sm:$0xff]
  %v843 = vld [vmem:[%s5 + $0xd0] sm:$0xff]
  %v844 = vld [vmem:[%s5 + $0xd8] sm:$0xff]
  %v845 = vld [vmem:[%s5 + $0xe0] sm:$0xff]
  %v846 = vld [vmem:[%s5 + $0xe8] sm:$0xff]
  %v847 = vld [vmem:[%s5 + $0xf0] sm:$0xff]
  %v848 = vld [vmem:[%s5 + $0xf8] sm:$0xff]
  %v849 = vld [vmem:[%s5 + $0x100] sm:$0xff]
  %v850 = vld [vmem:[%s5 + $0x108] sm:$0xff]
  %v851 = vld [vmem:[%s5 + $0x110] sm:$0xff]
  %v852 = vld [vmem:[%s5 + $0x118] sm:$0xff]
  %v853 = vld [vmem:[%s5 + $0x120] sm:$0xff]
  %v854 = vld [vmem:[%s5 + $0x128] sm:$0xff]
  %v855 = vld [vmem:[%s5 + $0x130] sm:$0xff]
  %v856 = vld [vmem:[%s5 + $0x138] sm:$0xff]
  %v857 = vld [vmem:[%s5 + $0x140] sm:$0xff]
  %v858 = vld [vmem:[%s5 + $0x148] sm:$0xff]
  %v859 = vld [vmem:[%s5 + $0x150] sm:$0xff]
  %v860 = vld [vmem:[%s5 + $0x158] sm:$0xff]
  %v861 = vld [vmem:[%s5 + $0x160] sm:$0xff]
  %v862 = vld [vmem:[%s5 + $0x168] sm:$0xff]
  %v863 = vld [vmem:[%s5 + $0x170] sm:$0xff]
  %v864 = vld [vmem:[%s5 + $0x178] sm:$0xff]
  %v865 = vld [vmem:[%s5 + $0x180] sm:$0xff]
  %v866 = vld [vmem:[%s5 + $0x188] sm:$0xff]
  %v867 = vld [vmem:[%s5 + $0x190] sm:$0xff]
  %v868 = vld [vmem:[%s5 + $0x198] sm:$0xff]
  %v869 = vld [vmem:[%s5 + $0x1a0] sm:$0xff]
  %v870 = vld [vmem:[%s5 + $0x1a8] sm:$0xff]
  %v871 = vld [vmem:[%s5 + $0x1b0] sm:$0xff]
  %v872 = vld [vmem:[%s5 + $0x1b8] sm:$0xff]
  %v873 = vld [vmem:[%s5 + $0x1c0] sm:$0xff]
  %v874 = vld [vmem:[%s5 + $0x1c8] sm:$0xff]
  %v875 = vld [vmem:[%s5 + $0x1d0] sm:$0xff]
  %v876 = vld [vmem:[%s5 + $0x1d8] sm:$0xff]
  %v877 = vld [vmem:[%s5 + $0x1e0] sm:$0xff]
  %v878 = vld [vmem:[%s5 + $0x1e8] sm:$0xff]
  %v879 = vld [vmem:[%s5 + $0x1f0] sm:$0xff]
  %v880 = vld [vmem:[%s5 + $0x1f8] sm:$0xff]
  %v881 = vld [vmem:[%s6] sm:$0x1]
  %v882 = vld [vmem:[#allocation3] sm:$0xff]
  %v883 = vld [vmem:[#allocation3 + $0x8] sm:$0xff]
  %v884 = vld [vmem:[%s1] sm:$0xff]
  %v885 = vld [vmem:[%s1 + $0x8] sm:$0xff]
  %v886 = vld [vmem:[%s5] sm:$0xff]
  %v887 = vld [vmem:[%s5 + $0x10] sm:$0xff]
  %v888 = vld [vmem:[%s5 + $0x20] sm:$0xff]
  %v889 = vld [vmem:[%s5 + $0x30] sm:$0xff]
  %v890 = vld [vmem:[%s5 + $0x40] sm:$0xff]
  %v891 = vld [vmem:[%s5 + $0x50] sm:$0xff]
  %v892 = vld [vmem:[%s5 + $0x60] sm:$0xff]
  %v893 = vld [vmem:[%s5 + $0x70] sm:$0xff]
  %v894 = vld [vmem:[%s5 + $0x80] sm:$0xff]
  %v895 = vld [vmem:[%s5 + $0x90] sm:$0xff]
  %v896 = vld [vmem:[%s5 + $0xa0] sm:$0xff]
  %v897 = vld [vmem:[%s5 + $0xb0] sm:$0xff]
  %v898 = vld [vmem:[%s5 + $0xc0] sm:$0xff]
  %v899 = vld [vmem:[%s5 + $0xd0] sm:$0xff]
  %v900 = vld [vmem:[%s5 + $0xe0] sm:$0xff]
  %v901 = vld [vmem:[%s5 + $0xf0] sm:$0xff]
  %902 = vmatprep.subr.mxu0 0.0
  %903 = vmatpush1.msra.mxu0 %v886
  %904 = vmatprep.subr.mxu0 0.0
  %905 = vmatpush1.msra.mxu0 %v887
  %906 = vmatprep.subr.mxu0 0.0
  %907 = vmatpush1.msra.mxu0 %v888
  %908 = vmatprep.subr.mxu0 0.0
  %909 = vmatpush1.msra.mxu0 %v889
  %910 = vmatprep.subr.mxu0 0.0
  %911 = vmatpush1.msra.mxu0 %v890
  %912 = vmatprep.subr.mxu0 0.0
  %913 = vmatpush1.msra.mxu0 %v891
  %914 = vmatprep.subr.mxu0 0.0
  %915 = vmatpush1.msra.mxu0 %v892
  %916 = vmatprep.subr.mxu0 0.0
  %917 = vmatpush1.msra.mxu0 %v893
  %918 = vmatprep.subr.mxu0 0.0
  %919 = vmatpush1.msra.mxu0 %v894
  %920 = vmatprep.subr.mxu0 0.0
  %921 = vmatpush1.msra.mxu0 %v895
  %922 = vmatprep.subr.mxu0 0.0
  %923 = vmatpush1.msra.mxu0 %v896
  %924 = vmatprep.subr.mxu0 0.0
  %925 = vmatpush1.msra.mxu0 %v897
  %926 = vmatprep.subr.mxu0 0.0
  %927 = vmatpush1.msra.mxu0 %v898
  %928 = vmatprep.subr.mxu0 0.0
  %929 = vmatpush1.msra.mxu0 %v899
  %930 = vmatprep.subr.mxu0 0.0
  %931 = vmatpush1.msra.mxu0 %v900
  %932 = vmatprep.subr.mxu0 0.0
  %933 = vmatpush1.msra.mxu0 %v901
  %934 = vmatprep.subr.mxu0 0.0
  %935 = vmatpush1.msra.mxu0 0.0
  %936 = vmatprep.subr.mxu0 0.0
  %937 = vmatpush1.msra.mxu0 0.0
  %938 = vmatprep.subr.mxu0 0.0
  %939 = vmatpush1.msra.mxu0 0.0
  %940 = vmatprep.subr.mxu0 0.0
  %941 = vmatpush1.msra.mxu0 0.0
  %942 = vmatprep.subr.mxu0 0.0
  %943 = vmatpush1.msra.mxu0 0.0
  %944 = vmatprep.subr.mxu0 0.0
  %945 = vmatpush1.msra.mxu0 0.0
  %946 = vmatprep.subr.mxu0 0.0
  %947 = vmatpush1.msra.mxu0 0.0
  %948 = vmatprep.subr.mxu0 0.0
  %949 = vmatpush1.msra.mxu0 0.0
  %950 = vmatprep.subr.mxu0 0.0
  %951 = vmatpush1.msra.mxu0 0.0
  %952 = vmatprep.subr.mxu0 0.0
  %953 = vmatpush1.msra.mxu0 0.0
  %954 = vmatprep.subr.mxu0 0.0
  %955 = vmatpush1.msra.mxu0 0.0
  %956 = vmatprep.subr.mxu0 0.0
  %957 = vmatpush1.msra.mxu0 0.0
  %958 = vmatprep.subr.mxu0 0.0
  %959 = vmatpush1.msra.mxu0 0.0
  %960 = vmatprep.subr.mxu0 0.0
  %961 = vmatpush1.msra.mxu0 0.0
  %962 = vmatprep.subr.mxu0 0.0
  %963 = vmatpush1.msra.mxu0 0.0
  %964 = vmatprep.subr.mxu0 0.0
  %965 = vmatpush1.msra.mxu0 0.0
  %966 = vmatprep.mubr.f32.mxu0 0.0
  %967 = vmatmul.mubr.f32.gmra.mrb[0].mxu0 %v884
  %v968 = vpop.f32.mrb[0].mxu0
  %v969 = vadd.f32 0.0, %v968
  %v970 = vpop.f32.mrb[0].mxu0
  %971 = vmatprep.mubr.f32.mxu0 0.0
  %972 = vmatmul.mubr.f32.gmra.mrb[0].mxu0 %v885
  %v973 = vpop.f32.mrb[0].mxu0
  %v974 = vadd.f32 0.0, %v973
  %v975 = vpop.f32.mrb[0].mxu0
  %976 = vdwg.mxu0
  %v977 = vadd.f32 %v882, %v969
  %v978 = vadd.f32 %v883, %v974
  %v979 = vtanh.pop %v977
  %v980 = vtanh.pop %v978
  %s981 = scalar_lea.vmem %s1, 16
  %v982 = vld [vmem:[%s981] sm:$0xff]
  %v983 = vld [vmem:[%s981 + $0x8] sm:$0xff]
  %984 = vmatprep.subr.mxu0 %v818
  %985 = vmatpush1.msra.mxu0 %v817
  %986 = vmatprep.subr.mxu0 %v820
  %987 = vmatpush1.msra.mxu0 %v819
  %988 = vmatprep.subr.mxu0 %v822
  %989 = vmatpush1.msra.mxu0 %v821
  %990 = vmatprep.subr.mxu0 %v824
  %991 = vmatpush1.msra.mxu0 %v823
  %992 = vmatprep.subr.mxu0 %v826
  %993 = vmatpush1.msra.mxu0 %v825
  %994 = vmatprep.subr.mxu0 %v828
  %995 = vmatpush1.msra.mxu0 %v827
  %996 = vmatprep.subr.mxu0 %v830
  %997 = vmatpush1.msra.mxu0 %v829
  %998 = vmatprep.subr.mxu0 %v832
  %999 = vmatpush1.msra.mxu0 %v831
  %1000 = vmatprep.subr.mxu0 %v834
  %1001 = vmatpush1.msra.mxu0 %v833
  %1002 = vmatprep.subr.mxu0 %v836
  %1003 = vmatpush1.msra.mxu0 %v835
  %1004 = vmatprep.subr.mxu0 %v838
  %1005 = vmatpush1.msra.mxu0 %v837
  %1006 = vmatprep.subr.mxu0 %v840
  %1007 = vmatpush1.msra.mxu0 %v839
  %1008 = vmatprep.subr.mxu0 %v842
  %1009 = vmatpush1.msra.mxu0 %v841
  %1010 = vmatprep.subr.mxu0 %v844
  %1011 = vmatpush1.msra.mxu0 %v843
  %1012 = vmatprep.subr.mxu0 %v846
  %1013 = vmatpush1.msra.mxu0 %v845
  %1014 = vmatprep.subr.mxu0 %v848
  %1015 = vmatpush1.msra.mxu0 %v847
  %1016 = vmatprep.subr.mxu0 %v850
  %1017 = vmatpush1.msra.mxu0 %v849
  %1018 = vmatprep.subr.mxu0 %v852
  %1019 = vmatpush1.msra.mxu0 %v851
  %1020 = vmatprep.subr.mxu0 %v854
  %1021 = vmatpush1.msra.mxu0 %v853
  %1022 = vmatprep.subr.mxu0 %v856
  %1023 = vmatpush1.msra.mxu0 %v855
  %1024 = vmatprep.subr.mxu0 %v858
  %1025 = vmatpush1.msra.mxu0 %v857
  %1026 = vmatprep.subr.mxu0 %v860
  %1027 = vmatpush1.msra.mxu0 %v859
  %1028 = vmatprep.subr.mxu0 %v862
  %1029 = vmatpush1.msra.mxu0 %v861
  %1030 = vmatprep.subr.mxu0 %v864
  %1031 = vmatpush1.msra.mxu0 %v863
  %1032 = vmatprep.subr.mxu0 %v866
  %1033 = vmatpush1.msra.mxu0 %v865
  %1034 = vmatprep.subr.mxu0 %v868
  %1035 = vmatpush1.msra.mxu0 %v867
  %1036 = vmatprep.subr.mxu0 %v870
  %1037 = vmatpush1.msra.mxu0 %v869
  %1038 = vmatprep.subr.mxu0 %v872
  %1039 = vmatpush1.msra.mxu0 %v871
  %1040 = vmatprep.subr.mxu0 %v874
  %1041 = vmatpush1.msra.mxu0 %v873
  %1042 = vmatprep.subr.mxu0 %v876
  %1043 = vmatpush1.msra.mxu0 %v875
  %1044 = vmatprep.subr.mxu0 %v878
  %1045 = vmatpush1.msra.mxu0 %v877
  %1046 = vmatprep.subr.mxu0 %v880
  %1047 = vmatpush1.msra.mxu0 %v879
  %1048 = vmatprep.mubr.f32.mxu0 %v982
  %1049 = vmatmul.mubr.f32.gmra.mrb[0].mxu0 %v979
  %v1050 = vpop.f32.mrb[0].mxu0
  %v1051 = vadd.f32 0.0, %v1050
  %v1052 = vpop.f32.mrb[0].mxu0
  %v1053 = vadd.f32 0.0, %v1052
  %1054 = vmatprep.mubr.f32.mxu0 %v983
  %1055 = vmatmul.mubr.f32.gmra.mrb[0].mxu0 %v980
  %v1056 = vpop.f32.mrb[0].mxu0
  %v1057 = vadd.f32 0.0, %v1056
  %v1058 = vpop.f32.mrb[0].mxu0
  %v1059 = vadd.f32 0.0, %v1058
  %1060 = vdwg.mxu0
  %v1062 = vlaneseq
  %v1063 = vshrl.u32 %v1062, 7
  %v1064 = vsub.s32 0, %v1063
  %v1065 = vrot.slane %v881, %v1064
  %v1067 = vadd.f32 %v1053, %v1065
  %v1068 = vadd.f32 %v1059, %v1065
  %v1069 = vtanh.pop %v1067
  %v1070 = vtanh.pop %v1068
  %v1071 = vld [vmem:[%s254] sm:$0xff]
  %v1072 = vld [vmem:[%s254 + $0x8] sm:$0xff]
  %1073 = vst [vmem:[#allocation3] sm:$0xff] %v1069
  %1074 = vst [vmem:[#allocation3 + $0x8] sm:$0xff] %v1070
  %v1075 = vadd.f32 %v1051, %v1071
  %v1076 = vadd.f32 %v1057, %v1072
  %v1077 = vtanh.pop %v1075
  %v1078 = vtanh.pop %v1076
  %1079 = vmatprep.subr.mxu0 %v818
  %1080 = vmatpush1.msra.mxu0 %v817
  %1081 = vmatprep.subr.mxu0 %v820
  %1082 = vmatpush1.msra.mxu0 %v819
  %1083 = vmatprep.subr.mxu0 %v822
  %1084 = vmatpush1.msra.mxu0 %v821
  %1085 = vmatprep.subr.mxu0 %v824
  %1086 = vmatpush1.msra.mxu0 %v823
  %1087 = vmatprep.subr.mxu0 %v826
  %1088 = vmatpush1.msra.mxu0 %v825
  %1089 = vmatprep.subr.mxu0 %v828
  %1090 = vmatpush1.msra.mxu0 %v827
  %1091 = vmatprep.subr.mxu0 %v830
  %1092 = vmatpush1.msra.mxu0 %v829
  %1093 = vmatprep.subr.mxu0 %v832
  %1094 = vmatpush1.msra.mxu0 %v831
  %1095 = vmatprep.subr.mxu0 %v834
  %1096 = vmatpush1.msra.mxu0 %v833
  %1097 = vmatprep.subr.mxu0 %v836
  %1098 = vmatpush1.msra.mxu0 %v835
  %1099 = vmatprep.subr.mxu0 %v838
  %1100 = vmatpush1.msra.mxu0 %v837
  %1101 = vmatprep.subr.mxu0 %v840
  %1102 = vmatpush1.msra.mxu0 %v839
  %1103 = vmatprep.subr.mxu0 %v842
  %1104 = vmatpush1.msra.mxu0 %v841
  %1105 = vmatprep.subr.mxu0 %v844
  %1106 = vmatpush1.msra.mxu0 %v843
  %1107 = vmatprep.subr.mxu0 %v846
  %1108 = vmatpush1.msra.mxu0 %v845
  %1109 = vmatprep.subr.mxu0 %v848
  %1110 = vmatpush1.msra.mxu0 %v847
  %1111 = vmatprep.subr.mxu0 %v850
  %1112 = vmatpush1.msra.mxu0 %v849
  %1113 = vmatprep.subr.mxu0 %v852
  %1114 = vmatpush1.msra.mxu0 %v851
  %1115 = vmatprep.subr.mxu0 %v854
  %1116 = vmatpush1.msra.mxu0 %v853
  %1117 = vmatprep.subr.mxu0 %v856
  %1118 = vmatpush1.msra.mxu0 %v855
  %1119 = vmatprep.subr.mxu0 %v858
  %1120 = vmatpush1.msra.mxu0 %v857
  %1121 = vmatprep.subr.mxu0 %v860
  %1122 = vmatpush1.msra.mxu0 %v859
  %1123 = vmatprep.subr.mxu0 %v862
  %1124 = vmatpush1.msra.mxu0 %v861
  %1125 = vmatprep.subr.mxu0 %v864
  %1126 = vmatpush1.msra.mxu0 %v863
  %1127 = vmatprep.subr.mxu0 %v866
  %1128 = vmatpush1.msra.mxu0 %v865
  %1129 = vmatprep.subr.mxu0 %v868
  %1130 = vmatpush1.msra.mxu0 %v867
  %1131 = vmatprep.subr.mxu0 %v870
  %1132 = vmatpush1.msra.mxu0 %v869
  %1133 = vmatprep.subr.mxu0 %v872
  %1134 = vmatpush1.msra.mxu0 %v871
  %1135 = vmatprep.subr.mxu0 %v874
  %1136 = vmatpush1.msra.mxu0 %v873
  %1137 = vmatprep.subr.mxu0 %v876
  %1138 = vmatpush1.msra.mxu0 %v875
  %1139 = vmatprep.subr.mxu0 %v878
  %1140 = vmatpush1.msra.mxu0 %v877
  %1141 = vmatprep.subr.mxu0 %v880
  %1142 = vmatpush1.msra.mxu0 %v879
  %1143 = vmatprep.mubr.f32.mxu0 %v1069
  %1144 = vmatmul.mubr.f32.gmra.mrb[0].mxu0 %v1077
  %v1145 = vpop.f32.mrb[0].mxu0
  %v1146 = vadd.f32 0.0, %v1145
  %v1147 = vpop.f32.mrb[0].mxu0
  %v1148 = vadd.f32 0.0, %v1147
  %1149 = vmatprep.mubr.f32.mxu0 %v1070
  %1150 = vmatmul.mubr.f32.gmra.mrb[0].mxu0 %v1078
  %v1151 = vpop.f32.mrb[0].mxu0
  %v1152 = vadd.f32 0.0, %v1151
  %v1153 = vpop.f32.mrb[0].mxu0
  %v1154 = vadd.f32 0.0, %v1153
  %1155 = vdwg.mxu0
  %v1156 = vadd.f32 %v1148, %v1065
  %v1157 = vadd.f32 %v1154, %v1065
  %v1158 = vtanh.pop %v1156
  %v1159 = vtanh.pop %v1157
  %v1160 = vld [vmem:[%s335] sm:$0xff]
  %v1161 = vld [vmem:[%s335 + $0x8] sm:$0xff]
  %1162 = vst [vmem:[%s254] sm:$0xff] %v1158
  %1163 = vst [vmem:[%s254 + $0x8] sm:$0xff] %v1159
  %v1164 = vadd.f32 %v1146, %v1160
  %v1165 = vadd.f32 %v1152, %v1161
  %v1166 = vtanh.pop %v1164
  %v1167 = vtanh.pop %v1165
  %1168 = vmatprep.subr.mxu0 %v818
  %1169 = vmatpush1.msra.mxu0 %v817
  %1170 = vmatprep.subr.mxu0 %v820
  %1171 = vmatpush1.msra.mxu0 %v819
  %1172 = vmatprep.subr.mxu0 %v822
  %1173 = vmatpush1.msra.mxu0 %v821
  %1174 = vmatprep.subr.mxu0 %v824
  %1175 = vmatpush1.msra.mxu0 %v823
  %1176 = vmatprep.subr.mxu0 %v826
  %1177 = vmatpush1.msra.mxu0 %v825
  %1178 = vmatprep.subr.mxu0 %v828
  %1179 = vmatpush1.msra.mxu0 %v827
  %1180 = vmatprep.subr.mxu0 %v830
  %1181 = vmatpush1.msra.mxu0 %v829
  %1182 = vmatprep.subr.mxu0 %v832
  %1183 = vmatpush1.msra.mxu0 %v831
  %1184 = vmatprep.subr.mxu0 %v834
  %1185 = vmatpush1.msra.mxu0 %v833
  %1186 = vmatprep.subr.mxu0 %v836
  %1187 = vmatpush1.msra.mxu0 %v835
  %1188 = vmatprep.subr.mxu0 %v838
  %1189 = vmatpush1.msra.mxu0 %v837
  %1190 = vmatprep.subr.mxu0 %v840
  %1191 = vmatpush1.msra.mxu0 %v839
  %1192 = vmatprep.subr.mxu0 %v842
  %1193 = vmatpush1.msra.mxu0 %v841
  %1194 = vmatprep.subr.mxu0 %v844
  %1195 = vmatpush1.msra.mxu0 %v843
  %1196 = vmatprep.subr.mxu0 %v846
  %1197 = vmatpush1.msra.mxu0 %v845
  %1198 = vmatprep.subr.mxu0 %v848
  %1199 = vmatpush1.msra.mxu0 %v847
  %1200 = vmatprep.subr.mxu0 %v850
  %1201 = vmatpush1.msra.mxu0 %v849
  %1202 = vmatprep.subr.mxu0 %v852
  %1203 = vmatpush1.msra.mxu0 %v851
  %1204 = vmatprep.subr.mxu0 %v854
  %1205 = vmatpush1.msra.mxu0 %v853
  %1206 = vmatprep.subr.mxu0 %v856
  %1207 = vmatpush1.msra.mxu0 %v855
  %1208 = vmatprep.subr.mxu0 %v858
  %1209 = vmatpush1.msra.mxu0 %v857
  %1210 = vmatprep.subr.mxu0 %v860
  %1211 = vmatpush1.msra.mxu0 %v859
  %1212 = vmatprep.subr.mxu0 %v862
  %1213 = vmatpush1.msra.mxu0 %v861
  %1214 = vmatprep.subr.mxu0 %v864
  %1215 = vmatpush1.msra.mxu0 %v863
  %1216 = vmatprep.subr.mxu0 %v866
  %1217 = vmatpush1.msra.mxu0 %v865
  %1218 = vmatprep.subr.mxu0 %v868
  %1219 = vmatpush1.msra.mxu0 %v867
  %1220 = vmatprep.subr.mxu0 %v870
  %1221 = vmatpush1.msra.mxu0 %v869
  %1222 = vmatprep.subr.mxu0 %v872
  %1223 = vmatpush1.msra.mxu0 %v871
  %1224 = vmatprep.subr.mxu0 %v874
  %1225 = vmatpush1.msra.mxu0 %v873
  %1226 = vmatprep.subr.mxu0 %v876
  %1227 = vmatpush1.msra.mxu0 %v875
  %1228 = vmatprep.subr.mxu0 %v878
  %1229 = vmatpush1.msra.mxu0 %v877
  %1230 = vmatprep.subr.mxu0 %v880
  %1231 = vmatpush1.msra.mxu0 %v879
  %1232 = vmatprep.mubr.f32.mxu0 %v1158
  %1233 = vmatmul.mubr.f32.gmra.mrb[0].mxu0 %v1166
  %v1234 = vpop.f32.mrb[0].mxu0
  %v1235 = vadd.f32 0.0, %v1234
  %v1236 = vpop.f32.mrb[0].mxu0
  %v1237 = vadd.f32 0.0, %v1236
  %1238 = vmatprep.mubr.f32.mxu0 %v1159
  %1239 = vmatmul.mubr.f32.gmra.mrb[0].mxu0 %v1167
  %v1240 = vpop.f32.mrb[0].mxu0
  %v1241 = vadd.f32 0.0, %v1240
  %v1242 = vpop.f32.mrb[0].mxu0
  %v1243 = vadd.f32 0.0, %v1242
  %1244 = vdwg.mxu0
  %v1245 = vadd.f32 %v1237, %v1065
  %v1246 = vadd.f32 %v1243, %v1065
  %v1247 = vtanh.pop %v1245
  %v1248 = vtanh.pop %v1246
  %v1249 = vld [vmem:[%s416] sm:$0xff]
  %v1250 = vld [vmem:[%s416 + $0x8] sm:$0xff]
  %1251 = vst [vmem:[%s335] sm:$0xff] %v1247
  %1252 = vst [vmem:[%s335 + $0x8] sm:$0xff] %v1248
  %v1253 = vadd.f32 %v1235, %v1249
  %v1254 = vadd.f32 %v1241, %v1250
  %v1255 = vtanh.pop %v1253
  %v1256 = vtanh.pop %v1254
  %1257 = vmatprep.subr.mxu0 %v818
  %1258 = vmatpush1.msra.mxu0 %v817
  %1259 = vmatprep.subr.mxu0 %v820
  %1260 = vmatpush1.msra.mxu0 %v819
  %1261 = vmatprep.subr.mxu0 %v822
  %1262 = vmatpush1.msra.mxu0 %v821
  %1263 = vmatprep.subr.mxu0 %v824
  %1264 = vmatpush1.msra.mxu0 %v823
  %1265 = vmatprep.subr.mxu0 %v826
  %1266 = vmatpush1.msra.mxu0 %v825
  %1267 = vmatprep.subr.mxu0 %v828
  %1268 = vmatpush1.msra.mxu0 %v827
  %1269 = vmatprep.subr.mxu0 %v830
  %1270 = vmatpush1.msra.mxu0 %v829
  %1271 = vmatprep.subr.mxu0 %v832
  %1272 = vmatpush1.msra.mxu0 %v831
  %1273 = vmatprep.subr.mxu0 %v834
  %1274 = vmatpush1.msra.mxu0 %v833
  %1275 = vmatprep.subr.mxu0 %v836
  %1276 = vmatpush1.msra.mxu0 %v835
  %1277 = vmatprep.subr.mxu0 %v838
  %1278 = vmatpush1.msra.mxu0 %v837
  %1279 = vmatprep.subr.mxu0 %v840
  %1280 = vmatpush1.msra.mxu0 %v839
  %1281 = vmatprep.subr.mxu0 %v842
  %1282 = vmatpush1.msra.mxu0 %v841
  %1283 = vmatprep.subr.mxu0 %v844
  %1284 = vmatpush1.msra.mxu0 %v843
  %1285 = vmatprep.subr.mxu0 %v846
  %1286 = vmatpush1.msra.mxu0 %v845
  %1287 = vmatprep.subr.mxu0 %v848
  %1288 = vmatpush1.msra.mxu0 %v847
  %1289 = vmatprep.subr.mxu0 %v850
  %1290 = vmatpush1.msra.mxu0 %v849
  %1291 = vmatprep.subr.mxu0 %v852
  %1292 = vmatpush1.msra.mxu0 %v851
  %1293 = vmatprep.subr.mxu0 %v854
  %1294 = vmatpush1.msra.mxu0 %v853
  %1295 = vmatprep.subr.mxu0 %v856
  %1296 = vmatpush1.msra.mxu0 %v855
  %1297 = vmatprep.subr.mxu0 %v858
  %1298 = vmatpush1.msra.mxu0 %v857
  %1299 = vmatprep.subr.mxu0 %v860
  %1300 = vmatpush1.msra.mxu0 %v859
  %1301 = vmatprep.subr.mxu0 %v862
  %1302 = vmatpush1.msra.mxu0 %v861
  %1303 = vmatprep.subr.mxu0 %v864
  %1304 = vmatpush1.msra.mxu0 %v863
  %1305 = vmatprep.subr.mxu0 %v866
  %1306 = vmatpush1.msra.mxu0 %v865
  %1307 = vmatprep.subr.mxu0 %v868
  %1308 = vmatpush1.msra.mxu0 %v867
  %1309 = vmatprep.subr.mxu0 %v870
  %1310 = vmatpush1.msra.mxu0 %v869
  %1311 = vmatprep.subr.mxu0 %v872
  %1312 = vmatpush1.msra.mxu0 %v871
  %1313 = vmatprep.subr.mxu0 %v874
  %1314 = vmatpush1.msra.mxu0 %v873
  %1315 = vmatprep.subr.mxu0 %v876
  %1316 = vmatpush1.msra.mxu0 %v875
  %1317 = vmatprep.subr.mxu0 %v878
  %1318 = vmatpush1.msra.mxu0 %v877
  %1319 = vmatprep.subr.mxu0 %v880
  %1320 = vmatpush1.msra.mxu0 %v879
  %1321 = vmatprep.mubr.f32.mxu0 %v1247
  %1322 = vmatmul.mubr.f32.gmra.mrb[0].mxu0 %v1255
  %v1323 = vpop.f32.mrb[0].mxu0
  %v1324 = vadd.f32 0.0, %v1323
  %v1325 = vpop.f32.mrb[0].mxu0
  %v1326 = vadd.f32 0.0, %v1325
  %1327 = vmatprep.mubr.f32.mxu0 %v1248
  %1328 = vmatmul.mubr.f32.gmra.mrb[0].mxu0 %v1256
  %v1329 = vpop.f32.mrb[0].mxu0
  %v1330 = vadd.f32 0.0, %v1329
  %v1331 = vpop.f32.mrb[0].mxu0
  %v1332 = vadd.f32 0.0, %v1331
  %1333 = vdwg.mxu0
  %v1334 = vadd.f32 %v1326, %v1065
  %v1335 = vadd.f32 %v1332, %v1065
  %v1336 = vtanh.pop %v1334
  %v1337 = vtanh.pop %v1335
  %v1338 = vld [vmem:[%s497] sm:$0xff]
  %v1339 = vld [vmem:[%s497 + $0x8] sm:$0xff]
  %1340 = vst [vmem:[%s416] sm:$0xff] %v1336
  %1341 = vst [vmem:[%s416 + $0x8] sm:$0xff] %v1337
  %v1342 = vadd.f32 %v1324, %v1338
  %v1343 = vadd.f32 %v1330, %v1339
  %v1344 = vtanh.pop %v1342
  %v1345 = vtanh.pop %v1343
  %1346 = vmatprep.subr.mxu0 %v818
  %1347 = vmatpush1.msra.mxu0 %v817
  %1348 = vmatprep.subr.mxu0 %v820
  %1349 = vmatpush1.msra.mxu0 %v819
  %1350 = vmatprep.subr.mxu0 %v822
  %1351 = vmatpush1.msra.mxu0 %v821
  %1352 = vmatprep.subr.mxu0 %v824
  %1353 = vmatpush1.msra.mxu0 %v823
  %1354 = vmatprep.subr.mxu0 %v826
  %1355 = vmatpush1.msra.mxu0 %v825
  %1356 = vmatprep.subr.mxu0 %v828
  %1357 = vmatpush1.msra.mxu0 %v827
  %1358 = vmatprep.subr.mxu0 %v830
  %1359 = vmatpush1.msra.mxu0 %v829
  %1360 = vmatprep.subr.mxu0 %v832
  %1361 = vmatpush1.msra.mxu0 %v831
  %1362 = vmatprep.subr.mxu0 %v834
  %1363 = vmatpush1.msra.mxu0 %v833
  %1364 = vmatprep.subr.mxu0 %v836
  %1365 = vmatpush1.msra.mxu0 %v835
  %1366 = vmatprep.subr.mxu0 %v838
  %1367 = vmatpush1.msra.mxu0 %v837
  %1368 = vmatprep.subr.mxu0 %v840
  %1369 = vmatpush1.msra.mxu0 %v839
  %1370 = vmatprep.subr.mxu0 %v842
  %1371 = vmatpush1.msra.mxu0 %v841
  %1372 = vmatprep.subr.mxu0 %v844
  %1373 = vmatpush1.msra.mxu0 %v843
  %1374 = vmatprep.subr.mxu0 %v846
  %1375 = vmatpush1.msra.mxu0 %v845
  %1376 = vmatprep.subr.mxu0 %v848
  %1377 = vmatpush1.msra.mxu0 %v847
  %1378 = vmatprep.subr.mxu0 %v850
  %1379 = vmatpush1.msra.mxu0 %v849
  %1380 = vmatprep.subr.mxu0 %v852
  %1381 = vmatpush1.msra.mxu0 %v851
  %1382 = vmatprep.subr.mxu0 %v854
  %1383 = vmatpush1.msra.mxu0 %v853
  %1384 = vmatprep.subr.mxu0 %v856
  %1385 = vmatpush1.msra.mxu0 %v855
  %1386 = vmatprep.subr.mxu0 %v858
  %1387 = vmatpush1.msra.mxu0 %v857
  %1388 = vmatprep.subr.mxu0 %v860
  %1389 = vmatpush1.msra.mxu0 %v859
  %1390 = vmatprep.subr.mxu0 %v862
  %1391 = vmatpush1.msra.mxu0 %v861
  %1392 = vmatprep.subr.mxu0 %v864
  %1393 = vmatpush1.msra.mxu0 %v863
  %1394 = vmatprep.subr.mxu0 %v866
  %1395 = vmatpush1.msra.mxu0 %v865
  %1396 = vmatprep.subr.mxu0 %v868
  %1397 = vmatpush1.msra.mxu0 %v867
  %1398 = vmatprep.subr.mxu0 %v870
  %1399 = vmatpush1.msra.mxu0 %v869
  %1400 = vmatprep.subr.mxu0 %v872
  %1401 = vmatpush1.msra.mxu0 %v871
  %1402 = vmatprep.subr.mxu0 %v874
  %1403 = vmatpush1.msra.mxu0 %v873
  %1404 = vmatprep.subr.mxu0 %v876
  %1405 = vmatpush1.msra.mxu0 %v875
  %1406 = vmatprep.subr.mxu0 %v878
  %1407 = vmatpush1.msra.mxu0 %v877
  %1408 = vmatprep.subr.mxu0 %v880
  %1409 = vmatpush1.msra.mxu0 %v879
  %1410 = vmatprep.mubr.f32.mxu0 %v1336
  %1411 = vmatmul.mubr.f32.gmra.mrb[0].mxu0 %v1344
  %v1412 = vpop.f32.mrb[0].mxu0
  %v1413 = vadd.f32 0.0, %v1412
  %v1414 = vpop.f32.mrb[0].mxu0
  %v1415 = vadd.f32 0.0, %v1414
  %1416 = vmatprep.mubr.f32.mxu0 %v1337
  %1417 = vmatmul.mubr.f32.gmra.mrb[0].mxu0 %v1345
  %v1418 = vpop.f32.mrb[0].mxu0
  %v1419 = vadd.f32 0.0, %v1418
  %v1420 = vpop.f32.mrb[0].mxu0
  %v1421 = vadd.f32 0.0, %v1420
  %1422 = vdwg.mxu0
  %v1423 = vadd.f32 %v1415, %v1065
  %v1424 = vadd.f32 %v1421, %v1065
  %v1425 = vtanh.pop %v1423
  %v1426 = vtanh.pop %v1424
  %v1427 = vld [vmem:[%s578] sm:$0xff]
  %v1428 = vld [vmem:[%s578 + $0x8] sm:$0xff]
  %1429 = vst [vmem:[%s497] sm:$0xff] %v1425
  %1430 = vst [vmem:[%s497 + $0x8] sm:$0xff] %v1426
  %v1431 = vadd.f32 %v1413, %v1427
  %v1432 = vadd.f32 %v1419, %v1428
  %v1433 = vtanh.pop %v1431
  %v1434 = vtanh.pop %v1432
  %1435 = vmatprep.subr.mxu0 %v818
  %1436 = vmatpush1.msra.mxu0 %v817
  %1437 = vmatprep.subr.mxu0 %v820
  %1438 = vmatpush1.msra.mxu0 %v819
  %1439 = vmatprep.subr.mxu0 %v822
  %1440 = vmatpush1.msra.mxu0 %v821
  %1441 = vmatprep.subr.mxu0 %v824
  %1442 = vmatpush1.msra.mxu0 %v823
  %1443 = vmatprep.subr.mxu0 %v826
  %1444 = vmatpush1.msra.mxu0 %v825
  %1445 = vmatprep.subr.mxu0 %v828
  %1446 = vmatpush1.msra.mxu0 %v827
  %1447 = vmatprep.subr.mxu0 %v830
  %1448 = vmatpush1.msra.mxu0 %v829
  %1449 = vmatprep.subr.mxu0 %v832
  %1450 = vmatpush1.msra.mxu0 %v831
  %1451 = vmatprep.subr.mxu0 %v834
  %1452 = vmatpush1.msra.mxu0 %v833
  %1453 = vmatprep.subr.mxu0 %v836
  %1454 = vmatpush1.msra.mxu0 %v835
  %1455 = vmatprep.subr.mxu0 %v838
  %1456 = vmatpush1.msra.mxu0 %v837
  %1457 = vmatprep.subr.mxu0 %v840
  %1458 = vmatpush1.msra.mxu0 %v839
  %1459 = vmatprep.subr.mxu0 %v842
  %1460 = vmatpush1.msra.mxu0 %v841
  %1461 = vmatprep.subr.mxu0 %v844
  %1462 = vmatpush1.msra.mxu0 %v843
  %1463 = vmatprep.subr.mxu0 %v846
  %1464 = vmatpush1.msra.mxu0 %v845
  %1465 = vmatprep.subr.mxu0 %v848
  %1466 = vmatpush1.msra.mxu0 %v847
  %1467 = vmatprep.subr.mxu0 %v850
  %1468 = vmatpush1.msra.mxu0 %v849
  %1469 = vmatprep.subr.mxu0 %v852
  %1470 = vmatpush1.msra.mxu0 %v851
  %1471 = vmatprep.subr.mxu0 %v854
  %1472 = vmatpush1.msra.mxu0 %v853
  %1473 = vmatprep.subr.mxu0 %v856
  %1474 = vmatpush1.msra.mxu0 %v855
  %1475 = vmatprep.subr.mxu0 %v858
  %1476 = vmatpush1.msra.mxu0 %v857
  %1477 = vmatprep.subr.mxu0 %v860
  %1478 = vmatpush1.msra.mxu0 %v859
  %1479 = vmatprep.subr.mxu0 %v862
  %1480 = vmatpush1.msra.mxu0 %v861
  %1481 = vmatprep.subr.mxu0 %v864
  %1482 = vmatpush1.msra.mxu0 %v863
  %1483 = vmatprep.subr.mxu0 %v866
  %1484 = vmatpush1.msra.mxu0 %v865
  %1485 = vmatprep.subr.mxu0 %v868
  %1486 = vmatpush1.msra.mxu0 %v867
  %1487 = vmatprep.subr.mxu0 %v870
  %1488 = vmatpush1.msra.mxu0 %v869
  %1489 = vmatprep.subr.mxu0 %v872
  %1490 = vmatpush1.msra.mxu0 %v871
  %1491 = vmatprep.subr.mxu0 %v874
  %1492 = vmatpush1.msra.mxu0 %v873
  %1493 = vmatprep.subr.mxu0 %v876
  %1494 = vmatpush1.msra.mxu0 %v875
  %1495 = vmatprep.subr.mxu0 %v878
  %1496 = vmatpush1.msra.mxu0 %v877
  %1497 = vmatprep.subr.mxu0 %v880
  %1498 = vmatpush1.msra.mxu0 %v879
  %1499 = vmatprep.mubr.f32.mxu0 %v1425
  %1500 = vmatmul.mubr.f32.gmra.mrb[0].mxu0 %v1433
  %v1501 = vpop.f32.mrb[0].mxu0
  %v1502 = vadd.f32 0.0, %v1501
  %v1503 = vpop.f32.mrb[0].mxu0
  %v1504 = vadd.f32 0.0, %v1503
  %1505 = vmatprep.mubr.f32.mxu0 %v1426
  %1506 = vmatmul.mubr.f32.gmra.mrb[0].mxu0 %v1434
  %v1507 = vpop.f32.mrb[0].mxu0
  %v1508 = vadd.f32 0.0, %v1507
  %v1509 = vpop.f32.mrb[0].mxu0
  %v1510 = vadd.f32 0.0, %v1509
  %1511 = vdwg.mxu0
  %v1512 = vadd.f32 %v1504, %v1065
  %v1513 = vadd.f32 %v1510, %v1065
  %v1514 = vtanh.pop %v1512
  %v1515 = vtanh.pop %v1513
  %v1516 = vld [vmem:[%s659] sm:$0xff]
  %v1517 = vld [vmem:[%s659 + $0x8] sm:$0xff]
  %1518 = vst [vmem:[%s578] sm:$0xff] %v1514
  %1519 = vst [vmem:[%s578 + $0x8] sm:$0xff] %v1515
  %v1520 = vadd.f32 %v1502, %v1516
  %v1521 = vadd.f32 %v1508, %v1517
  %v1522 = vtanh.pop %v1520
  %v1523 = vtanh.pop %v1521
  %1524 = vmatprep.subr.mxu0 %v818
  %1525 = vmatpush1.msra.mxu0 %v817
  %1526 = vmatprep.subr.mxu0 %v820
  %1527 = vmatpush1.msra.mxu0 %v819
  %1528 = vmatprep.subr.mxu0 %v822
  %1529 = vmatpush1.msra.mxu0 %v821
  %1530 = vmatprep.subr.mxu0 %v824
  %1531 = vmatpush1.msra.mxu0 %v823
  %1532 = vmatprep.subr.mxu0 %v826
  %1533 = vmatpush1.msra.mxu0 %v825
  %1534 = vmatprep.subr.mxu0 %v828
  %1535 = vmatpush1.msra.mxu0 %v827
  %1536 = vmatprep.subr.mxu0 %v830
  %1537 = vmatpush1.msra.mxu0 %v829
  %1538 = vmatprep.subr.mxu0 %v832
  %1539 = vmatpush1.msra.mxu0 %v831
  %1540 = vmatprep.subr.mxu0 %v834
  %1541 = vmatpush1.msra.mxu0 %v833
  %1542 = vmatprep.subr.mxu0 %v836
  %1543 = vmatpush1.msra.mxu0 %v835
  %1544 = vmatprep.subr.mxu0 %v838
  %1545 = vmatpush1.msra.mxu0 %v837
  %1546 = vmatprep.subr.mxu0 %v840
  %1547 = vmatpush1.msra.mxu0 %v839
  %1548 = vmatprep.subr.mxu0 %v842
  %1549 = vmatpush1.msra.mxu0 %v841
  %1550 = vmatprep.subr.mxu0 %v844
  %1551 = vmatpush1.msra.mxu0 %v843
  %1552 = vmatprep.subr.mxu0 %v846
  %1553 = vmatpush1.msra.mxu0 %v845
  %1554 = vmatprep.subr.mxu0 %v848
  %1555 = vmatpush1.msra.mxu0 %v847
  %1556 = vmatprep.subr.mxu0 %v850
  %1557 = vmatpush1.msra.mxu0 %v849
  %1558 = vmatprep.subr.mxu0 %v852
  %1559 = vmatpush1.msra.mxu0 %v851
  %1560 = vmatprep.subr.mxu0 %v854
  %1561 = vmatpush1.msra.mxu0 %v853
  %1562 = vmatprep.subr.mxu0 %v856
  %1563 = vmatpush1.msra.mxu0 %v855
  %1564 = vmatprep.subr.mxu0 %v858
  %1565 = vmatpush1.msra.mxu0 %v857
  %1566 = vmatprep.subr.mxu0 %v860
  %1567 = vmatpush1.msra.mxu0 %v859
  %1568 = vmatprep.subr.mxu0 %v862
  %1569 = vmatpush1.msra.mxu0 %v861
  %1570 = vmatprep.subr.mxu0 %v864
  %1571 = vmatpush1.msra.mxu0 %v863
  %1572 = vmatprep.subr.mxu0 %v866
  %1573 = vmatpush1.msra.mxu0 %v865
  %1574 = vmatprep.subr.mxu0 %v868
  %1575 = vmatpush1.msra.mxu0 %v867
  %1576 = vmatprep.subr.mxu0 %v870
  %1577 = vmatpush1.msra.mxu0 %v869
  %1578 = vmatprep.subr.mxu0 %v872
  %1579 = vmatpush1.msra.mxu0 %v871
  %1580 = vmatprep.subr.mxu0 %v874
  %1581 = vmatpush1.msra.mxu0 %v873
  %1582 = vmatprep.subr.mxu0 %v876
  %1583 = vmatpush1.msra.mxu0 %v875
  %1584 = vmatprep.subr.mxu0 %v878
  %1585 = vmatpush1.msra.mxu0 %v877
  %1586 = vmatprep.subr.mxu0 %v880
  %1587 = vmatpush1.msra.mxu0 %v879
  %1588 = vmatprep.mubr.f32.mxu0 %v1514
  %1589 = vmatmul.mubr.f32.gmra.mrb[0].mxu0 %v1522
  %v1590 = vpop.f32.mrb[0].mxu0
  %v1591 = vadd.f32 0.0, %v1590
  %v1592 = vpop.f32.mrb[0].mxu0
  %v1593 = vadd.f32 0.0, %v1592
  %1594 = vmatprep.mubr.f32.mxu0 %v1515
  %1595 = vmatmul.mubr.f32.gmra.mrb[0].mxu0 %v1523
  %v1596 = vpop.f32.mrb[0].mxu0
  %v1597 = vadd.f32 0.0, %v1596
  %v1598 = vpop.f32.mrb[0].mxu0
  %v1599 = vadd.f32 0.0, %v1598
  %1600 = vdwg.mxu0
  %v1601 = vadd.f32 %v1593, %v1065
  %v1602 = vadd.f32 %v1599, %v1065
  %v1603 = vtanh.pop %v1601
  %v1604 = vtanh.pop %v1602
  %v1605 = vld [vmem:[%s740] sm:$0xff]
  %v1606 = vld [vmem:[%s740 + $0x8] sm:$0xff]
  %1607 = vst [vmem:[%s659] sm:$0xff] %v1603
  %1608 = vst [vmem:[%s659 + $0x8] sm:$0xff] %v1604
  %v1609 = vadd.f32 %v1591, %v1605
  %v1610 = vadd.f32 %v1597, %v1606
  %v1611 = vtanh.pop %v1609
  %v1612 = vtanh.pop %v1610
  %1613 = vmatprep.subr.mxu0 %v818
  %1614 = vmatpush1.msra.mxu0 %v817
  %1615 = vmatprep.subr.mxu0 %v820
  %1616 = vmatpush1.msra.mxu0 %v819
  %1617 = vmatprep.subr.mxu0 %v822
  %1618 = vmatpush1.msra.mxu0 %v821
  %1619 = vmatprep.subr.mxu0 %v824
  %1620 = vmatpush1.msra.mxu0 %v823
  %1621 = vmatprep.subr.mxu0 %v826
  %1622 = vmatpush1.msra.mxu0 %v825
  %1623 = vmatprep.subr.mxu0 %v828
  %1624 = vmatpush1.msra.mxu0 %v827
  %1625 = vmatprep.subr.mxu0 %v830
  %1626 = vmatpush1.msra.mxu0 %v829
  %1627 = vmatprep.subr.mxu0 %v832
  %1628 = vmatpush1.msra.mxu0 %v831
  %1629 = vmatprep.subr.mxu0 %v834
  %1630 = vmatpush1.msra.mxu0 %v833
  %1631 = vmatprep.subr.mxu0 %v836
  %1632 = vmatpush1.msra.mxu0 %v835
  %1633 = vmatprep.subr.mxu0 %v838
  %1634 = vmatpush1.msra.mxu0 %v837
  %1635 = vmatprep.subr.mxu0 %v840
  %1636 = vmatpush1.msra.mxu0 %v839
  %1637 = vmatprep.subr.mxu0 %v842
  %1638 = vmatpush1.msra.mxu0 %v841
  %1639 = vmatprep.subr.mxu0 %v844
  %1640 = vmatpush1.msra.mxu0 %v843
  %1641 = vmatprep.subr.mxu0 %v846
  %1642 = vmatpush1.msra.mxu0 %v845
  %1643 = vmatprep.subr.mxu0 %v848
  %1644 = vmatpush1.msra.mxu0 %v847
  %1645 = vmatprep.subr.mxu0 %v850
  %1646 = vmatpush1.msra.mxu0 %v849
  %1647 = vmatprep.subr.mxu0 %v852
  %1648 = vmatpush1.msra.mxu0 %v851
  %1649 = vmatprep.subr.mxu0 %v854
  %1650 = vmatpush1.msra.mxu0 %v853
  %1651 = vmatprep.subr.mxu0 %v856
  %1652 = vmatpush1.msra.mxu0 %v855
  %1653 = vmatprep.subr.mxu0 %v858
  %1654 = vmatpush1.msra.mxu0 %v857
  %1655 = vmatprep.subr.mxu0 %v860
  %1656 = vmatpush1.msra.mxu0 %v859
  %1657 = vmatprep.subr.mxu0 %v862
  %1658 = vmatpush1.msra.mxu0 %v861
  %1659 = vmatprep.subr.mxu0 %v864
  %1660 = vmatpush1.msra.mxu0 %v863
  %1661 = vmatprep.subr.mxu0 %v866
  %1662 = vmatpush1.msra.mxu0 %v865
  %1663 = vmatprep.subr.mxu0 %v868
  %1664 = vmatpush1.msra.mxu0 %v867
  %1665 = vmatprep.subr.mxu0 %v870
  %1666 = vmatpush1.msra.mxu0 %v869
  %1667 = vmatprep.subr.mxu0 %v872
  %1668 = vmatpush1.msra.mxu0 %v871
  %1669 = vmatprep.subr.mxu0 %v874
  %1670 = vmatpush1.msra.mxu0 %v873
  %1671 = vmatprep.subr.mxu0 %v876
  %1672 = vmatpush1.msra.mxu0 %v875
  %1673 = vmatprep.subr.mxu0 %v878
  %1674 = vmatpush1.msra.mxu0 %v877
  %1675 = vmatprep.subr.mxu0 %v880
  %1676 = vmatpush1.msra.mxu0 %v879
  %1677 = vmatprep.mubr.f32.mxu0 %v1603
  %1678 = vmatmul.mubr.f32.gmra.mrb[0].mxu0 %v1611
  %v1679 = vpop.f32.mrb[0].mxu0
  %v1680 = vpop.f32.mrb[0].mxu0
  %v1681 = vadd.f32 0.0, %v1680
  %1682 = vmatprep.mubr.f32.mxu0 %v1604
  %1683 = vmatmul.mubr.f32.gmra.mrb[0].mxu0 %v1612
  %v1684 = vpop.f32.mrb[0].mxu0
  %v1685 = vpop.f32.mrb[0].mxu0
  %v1686 = vadd.f32 0.0, %v1685
  %1687 = vdwg.mxu0
  %v1688 = vadd.f32 %v1681, %v1065
  %v1689 = vadd.f32 %v1686, %v1065
  %v1690 = vtanh.pop %v1688
  %v1691 = vtanh.pop %v1689
  %1692 = vst [vmem:[%s740] sm:$0xff] %v1690
  %1693 = vst [vmem:[%s740 + $0x8] sm:$0xff] %v1691
  %1694 = vst [vmem:[%s10] sm:$0xff] %v1611
  %1695 = vst [vmem:[%s10 + $0x8] sm:$0xff] %v1612
  %s1696 = scalar_lea.vmem %s10, 16
  %1697 = vst [vmem:[%s1696] sm:$0xff] %v1690
  %1698 = vst [vmem:[%s1696 + $0x8] sm:$0xff] %v1691
  %v1699 = vld [vmem:[#allocation3] sm:$0xff]
  %v1700 = vld [vmem:[#allocation3 + $0x8] sm:$0xff]
  %v1701 = vld [vmem:[#allocation3 + $0x10] sm:$0xff]
  %v1702 = vld [vmem:[#allocation3 + $0x18] sm:$0xff]
  %v1703 = vld [vmem:[#allocation3 + $0x20] sm:$0xff]
  %v1704 = vld [vmem:[#allocation3 + $0x28] sm:$0xff]
  %v1705 = vld [vmem:[#allocation3 + $0x30] sm:$0xff]
  %v1706 = vld [vmem:[#allocation3 + $0x38] sm:$0xff]
  %v1707 = vld [vmem:[#allocation3 + $0x40] sm:$0xff]
  %v1708 = vld [vmem:[#allocation3 + $0x48] sm:$0xff]
  %v1709 = vld [vmem:[#allocation3 + $0x50] sm:$0xff]
  %v1710 = vld [vmem:[#allocation3 + $0x58] sm:$0xff]
  %v1711 = vld [vmem:[#allocation3 + $0x60] sm:$0xff]
  %v1712 = vld [vmem:[#allocation3 + $0x68] sm:$0xff]
  %v1713 = vld [vmem:[#allocation3 + $0x70] sm:$0xff]
  %v1714 = vld [vmem:[#allocation3 + $0x78] sm:$0xff]
  %v1715 = vld [vmem:[%s7] sm:$0xff]
  %v1716 = vld [vmem:[%s7 + $0x8] sm:$0xff]
  %v1717 = vld [vmem:[%s7 + $0x10] sm:$0xff]
  %v1718 = vld [vmem:[%s7 + $0x18] sm:$0xff]
  %v1719 = vld [vmem:[%s7 + $0x20] sm:$0xff]
  %v1720 = vld [vmem:[%s7 + $0x28] sm:$0xff]
  %v1721 = vld [vmem:[%s7 + $0x30] sm:$0xff]
  %v1722 = vld [vmem:[%s7 + $0x38] sm:$0xff]
  %v1723 = vld [vmem:[%s7 + $0x40] sm:$0xff]
  %v1724 = vld [vmem:[%s7 + $0x48] sm:$0xff]
  %v1725 = vld [vmem:[%s7 + $0x50] sm:$0xff]
  %v1726 = vld [vmem:[%s7 + $0x58] sm:$0xff]
  %v1727 = vld [vmem:[%s7 + $0x60] sm:$0xff]
  %v1728 = vld [vmem:[%s7 + $0x68] sm:$0xff]
  %v1729 = vld [vmem:[%s7 + $0x70] sm:$0xff]
  %v1730 = vld [vmem:[%s7 + $0x78] sm:$0xff]
  %v1731 = vld [vmem:[%s8] sm:$0x1]
  %v1733 = vlaneseq
  %v1734 = vshrl.u32 %v1733, 7
  %v1735 = vsub.s32 0, %v1734
  %v1736 = vrot.slane %v1731, %v1735
  %1738 = vmatprep.subr.mxu0 0.0
  %1739 = vmatpush1.msra.mxu0 %v1715
  %1740 = vmatprep.subr.mxu0 0.0
  %1741 = vmatpush1.msra.mxu0 %v1716
  %1742 = vmatprep.subr.mxu0 0.0
  %1743 = vmatpush1.msra.mxu0 %v1717
  %1744 = vmatprep.subr.mxu0 0.0
  %1745 = vmatpush1.msra.mxu0 %v1718
  %1746 = vmatprep.subr.mxu0 0.0
  %1747 = vmatpush1.msra.mxu0 %v1719
  %1748 = vmatprep.subr.mxu0 0.0
  %1749 = vmatpush1.msra.mxu0 %v1720
  %1750 = vmatprep.subr.mxu0 0.0
  %1751 = vmatpush1.msra.mxu0 %v1721
  %1752 = vmatprep.subr.mxu0 0.0
  %1753 = vmatpush1.msra.mxu0 %v1722
  %1754 = vmatprep.subr.mxu0 0.0
  %1755 = vmatpush1.msra.mxu0 %v1723
  %1756 = vmatprep.subr.mxu0 0.0
  %1757 = vmatpush1.msra.mxu0 %v1724
  %1758 = vmatprep.subr.mxu0 0.0
  %1759 = vmatpush1.msra.mxu0 %v1725
  %1760 = vmatprep.subr.mxu0 0.0
  %1761 = vmatpush1.msra.mxu0 %v1726
  %1762 = vmatprep.subr.mxu0 0.0
  %1763 = vmatpush1.msra.mxu0 %v1727
  %1764 = vmatprep.subr.mxu0 0.0
  %1765 = vmatpush1.msra.mxu0 %v1728
  %1766 = vmatprep.subr.mxu0 0.0
  %1767 = vmatpush1.msra.mxu0 %v1729
  %1768 = vmatprep.subr.mxu0 0.0
  %1769 = vmatpush1.msra.mxu0 %v1730
  %1770 = vmatprep.subr.mxu0 0.0
  %1771 = vmatpush1.msra.mxu0 0.0
  %1772 = vmatprep.subr.mxu0 0.0
  %1773 = vmatpush1.msra.mxu0 0.0
  %1774 = vmatprep.subr.mxu0 0.0
  %1775 = vmatpush1.msra.mxu0 0.0
  %1776 = vmatprep.subr.mxu0 0.0
  %1777 = vmatpush1.msra.mxu0 0.0
  %1778 = vmatprep.subr.mxu0 0.0
  %1779 = vmatpush1.msra.mxu0 0.0
  %1780 = vmatprep.subr.mxu0 0.0
  %1781 = vmatpush1.msra.mxu0 0.0
  %1782 = vmatprep.subr.mxu0 0.0
  %1783 = vmatpush1.msra.mxu0 0.0
  %1784 = vmatprep.subr.mxu0 0.0
  %1785 = vmatpush1.msra.mxu0 0.0
  %1786 = vmatprep.subr.mxu0 0.0
  %1787 = vmatpush1.msra.mxu0 0.0
  %1788 = vmatprep.subr.mxu0 0.0
  %1789 = vmatpush1.msra.mxu0 0.0
  %1790 = vmatprep.subr.mxu0 0.0
  %1791 = vmatpush1.msra.mxu0 0.0
  %1792 = vmatprep.subr.mxu0 0.0
  %1793 = vmatpush1.msra.mxu0 0.0
  %1794 = vmatprep.subr.mxu0 0.0
  %1795 = vmatpush1.msra.mxu0 0.0
  %1796 = vmatprep.subr.mxu0 0.0
  %1797 = vmatpush1.msra.mxu0 0.0
  %1798 = vmatprep.subr.mxu0 0.0
  %1799 = vmatpush1.msra.mxu0 0.0
  %1800 = vmatprep.subr.mxu0 0.0
  %1801 = vmatpush1.msra.mxu0 0.0
  %1802 = vmatprep.mubr.f32.mxu0 0.0
  %1803 = vmatmul.mubr.f32.gmra.mrb[0].mxu0 %v1699
  %v1804 = vpop.f32.mrb[0].mxu0
  %v1805 = vadd.f32 %v1736, %v1804
  %v1806 = vpop.f32.mrb[0].mxu0
  %1807 = vmatprep.mubr.f32.mxu0 0.0
  %1808 = vmatmul.mubr.f32.gmra.mrb[0].mxu0 %v1700
  %v1809 = vpop.f32.mrb[0].mxu0
  %v1810 = vadd.f32 %v1736, %v1809
  %v1811 = vpop.f32.mrb[0].mxu0
  %1812 = vmatprep.mubr.f32.mxu0 0.0
  %1813 = vmatmul.mubr.f32.gmra.mrb[0].mxu0 %v1701
  %v1814 = vpop.f32.mrb[0].mxu0
  %v1815 = vadd.f32 %v1736, %v1814
  %v1816 = vpop.f32.mrb[0].mxu0
  %1817 = vmatprep.mubr.f32.mxu0 0.0
  %1818 = vmatmul.mubr.f32.gmra.mrb[0].mxu0 %v1702
  %v1819 = vpop.f32.mrb[0].mxu0
  %v1820 = vadd.f32 %v1736, %v1819
  %v1821 = vpop.f32.mrb[0].mxu0
  %1822 = vmatprep.mubr.f32.mxu0 0.0
  %1823 = vmatmul.mubr.f32.gmra.mrb[0].mxu0 %v1703
  %v1824 = vpop.f32.mrb[0].mxu0
  %v1825 = vadd.f32 %v1736, %v1824
  %v1826 = vpop.f32.mrb[0].mxu0
  %1827 = vmatprep.mubr.f32.mxu0 0.0
  %1828 = vmatmul.mubr.f32.gmra.mrb[0].mxu0 %v1704
  %v1829 = vpop.f32.mrb[0].mxu0
  %v1830 = vadd.f32 %v1736, %v1829
  %v1831 = vpop.f32.mrb[0].mxu0
  %1832 = vmatprep.mubr.f32.mxu0 0.0
  %1833 = vmatmul.mubr.f32.gmra.mrb[0].mxu0 %v1705
  %v1834 = vpop.f32.mrb[0].mxu0
  %v1835 = vadd.f32 %v1736, %v1834
  %v1836 = vpop.f32.mrb[0].mxu0
  %1837 = vmatprep.mubr.f32.mxu0 0.0
  %1838 = vmatmul.mubr.f32.gmra.mrb[0].mxu0 %v1706
  %v1839 = vpop.f32.mrb[0].mxu0
  %v1840 = vadd.f32 %v1736, %v1839
  %v1841 = vpop.f32.mrb[0].mxu0
  %1842 = vmatprep.mubr.f32.mxu0 0.0
  %1843 = vmatmul.mubr.f32.gmra.mrb[0].mxu0 %v1707
  %v1844 = vpop.f32.mrb[0].mxu0
  %v1845 = vadd.f32 %v1736, %v1844
  %v1846 = vpop.f32.mrb[0].mxu0
  %1847 = vmatprep.mubr.f32.mxu0 0.0
  %1848 = vmatmul.mubr.f32.gmra.mrb[0].mxu0 %v1708
  %v1849 = vpop.f32.mrb[0].mxu0
  %v1850 = vadd.f32 %v1736, %v1849
  %v1851 = vpop.f32.mrb[0].mxu0
  %1852 = vmatprep.mubr.f32.mxu0 0.0
  %1853 = vmatmul.mubr.f32.gmra.mrb[0].mxu0 %v1709
  %v1854 = vpop.f32.mrb[0].mxu0
  %v1855 = vadd.f32 %v1736, %v1854
  %v1856 = vpop.f32.mrb[0].mxu0
  %1857 = vmatprep.mubr.f32.mxu0 0.0
  %1858 = vmatmul.mubr.f32.gmra.mrb[0].mxu0 %v1710
  %v1859 = vpop.f32.mrb[0].mxu0
  %v1860 = vadd.f32 %v1736, %v1859
  %v1861 = vpop.f32.mrb[0].mxu0
  %1862 = vmatprep.mubr.f32.mxu0 0.0
  %1863 = vmatmul.mubr.f32.gmra.mrb[0].mxu0 %v1711
  %v1864 = vpop.f32.mrb[0].mxu0
  %v1865 = vadd.f32 %v1736, %v1864
  %v1866 = vpop.f32.mrb[0].mxu0
  %1867 = vmatprep.mubr.f32.mxu0 0.0
  %1868 = vmatmul.mubr.f32.gmra.mrb[0].mxu0 %v1712
  %v1869 = vpop.f32.mrb[0].mxu0
  %v1870 = vadd.f32 %v1736, %v1869
  %v1871 = vpop.f32.mrb[0].mxu0
  %1872 = vmatprep.mubr.f32.mxu0 0.0
  %1873 = vmatmul.mubr.f32.gmra.mrb[0].mxu0 %v1713
  %v1874 = vpop.f32.mrb[0].mxu0
  %v1875 = vadd.f32 %v1736, %v1874
  %v1876 = vpop.f32.mrb[0].mxu0
  %1877 = vmatprep.mubr.f32.mxu0 0.0
  %1878 = vmatmul.mubr.f32.gmra.mrb[0].mxu0 %v1714
  %v1879 = vpop.f32.mrb[0].mxu0
  %v1880 = vadd.f32 %v1736, %v1879
  %v1881 = vpop.f32.mrb[0].mxu0
  %1882 = vdwg.mxu0
  %1883 = vst [vmem:[%s9] sm:$0xff] %v1805
  %1884 = vst [vmem:[%s9 + $0x8] sm:$0xff] %v1810
  %1885 = vst [vmem:[%s9 + $0x10] sm:$0xff] %v1815
  %1886 = vst [vmem:[%s9 + $0x18] sm:$0xff] %v1820
  %1887 = vst [vmem:[%s9 + $0x20] sm:$0xff] %v1825
  %1888 = vst [vmem:[%s9 + $0x28] sm:$0xff] %v1830
  %1889 = vst [vmem:[%s9 + $0x30] sm:$0xff] %v1835
  %1890 = vst [vmem:[%s9 + $0x38] sm:$0xff] %v1840
  %1891 = vst [vmem:[%s9 + $0x40] sm:$0xff] %v1845
  %1892 = vst [vmem:[%s9 + $0x48] sm:$0xff] %v1850
  %1893 = vst [vmem:[%s9 + $0x50] sm:$0xff] %v1855
  %1894 = vst [vmem:[%s9 + $0x58] sm:$0xff] %v1860
  %1895 = vst [vmem:[%s9 + $0x60] sm:$0xff] %v1865
  %1896 = vst [vmem:[%s9 + $0x68] sm:$0xff] %v1870
  %1897 = vst [vmem:[%s9 + $0x70] sm:$0xff] %v1875
  %1898 = vst [vmem:[%s9 + $0x78] sm:$0xff] %v1880
  // Predicated region
  $region34: #{rnn_forward.1} parent=0 // pred_check
    _
  $region35: #{rnn_forward.1} parent=0 // pred_check_branch
    %1900 = sbr.rel (0) target = $region37
  $region36: #{rnn_forward.1} parent=0 // pred_region
    _
  $region37: #{rnn_forward.1} parent=0 // pred_fallthru
    _
  // Predicated region
  $region38: #{rnn_forward.1} parent=0 // pred_check
    _
  $region39: #{rnn_forward.1} parent=0 // pred_check_branch
    %1902 = sbr.rel (0) target = $region41
  $region40: #{rnn_forward.1} parent=0 // pred_region
    _
  $region41: #{rnn_forward.1} parent=0 // pred_fallthru
    _
  // Predicated region
  $region42: #{rnn_forward.1} parent=0 // pred_check
    _
  $region43: #{rnn_forward.1} parent=0 // pred_check_branch
    %1904 = sbr.rel (0) target = $region45
  $region44: #{rnn_forward.1} parent=0 // pred_region
    _
  $region45: #{rnn_forward.1} parent=0 // pred_fallthru
    _
  // Predicated region
  $region46: #{rnn_forward.1} parent=0 // pred_check
    _
  $region47: #{rnn_forward.1} parent=0 // pred_check_branch
    %1906 = sbr.rel (0) target = $region49
  $region48: #{rnn_forward.1} parent=0 // pred_region
    _
  $region49: #{rnn_forward.1} parent=0 // pred_fallthru
    _

</llo_original>
